<compile_context>
chip_gen: v6e
topology: v6e:2x2x1
jax: 0.10.0
libtpu: 0.0.40
codegen_flags: <defaults>
</compile_context>

<pallas_src>
import jax
import jax.numpy as jnp
from jax import lax
from jax.experimental import pallas as pl
from jax.experimental.pallas import tpu as pltpu

INPUT_DIM = 2
HIDDEN = 32        # LSTM hidden size (module default is 128; small size for the example)
FC_HIDDEN = 64
DPAD = 8           # pad xy input dim 2 -> 8 (sublane-friendly contraction dim)
UNROLL_S = 32      # fully unroll the time loop up to this length; fori_loop beyond


# --------------------------------------------------------------------------------------
# Pallas kernel: fused bi-LSTM (2 layers) + FC head for one tile of B*N rows.
# --------------------------------------------------------------------------------------
def _make_kernel(S, TBN, H):
    G = 2 * H          # packed per-gate group width [fwd|bwd]
    G8 = 8 * H         # total packed gate width
    f32 = jnp.float32

    def cell(gates, c):
        # gates: (TBN, 8H) packed [i_f i_b | f_f f_b | g_f g_b | o_f o_b]; c: (TBN, 2H)
        sg = jax.nn.sigmoid(gates)                 # ONE full 8H-lane sigmoid (EUP)
        g = jnp.tanh(gates[:, 2 * G:3 * G])        # ONE 2H-lane tanh on the candidate group
        i = sg[:, 0:G]
        f = sg[:, G:2 * G]
        o = sg[:, 3 * G:4 * G]
        c_new = f * c + i * g
        h_new = o * jnp.tanh(c_new)
        return h_new, c_new

    def recur(xp_ref, whh, store=None):
        # xp_ref: (S, TBN, 8H) hoisted gate pre-activations; whh: (2H, 8H) block-diag.
        h0 = jnp.zeros((TBN, G), f32)
        c0 = jnp.zeros((TBN, G), f32)

        def step(t, h, c):
            gates = xp_ref[t] + jnp.dot(h, whh, preferred_element_type=f32)
            h, c = cell(gates, c)
            if store is not None:
                store(t, h)
            return h, c

        if S <= UNROLL_S:
            h, c = h0, c0
            for t in range(S):                     # fully unrolled (small S)
                h, c = step(t, h, c)
            return h

        def body(t, carry):
            return step(t, *carry)
        h, _ = lax.fori_loop(0, S, body, (h0, c0), unroll=2)
        return h

    def kernel(x_ref,                              # (S, TBN, 2*DPAD): [x_t | x_{S-1-t}]
               w0_ref, b0_ref,                     # (2*DPAD, 8H), (1, 8H)
               whh0_ref,                           # (2H, 8H) block-diag packed
               p1_ref, q1_ref, b1_ref,             # (2H, 8H), (2H, 8H), (1, 8H)
               whh1_ref,                           # (2H, 8H) block-diag packed
               w1_ref, bf1_ref,                    # (2H, 64), (1, 64)
               w2_ref, bf2_ref,                    # (1, 64), (1, 1)
               out_ref,                            # (TBN, 1)
               xp_ref,                             # scratch (S, TBN, 8H)
               h01_ref, h01r_ref):                 # scratch (S, TBN, 2H) each
        F = x_ref.shape[-1]

        # ---------- hoisted layer-0 projection (both directions, biases folded) ----------
        xp = (jnp.dot(x_ref[...].reshape(S * TBN, F), w0_ref[...],
                      preferred_element_type=f32) + b0_ref[...])
        xp_ref[...] = xp.reshape(S, TBN, G8)

        # ---------- layer 0: fused fwd/bwd recurrence (one matmul per step) ----------
        def store0(t, h):
            # h = [h0f(t) | h0b(S-1-t)]; keep natural-order and time-reversed copies
            h01_ref[t] = h
            h01r_ref[S - 1 - t] = h

        recur(xp_ref, whh0_ref[...], store0)

        # ---------- hoisted layer-1 projection: M @ P + reverse(M) @ Q + b ----------
        xp1 = (jnp.dot(h01_ref[...].reshape(S * TBN, G), p1_ref[...],
                       preferred_element_type=f32)
               + jnp.dot(h01r_ref[...].reshape(S * TBN, G), q1_ref[...],
                         preferred_element_type=f32)
               + b1_ref[...])
        xp_ref[...] = xp1.reshape(S, TBN, G8)

        # ---------- layer 1: fused fwd/bwd recurrence ----------
        h_last = recur(xp_ref, whh1_ref[...])      # (TBN, 2H) = [h1f_last | h1b_last]

        # ---------- FC head: Linear(2H,64) -> ReLU -> Linear(64,1) via lane-reduce ----------
        y = jnp.dot(h_last, w1_ref[...], preferred_element_type=f32) + bf1_ref[...]
        y = jnp.maximum(y, 0.0)
        out_ref[...] = (jnp.sum(y * w2_ref[...], axis=-1, keepdims=True)
                        + bf2_ref[...])

    return kernel


# --------------------------------------------------------------------------------------
# Weight packing helpers (host-side JAX; gate groups [i_f i_b | f_f f_b | g_f g_b | o_f o_b])
# --------------------------------------------------------------------------------------
def _interleave_gates(wf, wb, H):
    # wf, wb: (R, 4H) with columns ordered [i|f|g|o]  ->  (R, 8H) interleaved by gate group.
    R = wf.shape[0]
    return jnp.stack([wf.reshape(R, 4, H), wb.reshape(R, 4, H)], axis=2).reshape(R, 8 * H)


def _fwd_slots(w, H):
    return _interleave_gates(w, jnp.zeros_like(w), H)


def _bwd_slots(w, H):
    return _interleave_gates(jnp.zeros_like(w), w, H)


def _round_up(v, m):
    return (v + m - 1) // m * m


# --------------------------------------------------------------------------------------
# Wrapper
# --------------------------------------------------------------------------------------
def trajectory_classifier(x, params, *, max_tile_rows=256):
    (wih0f, whh0f, b0f, wih0b, whh0b, b0b,
     wih1f, whh1f, b1f, wih1b, whh1b, b1b,
     w1, bf1, w2, bf2) = params

    H = HIDDEN
    B, N, S, Din = x.shape
    BN = B * N

    # time-major (S, BN, DPAD), feature dim zero-padded 2 -> DPAD
    xt = jnp.transpose(x.reshape(BN, S, Din).astype(jnp.float32), (1, 0, 2))
    xt = jnp.pad(xt, ((0, 0), (0, 0), (0, DPAD - Din)))
    # row r holds [x_r | x_{S-1-r}] so the fused fwd/bwd step t reads a single row block
    xcat = jnp.concatenate([xt, xt[::-1]], axis=-1)                  # (S, BN, 2*DPAD)

    # tile the B*N rows (sublane axis), padded to a multiple of the tile size
    TBN = min(max_tile_rows, _round_up(BN, 8))
    BN_pad = _round_up(BN, TBN)
    if BN_pad != BN:
        xcat = jnp.pad(xcat, ((0, 0), (0, BN_pad - BN), (0, 0)))

    # packed / block-diagonal weights
    w0 = jnp.concatenate([_fwd_slots(wih0f, H), _bwd_slots(wih0b, H)], axis=0)   # (2*DPAD, 8H)
    b0 = _interleave_gates(b0f, b0b, H)                                          # (1, 8H)
    whh0 = jnp.concatenate([_fwd_slots(whh0f, H), _bwd_slots(whh0b, H)], axis=0) # (2H, 8H)
    p1 = jnp.concatenate([_fwd_slots(wih1f[:H], H), _bwd_slots(wih1b[H:], H)], axis=0)  # (2H,8H)
    q1 = jnp.concatenate([_bwd_slots(wih1b[:H], H), _fwd_slots(wih1f[H:], H)], axis=0)  # (2H,8H)
    b1 = _interleave_gates(b1f, b1b, H)                                          # (1, 8H)
    whh1 = jnp.concatenate([_fwd_slots(whh1f, H), _bwd_slots(whh1b, H)], axis=0) # (2H, 8H)
    w2r = w2.reshape(1, FC_HIDDEN)                                               # (1, 64)

    weights = (w0, b0, whh0, p1, q1, b1, whh1, w1, bf1, w2r, bf2)

    grid = (BN_pad // TBN,)
    x_spec = pl.BlockSpec((S, TBN, 2 * DPAD), lambda i: (0, i, 0))
    w_specs = [pl.BlockSpec(w.shape, lambda i: (0, 0)) for w in weights]
    out_spec = pl.BlockSpec((TBN, 1), lambda i: (i, 0))

    out = pl.pallas_call(
        _make_kernel(S, TBN, H),
        out_shape=jax.ShapeDtypeStruct((BN_pad, 1), jnp.float32),
        grid=grid,
        in_specs=[x_spec] + w_specs,
        out_specs=out_spec,
        scratch_shapes=[
            pltpu.VMEM((S, TBN, 8 * H), jnp.float32),   # hoisted gate pre-activations
            pltpu.VMEM((S, TBN, 2 * H), jnp.float32),   # layer-0 hidden [h0f(t)|h0b(S-1-t)]
            pltpu.VMEM((S, TBN, 2 * H), jnp.float32),   # time-reversed copy of the above
        ],
        compiler_params=pltpu.CompilerParams(
            dimension_semantics=("parallel",)),
    )(xcat, *weights)
    return out[:BN, 0].reshape(B, N)


# --------------------------------------------------------------------------------------
# Deterministic parameter initialization (PyTorch-style uniform(-1/sqrt(fan), +))
# --------------------------------------------------------------------------------------
def init_params(key):
    H = HIDDEN
    k_lstm = 1.0 / jnp.sqrt(H)
    keys = iter(jax.random.split(key, 32))

    def u(shape, k):
        return jax.random.uniform(next(keys), shape, jnp.float32, -k, k)

    def lstm_dir(in_dim, pad_to=None):
        wih = u((in_dim, 4 * H), k_lstm)
        if pad_to is not None and pad_to > in_dim:
            wih = jnp.pad(wih, ((0, pad_to - in_dim), (0, 0)))
        whh = u((H, 4 * H), k_lstm)
        b = u((1, 4 * H), k_lstm) + u((1, 4 * H), k_lstm)          # b_ih + b_hh
        return wih, whh, b

    wih0f, whh0f, b0f = lstm_dir(INPUT_DIM, pad_to=DPAD)
    wih0b, whh0b, b0b = lstm_dir(INPUT_DIM, pad_to=DPAD)
    wih1f, whh1f, b1f = lstm_dir(2 * H)
    wih1b, whh1b, b1b = lstm_dir(2 * H)

    k_fc1 = 1.0 / jnp.sqrt(2 * H)
    k_fc2 = 1.0 / jnp.sqrt(FC_HIDDEN)
    w1 = u((2 * H, FC_HIDDEN), k_fc1)
    bf1 = u((1, FC_HIDDEN), k_fc1)
    w2 = u((FC_HIDDEN, 1), k_fc2)
    bf2 = u((1, 1), k_fc2)

    return (wih0f, whh0f, b0f, wih0b, whh0b, b0b,
            wih1f, whh1f, b1f, wih1b, whh1b, b1b,
            w1, bf1, w2, bf2)


# --------------------------------------------------------------------------------------
# Pure-JAX reference (same math) for correctness check
# --------------------------------------------------------------------------------------
def reference(x, params):
    (wih0f, whh0f, b0f, wih0b, whh0b, b0b,
     wih1f, whh1f, b1f, wih1b, whh1b, b1b,
     w1, bf1, w2, bf2) = params
    H = HIDDEN
    B, N, S, Din = x.shape
    BN = B * N
    xt = jnp.transpose(x.reshape(BN, S, Din).astype(jnp.float32), (1, 0, 2))
    xt = jnp.pad(xt, ((0, 0), (0, 0), (0, DPAD - Din)))

    def cell(x_t, h, c, wih, whh, b):
        g = x_t @ wih + h @ whh + b
        i = jax.nn.sigmoid(g[:, :H]); f = jax.nn.sigmoid(g[:, H:2 * H])
        gg = jnp.tanh(g[:, 2 * H:3 * H]); o = jax.nn.sigmoid(g[:, 3 * H:])
        c = f * c + i * gg
        return o * jnp.tanh(c), c

    def run(inputs, wih, whh, b):
        def step(carry, x_t):
            h, c = cell(x_t, carry[0], carry[1], wih, whh, b)
            return (h, c), h
        (hT, _), outs = lax.scan(step, (jnp.zeros((BN, H)), jnp.zeros((BN, H))), inputs)
        return hT, outs

    _, of = run(xt, wih0f, whh0f, b0f)
    _, ob_rev = run(xt[::-1], wih0b, whh0b, b0b)
    inp1 = jnp.concatenate([of, ob_rev[::-1]], axis=-1)
    h1f, _ = run(inp1, wih1f, whh1f, b1f)
    h1b, _ = run(inp1[::-1], wih1b, whh1b, b1b)
    hid = jnp.concatenate([h1f, h1b], axis=-1)
    y = jnp.maximum(hid @ w1 + bf1, 0.0)
    return (y @ w2 + bf2).reshape(B, N)


if __name__ == "__main__":
    key = jax.random.PRNGKey(0)
    kp, kx = jax.random.split(key)
    params = init_params(kp)

    B, N, S = 2, 4, 8
    x = jax.random.normal(kx, (B, N, S, INPUT_DIM), jnp.float32)

    out = jax.block_until_ready(trajectory_classifier(x, params))
    ref = jax.block_until_ready(reference(x, params))

    assert out.shape == (B, N)
    assert jnp.allclose(out, ref, rtol=1e-4, atol=1e-4), (out, ref)

    print("KERNEL_OK")
</pallas_src>

<mosaic_0001>
module attributes {stable_mosaic.version = 11 : i64} {
  func.func @kernel(%arg0: i32, %arg1: memref<8x8x16xf32, #tpu.memory_space<vmem>>, %arg2: memref<16x256xf32, #tpu.memory_space<vmem>>, %arg3: memref<1x256xf32, #tpu.memory_space<vmem>>, %arg4: memref<64x256xf32, #tpu.memory_space<vmem>>, %arg5: memref<64x256xf32, #tpu.memory_space<vmem>>, %arg6: memref<64x256xf32, #tpu.memory_space<vmem>>, %arg7: memref<1x256xf32, #tpu.memory_space<vmem>>, %arg8: memref<64x256xf32, #tpu.memory_space<vmem>>, %arg9: memref<64x64xf32, #tpu.memory_space<vmem>>, %arg10: memref<1x64xf32, #tpu.memory_space<vmem>>, %arg11: memref<1x64xf32, #tpu.memory_space<vmem>>, %arg12: memref<1x1xf32, #tpu.memory_space<vmem>>, %arg13: memref<8x1xf32, #tpu.memory_space<vmem>>, %arg14: memref<8x8x256xf32, #tpu.memory_space<vmem>>, %arg15: memref<8x8x64xf32, #tpu.memory_space<vmem>>, %arg16: memref<8x8x64xf32, #tpu.memory_space<vmem>>) attributes {dimension_semantics = [#tpu.dimension_semantics<parallel>], iteration_bounds = array<i64: 1>, scalar_prefetch = 0 : i64, scratch_operands = 3 : i64, tpu.core_type = #tpu.core_type<tc>, window_params = [{transform_indices = @transform_0, window_bounds = array<i64: 8, 8, 16>}, {pipeline_mode = #tpu.pipeline_mode<synchronous>, transform_indices = @transform_1, window_bounds = array<i64: 16, 256>}, {pipeline_mode = #tpu.pipeline_mode<synchronous>, transform_indices = @transform_2, window_bounds = array<i64: 1, 256>}, {pipeline_mode = #tpu.pipeline_mode<synchronous>, transform_indices = @transform_3, window_bounds = array<i64: 64, 256>}, {pipeline_mode = #tpu.pipeline_mode<synchronous>, transform_indices = @transform_4, window_bounds = array<i64: 64, 256>}, {pipeline_mode = #tpu.pipeline_mode<synchronous>, transform_indices = @transform_5, window_bounds = array<i64: 64, 256>}, {pipeline_mode = #tpu.pipeline_mode<synchronous>, transform_indices = @transform_6, window_bounds = array<i64: 1, 256>}, {pipeline_mode = #tpu.pipeline_mode<synchronous>, transform_indices = @transform_7, window_bounds = array<i64: 64, 256>}, {pipeline_mode = #tpu.pipeline_mode<synchronous>, transform_indices = @transform_8, window_bounds = array<i64: 64, 64>}, {pipeline_mode = #tpu.pipeline_mode<synchronous>, transform_indices = @transform_9, window_bounds = array<i64: 1, 64>}, {pipeline_mode = #tpu.pipeline_mode<synchronous>, transform_indices = @transform_10, window_bounds = array<i64: 1, 64>}, {pipeline_mode = #tpu.pipeline_mode<synchronous>, transform_indices = @transform_11, window_bounds = array<i64: 1, 1>}, {transform_indices = @transform_12, window_bounds = array<i64: 8, 1>}]} {
    %c0 = arith.constant 0 : index
    %c0_0 = arith.constant 0 : index
    %c0_1 = arith.constant 0 : index
    %0 = vector.load %arg1[%c0, %c0_0, %c0_1] : memref<8x8x16xf32, #tpu.memory_space<vmem>>, vector<8x8x16xf32>
    %1 = vector.shape_cast %0 : vector<8x8x16xf32> to vector<64x16xf32>
    %c0_2 = arith.constant 0 : index
    %c0_3 = arith.constant 0 : index
    %2 = vector.load %arg2[%c0_2, %c0_3] : memref<16x256xf32, #tpu.memory_space<vmem>>, vector<16x256xf32>
    %cst = arith.constant dense<0.000000e+00> : vector<64x256xf32>
    %3 = tpu.matmul %1, %2, %cst {dimension_numbers = #tpu.dot_dimension_numbers<[1], [0], [0], [1], [0, 0, 1, 1], [], []>} : vector<64x16xf32>, vector<16x256xf32>, vector<64x256xf32> -> vector<64x256xf32>
    %c0_4 = arith.constant 0 : index
    %c0_5 = arith.constant 0 : index
    %4 = vector.load %arg3[%c0_4, %c0_5] : memref<1x256xf32, #tpu.memory_space<vmem>>, vector<1x256xf32>
    %5 = vector.broadcast %4 : vector<1x256xf32> to vector<64x256xf32>
    %6 = arith.addf %3, %5 : vector<64x256xf32>
    %7 = vector.shape_cast %6 : vector<64x256xf32> to vector<8x8x256xf32>
    %c0_6 = arith.constant 0 : index
    %c0_7 = arith.constant 0 : index
    %c0_8 = arith.constant 0 : index
    %8 = vector.load %arg14[%c0_6, %c0_7, %c0_8] : memref<8x8x256xf32, #tpu.memory_space<vmem>>, vector<8x8x256xf32>
    tpu.vector_store %arg14[%c0_6, %c0_7, %c0_8], %7 {strides = array<i32>} : memref<8x8x256xf32, #tpu.memory_space<vmem>>, vector<8x8x256xf32>,
    %c0_9 = arith.constant 0 : index
    %c0_10 = arith.constant 0 : index
    %9 = vector.load %arg4[%c0_9, %c0_10] : memref<64x256xf32, #tpu.memory_space<vmem>>, vector<64x256xf32>
    %cst_11 = arith.constant 0.000000e+00 : f32
    %10 = vector.broadcast %cst_11 : f32 to vector<8x64xf32>
    %cst_12 = arith.constant 0.000000e+00 : f32
    %11 = vector.broadcast %cst_12 : f32 to vector<8x64xf32>
    %c0_13 = arith.constant 0 : index
    %c0_14 = arith.constant 0 : index
    %c0_15 = arith.constant 0 : index
    %12 = vector.load %arg14[%c0_13, %c0_14, %c0_15] : memref<8x8x256xf32, #tpu.memory_space<vmem>>, vector<1x8x256xf32>
    %13 = vector.shape_cast %12 : vector<1x8x256xf32> to vector<8x256xf32>
    %cst_16 = arith.constant dense<0.000000e+00> : vector<8x256xf32>
    %14 = tpu.matmul %10, %9, %cst_16 {dimension_numbers = #tpu.dot_dimension_numbers<[1], [0], [0], [1], [0, 0, 1, 1], [], []>} : vector<8x64xf32>, vector<64x256xf32>, vector<8x256xf32> -> vector<8x256xf32>
    %15 = arith.addf %13, %14 : vector<8x256xf32>
    %16 = arith.negf %15 : vector<8x256xf32>
    %17 = math.exp %16 : vector<8x256xf32>
    %cst_17 = arith.constant 1.000000e+00 : f32
    %18 = vector.broadcast %cst_17 : f32 to vector<8x256xf32>
    %19 = arith.addf %18, %17 : vector<8x256xf32>
    %20 = arith.divf %18, %19 : vector<8x256xf32>
    %21 = vector.extract_strided_slice %15 {offsets = [0, 128], sizes = [8, 64], strides = [1, 1]} : vector<8x256xf32> to vector<8x64xf32>
    %22 = math.tanh %21 : vector<8x64xf32>
    %23 = vector.extract_strided_slice %20 {offsets = [0, 0], sizes = [8, 64], strides = [1, 1]} : vector<8x256xf32> to vector<8x64xf32>
    %24 = vector.extract_strided_slice %20 {offsets = [0, 64], sizes = [8, 64], strides = [1, 1]} : vector<8x256xf32> to vector<8x64xf32>
    %25 = vector.extract_strided_slice %20 {offsets = [0, 192], sizes = [8, 64], strides = [1, 1]} : vector<8x256xf32> to vector<8x64xf32>
    %26 = arith.mulf %24, %11 : vector<8x64xf32>
    %27 = arith.mulf %23, %22 : vector<8x64xf32>
    %28 = arith.addf %26, %27 : vector<8x64xf32>
    %29 = math.tanh %28 : vector<8x64xf32>
    %30 = arith.mulf %25, %29 : vector<8x64xf32>
    %c0_18 = arith.constant 0 : index
    %c0_19 = arith.constant 0 : index
    %c0_20 = arith.constant 0 : index
    %31 = vector.load %arg15[%c0_18, %c0_19, %c0_20] : memref<8x8x64xf32, #tpu.memory_space<vmem>>, vector<1x8x64xf32>
    %32 = vector.shape_cast %31 : vector<1x8x64xf32> to vector<8x64xf32>
    %33 = vector.shape_cast %30 : vector<8x64xf32> to vector<1x8x64xf32>
    tpu.vector_store %arg15[%c0_18, %c0_19, %c0_20], %33 {strides = array<i32>} : memref<8x8x64xf32, #tpu.memory_space<vmem>>, vector<1x8x64xf32>,
    %c7 = arith.constant 7 : index
    %c0_21 = arith.constant 0 : index
    %c0_22 = arith.constant 0 : index
    %34 = vector.load %arg16[%c7, %c0_21, %c0_22] : memref<8x8x64xf32, #tpu.memory_space<vmem>>, vector<1x8x64xf32>
    %35 = vector.shape_cast %34 : vector<1x8x64xf32> to vector<8x64xf32>
    %36 = vector.shape_cast %30 : vector<8x64xf32> to vector<1x8x64xf32>
    tpu.vector_store %arg16[%c7, %c0_21, %c0_22], %36 {strides = array<i32>} : memref<8x8x64xf32, #tpu.memory_space<vmem>>, vector<1x8x64xf32>,
    %c1 = arith.constant 1 : index
    %c0_23 = arith.constant 0 : index
    %c0_24 = arith.constant 0 : index
    %37 = vector.load %arg14[%c1, %c0_23, %c0_24] : memref<8x8x256xf32, #tpu.memory_space<vmem>>, vector<1x8x256xf32>
    %38 = vector.shape_cast %37 : vector<1x8x256xf32> to vector<8x256xf32>
    %cst_25 = arith.constant dense<0.000000e+00> : vector<8x256xf32>
    %39 = tpu.matmul %30, %9, %cst_25 {dimension_numbers = #tpu.dot_dimension_numbers<[1], [0], [0], [1], [0, 0, 1, 1], [], []>} : vector<8x64xf32>, vector<64x256xf32>, vector<8x256xf32> -> vector<8x256xf32>
    %40 = arith.addf %38, %39 : vector<8x256xf32>
    %41 = arith.negf %40 : vector<8x256xf32>
    %42 = math.exp %41 : vector<8x256xf32>
    %cst_26 = arith.constant 1.000000e+00 : f32
    %43 = vector.broadcast %cst_26 : f32 to vector<8x256xf32>
    %44 = arith.addf %43, %42 : vector<8x256xf32>
    %45 = arith.divf %43, %44 : vector<8x256xf32>
    %46 = vector.extract_strided_slice %40 {offsets = [0, 128], sizes = [8, 64], strides = [1, 1]} : vector<8x256xf32> to vector<8x64xf32>
    %47 = math.tanh %46 : vector<8x64xf32>
    %48 = vector.extract_strided_slice %45 {offsets = [0, 0], sizes = [8, 64], strides = [1, 1]} : vector<8x256xf32> to vector<8x64xf32>
    %49 = vector.extract_strided_slice %45 {offsets = [0, 64], sizes = [8, 64], strides = [1, 1]} : vector<8x256xf32> to vector<8x64xf32>
    %50 = vector.extract_strided_slice %45 {offsets = [0, 192], sizes = [8, 64], strides = [1, 1]} : vector<8x256xf32> to vector<8x64xf32>
    %51 = arith.mulf %49, %28 : vector<8x64xf32>
    %52 = arith.mulf %48, %47 : vector<8x64xf32>
    %53 = arith.addf %51, %52 : vector<8x64xf32>
    %54 = math.tanh %53 : vector<8x64xf32>
    %55 = arith.mulf %50, %54 : vector<8x64xf32>
    %c1_27 = arith.constant 1 : index
    %c0_28 = arith.constant 0 : index
    %c0_29 = arith.constant 0 : index
    %56 = vector.load %arg15[%c1_27, %c0_28, %c0_29] : memref<8x8x64xf32, #tpu.memory_space<vmem>>, vector<1x8x64xf32>
    %57 = vector.shape_cast %56 : vector<1x8x64xf32> to vector<8x64xf32>
    %58 = vector.shape_cast %55 : vector<8x64xf32> to vector<1x8x64xf32>
    tpu.vector_store %arg15[%c1_27, %c0_28, %c0_29], %58 {strides = array<i32>} : memref<8x8x64xf32, #tpu.memory_space<vmem>>, vector<1x8x64xf32>,
    %c6 = arith.constant 6 : index
    %c0_30 = arith.constant 0 : index
    %c0_31 = arith.constant 0 : index
    %59 = vector.load %arg16[%c6, %c0_30, %c0_31] : memref<8x8x64xf32, #tpu.memory_space<vmem>>, vector<1x8x64xf32>
    %60 = vector.shape_cast %59 : vector<1x8x64xf32> to vector<8x64xf32>
    %61 = vector.shape_cast %55 : vector<8x64xf32> to vector<1x8x64xf32>
    tpu.vector_store %arg16[%c6, %c0_30, %c0_31], %61 {strides = array<i32>} : memref<8x8x64xf32, #tpu.memory_space<vmem>>, vector<1x8x64xf32>,
    %c2 = arith.constant 2 : index
    %c0_32 = arith.constant 0 : index
    %c0_33 = arith.constant 0 : index
    %62 = vector.load %arg14[%c2, %c0_32, %c0_33] : memref<8x8x256xf32, #tpu.memory_space<vmem>>, vector<1x8x256xf32>
    %63 = vector.shape_cast %62 : vector<1x8x256xf32> to vector<8x256xf32>
    %cst_34 = arith.constant dense<0.000000e+00> : vector<8x256xf32>
    %64 = tpu.matmul %55, %9, %cst_34 {dimension_numbers = #tpu.dot_dimension_numbers<[1], [0], [0], [1], [0, 0, 1, 1], [], []>} : vector<8x64xf32>, vector<64x256xf32>, vector<8x256xf32> -> vector<8x256xf32>
    %65 = arith.addf %63, %64 : vector<8x256xf32>
    %66 = arith.negf %65 : vector<8x256xf32>
    %67 = math.exp %66 : vector<8x256xf32>
    %cst_35 = arith.constant 1.000000e+00 : f32
    %68 = vector.broadcast %cst_35 : f32 to vector<8x256xf32>
    %69 = arith.addf %68, %67 : vector<8x256xf32>
    %70 = arith.divf %68, %69 : vector<8x256xf32>
    %71 = vector.extract_strided_slice %65 {offsets = [0, 128], sizes = [8, 64], strides = [1, 1]} : vector<8x256xf32> to vector<8x64xf32>
    %72 = math.tanh %71 : vector<8x64xf32>
    %73 = vector.extract_strided_slice %70 {offsets = [0, 0], sizes = [8, 64], strides = [1, 1]} : vector<8x256xf32> to vector<8x64xf32>
    %74 = vector.extract_strided_slice %70 {offsets = [0, 64], sizes = [8, 64], strides = [1, 1]} : vector<8x256xf32> to vector<8x64xf32>
    %75 = vector.extract_strided_slice %70 {offsets = [0, 192], sizes = [8, 64], strides = [1, 1]} : vector<8x256xf32> to vector<8x64xf32>
    %76 = arith.mulf %74, %53 : vector<8x64xf32>
    %77 = arith.mulf %73, %72 : vector<8x64xf32>
    %78 = arith.addf %76, %77 : vector<8x64xf32>
    %79 = math.tanh %78 : vector<8x64xf32>
    %80 = arith.mulf %75, %79 : vector<8x64xf32>
    %c2_36 = arith.constant 2 : index
    %c0_37 = arith.constant 0 : index
    %c0_38 = arith.constant 0 : index
    %81 = vector.load %arg15[%c2_36, %c0_37, %c0_38] : memref<8x8x64xf32, #tpu.memory_space<vmem>>, vector<1x8x64xf32>
    %82 = vector.shape_cast %81 : vector<1x8x64xf32> to vector<8x64xf32>
    %83 = vector.shape_cast %80 : vector<8x64xf32> to vector<1x8x64xf32>
    tpu.vector_store %arg15[%c2_36, %c0_37, %c0_38], %83 {strides = array<i32>} : memref<8x8x64xf32, #tpu.memory_space<vmem>>, vector<1x8x64xf32>,
    %c5 = arith.constant 5 : index
    %c0_39 = arith.constant 0 : index
    %c0_40 = arith.constant 0 : index
    %84 = vector.load %arg16[%c5, %c0_39, %c0_40] : memref<8x8x64xf32, #tpu.memory_space<vmem>>, vector<1x8x64xf32>
    %85 = vector.shape_cast %84 : vector<1x8x64xf32> to vector<8x64xf32>
    %86 = vector.shape_cast %80 : vector<8x64xf32> to vector<1x8x64xf32>
    tpu.vector_store %arg16[%c5, %c0_39, %c0_40], %86 {strides = array<i32>} : memref<8x8x64xf32, #tpu.memory_space<vmem>>, vector<1x8x64xf32>,
    %c3 = arith.constant 3 : index
    %c0_41 = arith.constant 0 : index
    %c0_42 = arith.constant 0 : index
    %87 = vector.load %arg14[%c3, %c0_41, %c0_42] : memref<8x8x256xf32, #tpu.memory_space<vmem>>, vector<1x8x256xf32>
    %88 = vector.shape_cast %87 : vector<1x8x256xf32> to vector<8x256xf32>
    %cst_43 = arith.constant dense<0.000000e+00> : vector<8x256xf32>
    %89 = tpu.matmul %80, %9, %cst_43 {dimension_numbers = #tpu.dot_dimension_numbers<[1], [0], [0], [1], [0, 0, 1, 1], [], []>} : vector<8x64xf32>, vector<64x256xf32>, vector<8x256xf32> -> vector<8x256xf32>
    %90 = arith.addf %88, %89 : vector<8x256xf32>
    %91 = arith.negf %90 : vector<8x256xf32>
    %92 = math.exp %91 : vector<8x256xf32>
    %cst_44 = arith.constant 1.000000e+00 : f32
    %93 = vector.broadcast %cst_44 : f32 to vector<8x256xf32>
    %94 = arith.addf %93, %92 : vector<8x256xf32>
    %95 = arith.divf %93, %94 : vector<8x256xf32>
    %96 = vector.extract_strided_slice %90 {offsets = [0, 128], sizes = [8, 64], strides = [1, 1]} : vector<8x256xf32> to vector<8x64xf32>
    %97 = math.tanh %96 : vector<8x64xf32>
    %98 = vector.extract_strided_slice %95 {offsets = [0, 0], sizes = [8, 64], strides = [1, 1]} : vector<8x256xf32> to vector<8x64xf32>
    %99 = vector.extract_strided_slice %95 {offsets = [0, 64], sizes = [8, 64], strides = [1, 1]} : vector<8x256xf32> to vector<8x64xf32>
    %100 = vector.extract_strided_slice %95 {offsets = [0, 192], sizes = [8, 64], strides = [1, 1]} : vector<8x256xf32> to vector<8x64xf32>
    %101 = arith.mulf %99, %78 : vector<8x64xf32>
    %102 = arith.mulf %98, %97 : vector<8x64xf32>
    %103 = arith.addf %101, %102 : vector<8x64xf32>
    %104 = math.tanh %103 : vector<8x64xf32>
    %105 = arith.mulf %100, %104 : vector<8x64xf32>
    %c3_45 = arith.constant 3 : index
    %c0_46 = arith.constant 0 : index
    %c0_47 = arith.constant 0 : index
    %106 = vector.load %arg15[%c3_45, %c0_46, %c0_47] : memref<8x8x64xf32, #tpu.memory_space<vmem>>, vector<1x8x64xf32>
    %107 = vector.shape_cast %106 : vector<1x8x64xf32> to vector<8x64xf32>
    %108 = vector.shape_cast %105 : vector<8x64xf32> to vector<1x8x64xf32>
    tpu.vector_store %arg15[%c3_45, %c0_46, %c0_47], %108 {strides = array<i32>} : memref<8x8x64xf32, #tpu.memory_space<vmem>>, vector<1x8x64xf32>,
    %c4 = arith.constant 4 : index
    %c0_48 = arith.constant 0 : index
    %c0_49 = arith.constant 0 : index
    %109 = vector.load %arg16[%c4, %c0_48, %c0_49] : memref<8x8x64xf32, #tpu.memory_space<vmem>>, vector<1x8x64xf32>
    %110 = vector.shape_cast %109 : vector<1x8x64xf32> to vector<8x64xf32>
    %111 = vector.shape_cast %105 : vector<8x64xf32> to vector<1x8x64xf32>
    tpu.vector_store %arg16[%c4, %c0_48, %c0_49], %111 {strides = array<i32>} : memref<8x8x64xf32, #tpu.memory_space<vmem>>, vector<1x8x64xf32>,
    %c4_50 = arith.constant 4 : index
    %c0_51 = arith.constant 0 : index
    %c0_52 = arith.constant 0 : index
    %112 = vector.load %arg14[%c4_50, %c0_51, %c0_52] : memref<8x8x256xf32, #tpu.memory_space<vmem>>, vector<1x8x256xf32>
    %113 = vector.shape_cast %112 : vector<1x8x256xf32> to vector<8x256xf32>
    %cst_53 = arith.constant dense<0.000000e+00> : vector<8x256xf32>
    %114 = tpu.matmul %105, %9, %cst_53 {dimension_numbers = #tpu.dot_dimension_numbers<[1], [0], [0], [1], [0, 0, 1, 1], [], []>} : vector<8x64xf32>, vector<64x256xf32>, vector<8x256xf32> -> vector<8x256xf32>
    %115 = arith.addf %113, %114 : vector<8x256xf32>
    %116 = arith.negf %115 : vector<8x256xf32>
    %117 = math.exp %116 : vector<8x256xf32>
    %cst_54 = arith.constant 1.000000e+00 : f32
    %118 = vector.broadcast %cst_54 : f32 to vector<8x256xf32>
    %119 = arith.addf %118, %117 : vector<8x256xf32>
    %120 = arith.divf %118, %119 : vector<8x256xf32>
    %121 = vector.extract_strided_slice %115 {offsets = [0, 128], sizes = [8, 64], strides = [1, 1]} : vector<8x256xf32> to vector<8x64xf32>
    %122 = math.tanh %121 : vector<8x64xf32>
    %123 = vector.extract_strided_slice %120 {offsets = [0, 0], sizes = [8, 64], strides = [1, 1]} : vector<8x256xf32> to vector<8x64xf32>
    %124 = vector.extract_strided_slice %120 {offsets = [0, 64], sizes = [8, 64], strides = [1, 1]} : vector<8x256xf32> to vector<8x64xf32>
    %125 = vector.extract_strided_slice %120 {offsets = [0, 192], sizes = [8, 64], strides = [1, 1]} : vector<8x256xf32> to vector<8x64xf32>
    %126 = arith.mulf %124, %103 : vector<8x64xf32>
    %127 = arith.mulf %123, %122 : vector<8x64xf32>
    %128 = arith.addf %126, %127 : vector<8x64xf32>
    %129 = math.tanh %128 : vector<8x64xf32>
    %130 = arith.mulf %125, %129 : vector<8x64xf32>
    %c4_55 = arith.constant 4 : index
    %c0_56 = arith.constant 0 : index
    %c0_57 = arith.constant 0 : index
    %131 = vector.load %arg15[%c4_55, %c0_56, %c0_57] : memref<8x8x64xf32, #tpu.memory_space<vmem>>, vector<1x8x64xf32>
    %132 = vector.shape_cast %131 : vector<1x8x64xf32> to vector<8x64xf32>
    %133 = vector.shape_cast %130 : vector<8x64xf32> to vector<1x8x64xf32>
    tpu.vector_store %arg15[%c4_55, %c0_56, %c0_57], %133 {strides = array<i32>} : memref<8x8x64xf32, #tpu.memory_space<vmem>>, vector<1x8x64xf32>,
    %c3_58 = arith.constant 3 : index
    %c0_59 = arith.constant 0 : index
    %c0_60 = arith.constant 0 : index
    %134 = vector.load %arg16[%c3_58, %c0_59, %c0_60] : memref<8x8x64xf32, #tpu.memory_space<vmem>>, vector<1x8x64xf32>
    %135 = vector.shape_cast %134 : vector<1x8x64xf32> to vector<8x64xf32>
    %136 = vector.shape_cast %130 : vector<8x64xf32> to vector<1x8x64xf32>
    tpu.vector_store %arg16[%c3_58, %c0_59, %c0_60], %136 {strides = array<i32>} : memref<8x8x64xf32, #tpu.memory_space<vmem>>, vector<1x8x64xf32>,
    %c5_61 = arith.constant 5 : index
    %c0_62 = arith.constant 0 : index
    %c0_63 = arith.constant 0 : index
    %137 = vector.load %arg14[%c5_61, %c0_62, %c0_63] : memref<8x8x256xf32, #tpu.memory_space<vmem>>, vector<1x8x256xf32>
    %138 = vector.shape_cast %137 : vector<1x8x256xf32> to vector<8x256xf32>
    %cst_64 = arith.constant dense<0.000000e+00> : vector<8x256xf32>
    %139 = tpu.matmul %130, %9, %cst_64 {dimension_numbers = #tpu.dot_dimension_numbers<[1], [0], [0], [1], [0, 0, 1, 1], [], []>} : vector<8x64xf32>, vector<64x256xf32>, vector<8x256xf32> -> vector<8x256xf32>
    %140 = arith.addf %138, %139 : vector<8x256xf32>
    %141 = arith.negf %140 : vector<8x256xf32>
    %142 = math.exp %141 : vector<8x256xf32>
    %cst_65 = arith.constant 1.000000e+00 : f32
    %143 = vector.broadcast %cst_65 : f32 to vector<8x256xf32>
    %144 = arith.addf %143, %142 : vector<8x256xf32>
    %145 = arith.divf %143, %144 : vector<8x256xf32>
    %146 = vector.extract_strided_slice %140 {offsets = [0, 128], sizes = [8, 64], strides = [1, 1]} : vector<8x256xf32> to vector<8x64xf32>
    %147 = math.tanh %146 : vector<8x64xf32>
    %148 = vector.extract_strided_slice %145 {offsets = [0, 0], sizes = [8, 64], strides = [1, 1]} : vector<8x256xf32> to vector<8x64xf32>
    %149 = vector.extract_strided_slice %145 {offsets = [0, 64], sizes = [8, 64], strides = [1, 1]} : vector<8x256xf32> to vector<8x64xf32>
    %150 = vector.extract_strided_slice %145 {offsets = [0, 192], sizes = [8, 64], strides = [1, 1]} : vector<8x256xf32> to vector<8x64xf32>
    %151 = arith.mulf %149, %128 : vector<8x64xf32>
    %152 = arith.mulf %148, %147 : vector<8x64xf32>
    %153 = arith.addf %151, %152 : vector<8x64xf32>
    %154 = math.tanh %153 : vector<8x64xf32>
    %155 = arith.mulf %150, %154 : vector<8x64xf32>
    %c5_66 = arith.constant 5 : index
    %c0_67 = arith.constant 0 : index
    %c0_68 = arith.constant 0 : index
    %156 = vector.load %arg15[%c5_66, %c0_67, %c0_68] : memref<8x8x64xf32, #tpu.memory_space<vmem>>, vector<1x8x64xf32>
    %157 = vector.shape_cast %156 : vector<1x8x64xf32> to vector<8x64xf32>
    %158 = vector.shape_cast %155 : vector<8x64xf32> to vector<1x8x64xf32>
    tpu.vector_store %arg15[%c5_66, %c0_67, %c0_68], %158 {strides = array<i32>} : memref<8x8x64xf32, #tpu.memory_space<vmem>>, vector<1x8x64xf32>,
    %c2_69 = arith.constant 2 : index
    %c0_70 = arith.constant 0 : index
    %c0_71 = arith.constant 0 : index
    %159 = vector.load %arg16[%c2_69, %c0_70, %c0_71] : memref<8x8x64xf32, #tpu.memory_space<vmem>>, vector<1x8x64xf32>
    %160 = vector.shape_cast %159 : vector<1x8x64xf32> to vector<8x64xf32>
    %161 = vector.shape_cast %155 : vector<8x64xf32> to vector<1x8x64xf32>
    tpu.vector_store %arg16[%c2_69, %c0_70, %c0_71], %161 {strides = array<i32>} : memref<8x8x64xf32, #tpu.memory_space<vmem>>, vector<1x8x64xf32>,
    %c6_72 = arith.constant 6 : index
    %c0_73 = arith.constant 0 : index
    %c0_74 = arith.constant 0 : index
    %162 = vector.load %arg14[%c6_72, %c0_73, %c0_74] : memref<8x8x256xf32, #tpu.memory_space<vmem>>, vector<1x8x256xf32>
    %163 = vector.shape_cast %162 : vector<1x8x256xf32> to vector<8x256xf32>
    %cst_75 = arith.constant dense<0.000000e+00> : vector<8x256xf32>
    %164 = tpu.matmul %155, %9, %cst_75 {dimension_numbers = #tpu.dot_dimension_numbers<[1], [0], [0], [1], [0, 0, 1, 1], [], []>} : vector<8x64xf32>, vector<64x256xf32>, vector<8x256xf32> -> vector<8x256xf32>
    %165 = arith.addf %163, %164 : vector<8x256xf32>
    %166 = arith.negf %165 : vector<8x256xf32>
    %167 = math.exp %166 : vector<8x256xf32>
    %cst_76 = arith.constant 1.000000e+00 : f32
    %168 = vector.broadcast %cst_76 : f32 to vector<8x256xf32>
    %169 = arith.addf %168, %167 : vector<8x256xf32>
    %170 = arith.divf %168, %169 : vector<8x256xf32>
    %171 = vector.extract_strided_slice %165 {offsets = [0, 128], sizes = [8, 64], strides = [1, 1]} : vector<8x256xf32> to vector<8x64xf32>
    %172 = math.tanh %171 : vector<8x64xf32>
    %173 = vector.extract_strided_slice %170 {offsets = [0, 0], sizes = [8, 64], strides = [1, 1]} : vector<8x256xf32> to vector<8x64xf32>
    %174 = vector.extract_strided_slice %170 {offsets = [0, 64], sizes = [8, 64], strides = [1, 1]} : vector<8x256xf32> to vector<8x64xf32>
    %175 = vector.extract_strided_slice %170 {offsets = [0, 192], sizes = [8, 64], strides = [1, 1]} : vector<8x256xf32> to vector<8x64xf32>
    %176 = arith.mulf %174, %153 : vector<8x64xf32>
    %177 = arith.mulf %173, %172 : vector<8x64xf32>
    %178 = arith.addf %176, %177 : vector<8x64xf32>
    %179 = math.tanh %178 : vector<8x64xf32>
    %180 = arith.mulf %175, %179 : vector<8x64xf32>
    %c6_77 = arith.constant 6 : index
    %c0_78 = arith.constant 0 : index
    %c0_79 = arith.constant 0 : index
    %181 = vector.load %arg15[%c6_77, %c0_78, %c0_79] : memref<8x8x64xf32, #tpu.memory_space<vmem>>, vector<1x8x64xf32>
    %182 = vector.shape_cast %181 : vector<1x8x64xf32> to vector<8x64xf32>
    %183 = vector.shape_cast %180 : vector<8x64xf32> to vector<1x8x64xf32>
    tpu.vector_store %arg15[%c6_77, %c0_78, %c0_79], %183 {strides = array<i32>} : memref<8x8x64xf32, #tpu.memory_space<vmem>>, vector<1x8x64xf32>,
    %c1_80 = arith.constant 1 : index
    %c0_81 = arith.constant 0 : index
    %c0_82 = arith.constant 0 : index
    %184 = vector.load %arg16[%c1_80, %c0_81, %c0_82] : memref<8x8x64xf32, #tpu.memory_space<vmem>>, vector<1x8x64xf32>
    %185 = vector.shape_cast %184 : vector<1x8x64xf32> to vector<8x64xf32>
    %186 = vector.shape_cast %180 : vector<8x64xf32> to vector<1x8x64xf32>
    tpu.vector_store %arg16[%c1_80, %c0_81, %c0_82], %186 {strides = array<i32>} : memref<8x8x64xf32, #tpu.memory_space<vmem>>, vector<1x8x64xf32>,
    %c7_83 = arith.constant 7 : index
    %c0_84 = arith.constant 0 : index
    %c0_85 = arith.constant 0 : index
    %187 = vector.load %arg14[%c7_83, %c0_84, %c0_85] : memref<8x8x256xf32, #tpu.memory_space<vmem>>, vector<1x8x256xf32>
    %188 = vector.shape_cast %187 : vector<1x8x256xf32> to vector<8x256xf32>
    %cst_86 = arith.constant dense<0.000000e+00> : vector<8x256xf32>
    %189 = tpu.matmul %180, %9, %cst_86 {dimension_numbers = #tpu.dot_dimension_numbers<[1], [0], [0], [1], [0, 0, 1, 1], [], []>} : vector<8x64xf32>, vector<64x256xf32>, vector<8x256xf32> -> vector<8x256xf32>
    %190 = arith.addf %188, %189 : vector<8x256xf32>
    %191 = arith.negf %190 : vector<8x256xf32>
    %192 = math.exp %191 : vector<8x256xf32>
    %cst_87 = arith.constant 1.000000e+00 : f32
    %193 = vector.broadcast %cst_87 : f32 to vector<8x256xf32>
    %194 = arith.addf %193, %192 : vector<8x256xf32>
    %195 = arith.divf %193, %194 : vector<8x256xf32>
    %196 = vector.extract_strided_slice %190 {offsets = [0, 128], sizes = [8, 64], strides = [1, 1]} : vector<8x256xf32> to vector<8x64xf32>
    %197 = math.tanh %196 : vector<8x64xf32>
    %198 = vector.extract_strided_slice %195 {offsets = [0, 0], sizes = [8, 64], strides = [1, 1]} : vector<8x256xf32> to vector<8x64xf32>
    %199 = vector.extract_strided_slice %195 {offsets = [0, 64], sizes = [8, 64], strides = [1, 1]} : vector<8x256xf32> to vector<8x64xf32>
    %200 = vector.extract_strided_slice %195 {offsets = [0, 192], sizes = [8, 64], strides = [1, 1]} : vector<8x256xf32> to vector<8x64xf32>
    %201 = arith.mulf %199, %178 : vector<8x64xf32>
    %202 = arith.mulf %198, %197 : vector<8x64xf32>
    %203 = arith.addf %201, %202 : vector<8x64xf32>
    %204 = math.tanh %203 : vector<8x64xf32>
    %205 = arith.mulf %200, %204 : vector<8x64xf32>
    %c7_88 = arith.constant 7 : index
    %c0_89 = arith.constant 0 : index
    %c0_90 = arith.constant 0 : index
    %206 = vector.load %arg15[%c7_88, %c0_89, %c0_90] : memref<8x8x64xf32, #tpu.memory_space<vmem>>, vector<1x8x64xf32>
    %207 = vector.shape_cast %206 : vector<1x8x64xf32> to vector<8x64xf32>
    %208 = vector.shape_cast %205 : vector<8x64xf32> to vector<1x8x64xf32>
    tpu.vector_store %arg15[%c7_88, %c0_89, %c0_90], %208 {strides = array<i32>} : memref<8x8x64xf32, #tpu.memory_space<vmem>>, vector<1x8x64xf32>,
    %c0_91 = arith.constant 0 : index
    %c0_92 = arith.constant 0 : index
    %c0_93 = arith.constant 0 : index
    %209 = vector.load %arg16[%c0_91, %c0_92, %c0_93] : memref<8x8x64xf32, #tpu.memory_space<vmem>>, vector<1x8x64xf32>
    %210 = vector.shape_cast %209 : vector<1x8x64xf32> to vector<8x64xf32>
    %211 = vector.shape_cast %205 : vector<8x64xf32> to vector<1x8x64xf32>
    tpu.vector_store %arg16[%c0_91, %c0_92, %c0_93], %211 {strides = array<i32>} : memref<8x8x64xf32, #tpu.memory_space<vmem>>, vector<1x8x64xf32>,
    %c0_94 = arith.constant 0 : index
    %c0_95 = arith.constant 0 : index
    %c0_96 = arith.constant 0 : index
    %212 = vector.load %arg15[%c0_94, %c0_95, %c0_96] : memref<8x8x64xf32, #tpu.memory_space<vmem>>, vector<8x8x64xf32>
    %213 = vector.shape_cast %212 : vector<8x8x64xf32> to vector<64x64xf32>
    %c0_97 = arith.constant 0 : index
    %c0_98 = arith.constant 0 : index
    %214 = vector.load %arg5[%c0_97, %c0_98] : memref<64x256xf32, #tpu.memory_space<vmem>>, vector<64x256xf32>
    %cst_99 = arith.constant dense<0.000000e+00> : vector<64x256xf32>
    %215 = tpu.matmul %213, %214, %cst_99 {dimension_numbers = #tpu.dot_dimension_numbers<[1], [0], [0], [1], [0, 0, 1, 1], [], []>} : vector<64x64xf32>, vector<64x256xf32>, vector<64x256xf32> -> vector<64x256xf32>
    %c0_100 = arith.constant 0 : index
    %c0_101 = arith.constant 0 : index
    %c0_102 = arith.constant 0 : index
    %216 = vector.load %arg16[%c0_100, %c0_101, %c0_102] : memref<8x8x64xf32, #tpu.memory_space<vmem>>, vector<8x8x64xf32>
    %217 = vector.shape_cast %216 : vector<8x8x64xf32> to vector<64x64xf32>
    %c0_103 = arith.constant 0 : index
    %c0_104 = arith.constant 0 : index
    %218 = vector.load %arg6[%c0_103, %c0_104] : memref<64x256xf32, #tpu.memory_space<vmem>>, vector<64x256xf32>
    %cst_105 = arith.constant dense<0.000000e+00> : vector<64x256xf32>
    %219 = tpu.matmul %217, %218, %cst_105 {dimension_numbers = #tpu.dot_dimension_numbers<[1], [0], [0], [1], [0, 0, 1, 1], [], []>} : vector<64x64xf32>, vector<64x256xf32>, vector<64x256xf32> -> vector<64x256xf32>
    %220 = arith.addf %215, %219 : vector<64x256xf32>
    %c0_106 = arith.constant 0 : index
    %c0_107 = arith.constant 0 : index
    %221 = vector.load %arg7[%c0_106, %c0_107] : memref<1x256xf32, #tpu.memory_space<vmem>>, vector<1x256xf32>
    %222 = vector.broadcast %221 : vector<1x256xf32> to vector<64x256xf32>
    %223 = arith.addf %220, %222 : vector<64x256xf32>
    %224 = vector.shape_cast %223 : vector<64x256xf32> to vector<8x8x256xf32>
    %c0_108 = arith.constant 0 : index
    %c0_109 = arith.constant 0 : index
    %c0_110 = arith.constant 0 : index
    %225 = vector.load %arg14[%c0_108, %c0_109, %c0_110] : memref<8x8x256xf32, #tpu.memory_space<vmem>>, vector<8x8x256xf32>
    tpu.vector_store %arg14[%c0_108, %c0_109, %c0_110], %224 {strides = array<i32>} : memref<8x8x256xf32, #tpu.memory_space<vmem>>, vector<8x8x256xf32>,
    %c0_111 = arith.constant 0 : index
    %c0_112 = arith.constant 0 : index
    %226 = vector.load %arg8[%c0_111, %c0_112] : memref<64x256xf32, #tpu.memory_space<vmem>>, vector<64x256xf32>
    %cst_113 = arith.constant 0.000000e+00 : f32
    %227 = vector.broadcast %cst_113 : f32 to vector<8x64xf32>
    %cst_114 = arith.constant 0.000000e+00 : f32
    %228 = vector.broadcast %cst_114 : f32 to vector<8x64xf32>
    %c0_115 = arith.constant 0 : index
    %c0_116 = arith.constant 0 : index
    %c0_117 = arith.constant 0 : index
    %229 = vector.load %arg14[%c0_115, %c0_116, %c0_117] : memref<8x8x256xf32, #tpu.memory_space<vmem>>, vector<1x8x256xf32>
    %230 = vector.shape_cast %229 : vector<1x8x256xf32> to vector<8x256xf32>
    %cst_118 = arith.constant dense<0.000000e+00> : vector<8x256xf32>
    %231 = tpu.matmul %227, %226, %cst_118 {dimension_numbers = #tpu.dot_dimension_numbers<[1], [0], [0], [1], [0, 0, 1, 1], [], []>} : vector<8x64xf32>, vector<64x256xf32>, vector<8x256xf32> -> vector<8x256xf32>
    %232 = arith.addf %230, %231 : vector<8x256xf32>
    %233 = arith.negf %232 : vector<8x256xf32>
    %234 = math.exp %233 : vector<8x256xf32>
    %cst_119 = arith.constant 1.000000e+00 : f32
    %235 = vector.broadcast %cst_119 : f32 to vector<8x256xf32>
    %236 = arith.addf %235, %234 : vector<8x256xf32>
    %237 = arith.divf %235, %236 : vector<8x256xf32>
    %238 = vector.extract_strided_slice %232 {offsets = [0, 128], sizes = [8, 64], strides = [1, 1]} : vector<8x256xf32> to vector<8x64xf32>
    %239 = math.tanh %238 : vector<8x64xf32>
    %240 = vector.extract_strided_slice %237 {offsets = [0, 0], sizes = [8, 64], strides = [1, 1]} : vector<8x256xf32> to vector<8x64xf32>
    %241 = vector.extract_strided_slice %237 {offsets = [0, 64], sizes = [8, 64], strides = [1, 1]} : vector<8x256xf32> to vector<8x64xf32>
    %242 = vector.extract_strided_slice %237 {offsets = [0, 192], sizes = [8, 64], strides = [1, 1]} : vector<8x256xf32> to vector<8x64xf32>
    %243 = arith.mulf %241, %228 : vector<8x64xf32>
    %244 = arith.mulf %240, %239 : vector<8x64xf32>
    %245 = arith.addf %243, %244 : vector<8x64xf32>
    %246 = math.tanh %245 : vector<8x64xf32>
    %247 = arith.mulf %242, %246 : vector<8x64xf32>
    %c1_120 = arith.constant 1 : index
    %c0_121 = arith.constant 0 : index
    %c0_122 = arith.constant 0 : index
    %248 = vector.load %arg14[%c1_120, %c0_121, %c0_122] : memref<8x8x256xf32, #tpu.memory_space<vmem>>, vector<1x8x256xf32>
    %249 = vector.shape_cast %248 : vector<1x8x256xf32> to vector<8x256xf32>
    %cst_123 = arith.constant dense<0.000000e+00> : vector<8x256xf32>
    %250 = tpu.matmul %247, %226, %cst_123 {dimension_numbers = #tpu.dot_dimension_numbers<[1], [0], [0], [1], [0, 0, 1, 1], [], []>} : vector<8x64xf32>, vector<64x256xf32>, vector<8x256xf32> -> vector<8x256xf32>
    %251 = arith.addf %249, %250 : vector<8x256xf32>
    %252 = arith.negf %251 : vector<8x256xf32>
    %253 = math.exp %252 : vector<8x256xf32>
    %cst_124 = arith.constant 1.000000e+00 : f32
    %254 = vector.broadcast %cst_124 : f32 to vector<8x256xf32>
    %255 = arith.addf %254, %253 : vector<8x256xf32>
    %256 = arith.divf %254, %255 : vector<8x256xf32>
    %257 = vector.extract_strided_slice %251 {offsets = [0, 128], sizes = [8, 64], strides = [1, 1]} : vector<8x256xf32> to vector<8x64xf32>
    %258 = math.tanh %257 : vector<8x64xf32>
    %259 = vector.extract_strided_slice %256 {offsets = [0, 0], sizes = [8, 64], strides = [1, 1]} : vector<8x256xf32> to vector<8x64xf32>
    %260 = vector.extract_strided_slice %256 {offsets = [0, 64], sizes = [8, 64], strides = [1, 1]} : vector<8x256xf32> to vector<8x64xf32>
    %261 = vector.extract_strided_slice %256 {offsets = [0, 192], sizes = [8, 64], strides = [1, 1]} : vector<8x256xf32> to vector<8x64xf32>
    %262 = arith.mulf %260, %245 : vector<8x64xf32>
    %263 = arith.mulf %259, %258 : vector<8x64xf32>
    %264 = arith.addf %262, %263 : vector<8x64xf32>
    %265 = math.tanh %264 : vector<8x64xf32>
    %266 = arith.mulf %261, %265 : vector<8x64xf32>
    %c2_125 = arith.constant 2 : index
    %c0_126 = arith.constant 0 : index
    %c0_127 = arith.constant 0 : index
    %267 = vector.load %arg14[%c2_125, %c0_126, %c0_127] : memref<8x8x256xf32, #tpu.memory_space<vmem>>, vector<1x8x256xf32>
    %268 = vector.shape_cast %267 : vector<1x8x256xf32> to vector<8x256xf32>
    %cst_128 = arith.constant dense<0.000000e+00> : vector<8x256xf32>
    %269 = tpu.matmul %266, %226, %cst_128 {dimension_numbers = #tpu.dot_dimension_numbers<[1], [0], [0], [1], [0, 0, 1, 1], [], []>} : vector<8x64xf32>, vector<64x256xf32>, vector<8x256xf32> -> vector<8x256xf32>
    %270 = arith.addf %268, %269 : vector<8x256xf32>
    %271 = arith.negf %270 : vector<8x256xf32>
    %272 = math.exp %271 : vector<8x256xf32>
    %cst_129 = arith.constant 1.000000e+00 : f32
    %273 = vector.broadcast %cst_129 : f32 to vector<8x256xf32>
    %274 = arith.addf %273, %272 : vector<8x256xf32>
    %275 = arith.divf %273, %274 : vector<8x256xf32>
    %276 = vector.extract_strided_slice %270 {offsets = [0, 128], sizes = [8, 64], strides = [1, 1]} : vector<8x256xf32> to vector<8x64xf32>
    %277 = math.tanh %276 : vector<8x64xf32>
    %278 = vector.extract_strided_slice %275 {offsets = [0, 0], sizes = [8, 64], strides = [1, 1]} : vector<8x256xf32> to vector<8x64xf32>
    %279 = vector.extract_strided_slice %275 {offsets = [0, 64], sizes = [8, 64], strides = [1, 1]} : vector<8x256xf32> to vector<8x64xf32>
    %280 = vector.extract_strided_slice %275 {offsets = [0, 192], sizes = [8, 64], strides = [1, 1]} : vector<8x256xf32> to vector<8x64xf32>
    %281 = arith.mulf %279, %264 : vector<8x64xf32>
    %282 = arith.mulf %278, %277 : vector<8x64xf32>
    %283 = arith.addf %281, %282 : vector<8x64xf32>
    %284 = math.tanh %283 : vector<8x64xf32>
    %285 = arith.mulf %280, %284 : vector<8x64xf32>
    %c3_130 = arith.constant 3 : index
    %c0_131 = arith.constant 0 : index
    %c0_132 = arith.constant 0 : index
    %286 = vector.load %arg14[%c3_130, %c0_131, %c0_132] : memref<8x8x256xf32, #tpu.memory_space<vmem>>, vector<1x8x256xf32>
    %287 = vector.shape_cast %286 : vector<1x8x256xf32> to vector<8x256xf32>
    %cst_133 = arith.constant dense<0.000000e+00> : vector<8x256xf32>
    %288 = tpu.matmul %285, %226, %cst_133 {dimension_numbers = #tpu.dot_dimension_numbers<[1], [0], [0], [1], [0, 0, 1, 1], [], []>} : vector<8x64xf32>, vector<64x256xf32>, vector<8x256xf32> -> vector<8x256xf32>
    %289 = arith.addf %287, %288 : vector<8x256xf32>
    %290 = arith.negf %289 : vector<8x256xf32>
    %291 = math.exp %290 : vector<8x256xf32>
    %cst_134 = arith.constant 1.000000e+00 : f32
    %292 = vector.broadcast %cst_134 : f32 to vector<8x256xf32>
    %293 = arith.addf %292, %291 : vector<8x256xf32>
    %294 = arith.divf %292, %293 : vector<8x256xf32>
    %295 = vector.extract_strided_slice %289 {offsets = [0, 128], sizes = [8, 64], strides = [1, 1]} : vector<8x256xf32> to vector<8x64xf32>
    %296 = math.tanh %295 : vector<8x64xf32>
    %297 = vector.extract_strided_slice %294 {offsets = [0, 0], sizes = [8, 64], strides = [1, 1]} : vector<8x256xf32> to vector<8x64xf32>
    %298 = vector.extract_strided_slice %294 {offsets = [0, 64], sizes = [8, 64], strides = [1, 1]} : vector<8x256xf32> to vector<8x64xf32>
    %299 = vector.extract_strided_slice %294 {offsets = [0, 192], sizes = [8, 64], strides = [1, 1]} : vector<8x256xf32> to vector<8x64xf32>
    %300 = arith.mulf %298, %283 : vector<8x64xf32>
    %301 = arith.mulf %297, %296 : vector<8x64xf32>
    %302 = arith.addf %300, %301 : vector<8x64xf32>
    %303 = math.tanh %302 : vector<8x64xf32>
    %304 = arith.mulf %299, %303 : vector<8x64xf32>
    %c4_135 = arith.constant 4 : index
    %c0_136 = arith.constant 0 : index
    %c0_137 = arith.constant 0 : index
    %305 = vector.load %arg14[%c4_135, %c0_136, %c0_137] : memref<8x8x256xf32, #tpu.memory_space<vmem>>, vector<1x8x256xf32>
    %306 = vector.shape_cast %305 : vector<1x8x256xf32> to vector<8x256xf32>
    %cst_138 = arith.constant dense<0.000000e+00> : vector<8x256xf32>
    %307 = tpu.matmul %304, %226, %cst_138 {dimension_numbers = #tpu.dot_dimension_numbers<[1], [0], [0], [1], [0, 0, 1, 1], [], []>} : vector<8x64xf32>, vector<64x256xf32>, vector<8x256xf32> -> vector<8x256xf32>
    %308 = arith.addf %306, %307 : vector<8x256xf32>
    %309 = arith.negf %308 : vector<8x256xf32>
    %310 = math.exp %309 : vector<8x256xf32>
    %cst_139 = arith.constant 1.000000e+00 : f32
    %311 = vector.broadcast %cst_139 : f32 to vector<8x256xf32>
    %312 = arith.addf %311, %310 : vector<8x256xf32>
    %313 = arith.divf %311, %312 : vector<8x256xf32>
    %314 = vector.extract_strided_slice %308 {offsets = [0, 128], sizes = [8, 64], strides = [1, 1]} : vector<8x256xf32> to vector<8x64xf32>
    %315 = math.tanh %314 : vector<8x64xf32>
    %316 = vector.extract_strided_slice %313 {offsets = [0, 0], sizes = [8, 64], strides = [1, 1]} : vector<8x256xf32> to vector<8x64xf32>
    %317 = vector.extract_strided_slice %313 {offsets = [0, 64], sizes = [8, 64], strides = [1, 1]} : vector<8x256xf32> to vector<8x64xf32>
    %318 = vector.extract_strided_slice %313 {offsets = [0, 192], sizes = [8, 64], strides = [1, 1]} : vector<8x256xf32> to vector<8x64xf32>
    %319 = arith.mulf %317, %302 : vector<8x64xf32>
    %320 = arith.mulf %316, %315 : vector<8x64xf32>
    %321 = arith.addf %319, %320 : vector<8x64xf32>
    %322 = math.tanh %321 : vector<8x64xf32>
    %323 = arith.mulf %318, %322 : vector<8x64xf32>
    %c5_140 = arith.constant 5 : index
    %c0_141 = arith.constant 0 : index
    %c0_142 = arith.constant 0 : index
    %324 = vector.load %arg14[%c5_140, %c0_141, %c0_142] : memref<8x8x256xf32, #tpu.memory_space<vmem>>, vector<1x8x256xf32>
    %325 = vector.shape_cast %324 : vector<1x8x256xf32> to vector<8x256xf32>
    %cst_143 = arith.constant dense<0.000000e+00> : vector<8x256xf32>
    %326 = tpu.matmul %323, %226, %cst_143 {dimension_numbers = #tpu.dot_dimension_numbers<[1], [0], [0], [1], [0, 0, 1, 1], [], []>} : vector<8x64xf32>, vector<64x256xf32>, vector<8x256xf32> -> vector<8x256xf32>
    %327 = arith.addf %325, %326 : vector<8x256xf32>
    %328 = arith.negf %327 : vector<8x256xf32>
    %329 = math.exp %328 : vector<8x256xf32>
    %cst_144 = arith.constant 1.000000e+00 : f32
    %330 = vector.broadcast %cst_144 : f32 to vector<8x256xf32>
    %331 = arith.addf %330, %329 : vector<8x256xf32>
    %332 = arith.divf %330, %331 : vector<8x256xf32>
    %333 = vector.extract_strided_slice %327 {offsets = [0, 128], sizes = [8, 64], strides = [1, 1]} : vector<8x256xf32> to vector<8x64xf32>
    %334 = math.tanh %333 : vector<8x64xf32>
    %335 = vector.extract_strided_slice %332 {offsets = [0, 0], sizes = [8, 64], strides = [1, 1]} : vector<8x256xf32> to vector<8x64xf32>
    %336 = vector.extract_strided_slice %332 {offsets = [0, 64], sizes = [8, 64], strides = [1, 1]} : vector<8x256xf32> to vector<8x64xf32>
    %337 = vector.extract_strided_slice %332 {offsets = [0, 192], sizes = [8, 64], strides = [1, 1]} : vector<8x256xf32> to vector<8x64xf32>
    %338 = arith.mulf %336, %321 : vector<8x64xf32>
    %339 = arith.mulf %335, %334 : vector<8x64xf32>
    %340 = arith.addf %338, %339 : vector<8x64xf32>
    %341 = math.tanh %340 : vector<8x64xf32>
    %342 = arith.mulf %337, %341 : vector<8x64xf32>
    %c6_145 = arith.constant 6 : index
    %c0_146 = arith.constant 0 : index
    %c0_147 = arith.constant 0 : index
    %343 = vector.load %arg14[%c6_145, %c0_146, %c0_147] : memref<8x8x256xf32, #tpu.memory_space<vmem>>, vector<1x8x256xf32>
    %344 = vector.shape_cast %343 : vector<1x8x256xf32> to vector<8x256xf32>
    %cst_148 = arith.constant dense<0.000000e+00> : vector<8x256xf32>
    %345 = tpu.matmul %342, %226, %cst_148 {dimension_numbers = #tpu.dot_dimension_numbers<[1], [0], [0], [1], [0, 0, 1, 1], [], []>} : vector<8x64xf32>, vector<64x256xf32>, vector<8x256xf32> -> vector<8x256xf32>
    %346 = arith.addf %344, %345 : vector<8x256xf32>
    %347 = arith.negf %346 : vector<8x256xf32>
    %348 = math.exp %347 : vector<8x256xf32>
    %cst_149 = arith.constant 1.000000e+00 : f32
    %349 = vector.broadcast %cst_149 : f32 to vector<8x256xf32>
    %350 = arith.addf %349, %348 : vector<8x256xf32>
    %351 = arith.divf %349, %350 : vector<8x256xf32>
    %352 = vector.extract_strided_slice %346 {offsets = [0, 128], sizes = [8, 64], strides = [1, 1]} : vector<8x256xf32> to vector<8x64xf32>
    %353 = math.tanh %352 : vector<8x64xf32>
    %354 = vector.extract_strided_slice %351 {offsets = [0, 0], sizes = [8, 64], strides = [1, 1]} : vector<8x256xf32> to vector<8x64xf32>
    %355 = vector.extract_strided_slice %351 {offsets = [0, 64], sizes = [8, 64], strides = [1, 1]} : vector<8x256xf32> to vector<8x64xf32>
    %356 = vector.extract_strided_slice %351 {offsets = [0, 192], sizes = [8, 64], strides = [1, 1]} : vector<8x256xf32> to vector<8x64xf32>
    %357 = arith.mulf %355, %340 : vector<8x64xf32>
    %358 = arith.mulf %354, %353 : vector<8x64xf32>
    %359 = arith.addf %357, %358 : vector<8x64xf32>
    %360 = math.tanh %359 : vector<8x64xf32>
    %361 = arith.mulf %356, %360 : vector<8x64xf32>
    %c7_150 = arith.constant 7 : index
    %c0_151 = arith.constant 0 : index
    %c0_152 = arith.constant 0 : index
    %362 = vector.load %arg14[%c7_150, %c0_151, %c0_152] : memref<8x8x256xf32, #tpu.memory_space<vmem>>, vector<1x8x256xf32>
    %363 = vector.shape_cast %362 : vector<1x8x256xf32> to vector<8x256xf32>
    %cst_153 = arith.constant dense<0.000000e+00> : vector<8x256xf32>
    %364 = tpu.matmul %361, %226, %cst_153 {dimension_numbers = #tpu.dot_dimension_numbers<[1], [0], [0], [1], [0, 0, 1, 1], [], []>} : vector<8x64xf32>, vector<64x256xf32>, vector<8x256xf32> -> vector<8x256xf32>
    %365 = arith.addf %363, %364 : vector<8x256xf32>
    %366 = arith.negf %365 : vector<8x256xf32>
    %367 = math.exp %366 : vector<8x256xf32>
    %cst_154 = arith.constant 1.000000e+00 : f32
    %368 = vector.broadcast %cst_154 : f32 to vector<8x256xf32>
    %369 = arith.addf %368, %367 : vector<8x256xf32>
    %370 = arith.divf %368, %369 : vector<8x256xf32>
    %371 = vector.extract_strided_slice %365 {offsets = [0, 128], sizes = [8, 64], strides = [1, 1]} : vector<8x256xf32> to vector<8x64xf32>
    %372 = math.tanh %371 : vector<8x64xf32>
    %373 = vector.extract_strided_slice %370 {offsets = [0, 0], sizes = [8, 64], strides = [1, 1]} : vector<8x256xf32> to vector<8x64xf32>
    %374 = vector.extract_strided_slice %370 {offsets = [0, 64], sizes = [8, 64], strides = [1, 1]} : vector<8x256xf32> to vector<8x64xf32>
    %375 = vector.extract_strided_slice %370 {offsets = [0, 192], sizes = [8, 64], strides = [1, 1]} : vector<8x256xf32> to vector<8x64xf32>
    %376 = arith.mulf %374, %359 : vector<8x64xf32>
    %377 = arith.mulf %373, %372 : vector<8x64xf32>
    %378 = arith.addf %376, %377 : vector<8x64xf32>
    %379 = math.tanh %378 : vector<8x64xf32>
    %380 = arith.mulf %375, %379 : vector<8x64xf32>
    %c0_155 = arith.constant 0 : index
    %c0_156 = arith.constant 0 : index
    %381 = vector.load %arg9[%c0_155, %c0_156] : memref<64x64xf32, #tpu.memory_space<vmem>>, vector<64x64xf32>
    %cst_157 = arith.constant dense<0.000000e+00> : vector<8x64xf32>
    %382 = tpu.matmul %380, %381, %cst_157 {dimension_numbers = #tpu.dot_dimension_numbers<[1], [0], [0], [1], [0, 0, 1, 1], [], []>} : vector<8x64xf32>, vector<64x64xf32>, vector<8x64xf32> -> vector<8x64xf32>
    %c0_158 = arith.constant 0 : index
    %c0_159 = arith.constant 0 : index
    %383 = vector.load %arg10[%c0_158, %c0_159] : memref<1x64xf32, #tpu.memory_space<vmem>>, vector<1x64xf32>
    %384 = vector.broadcast %383 : vector<1x64xf32> to vector<8x64xf32>
    %385 = arith.addf %382, %384 : vector<8x64xf32>
    %cst_160 = arith.constant 0.000000e+00 : f32
    %386 = vector.broadcast %cst_160 : f32 to vector<8x64xf32>
    %387 = arith.maximumf %385, %386 : vector<8x64xf32>
    %c0_161 = arith.constant 0 : index
    %c0_162 = arith.constant 0 : index
    %388 = vector.load %arg11[%c0_161, %c0_162] : memref<1x64xf32, #tpu.memory_space<vmem>>, vector<1x64xf32>
    %389 = vector.broadcast %388 : vector<1x64xf32> to vector<8x64xf32>
    %390 = arith.mulf %387, %389 : vector<8x64xf32>
    %cst_163 = arith.constant dense<0.000000e+00> : vector<8xf32>
    %391 = vector.multi_reduction <add>, %390, %cst_163 [1] : vector<8x64xf32> to vector<8xf32>
    %392 = vector.shape_cast %391 : vector<8xf32> to vector<8x1xf32>
    %c0_164 = arith.constant 0 : index
    %c0_165 = arith.constant 0 : index
    %393 = vector.load %arg12[%c0_164, %c0_165] : memref<1x1xf32, #tpu.memory_space<vmem>>, vector<1x1xf32>
    %394 = vector.broadcast %393 : vector<1x1xf32> to vector<8x1xf32>
    %395 = arith.addf %392, %394 : vector<8x1xf32>
    %c0_166 = arith.constant 0 : index
    %c0_167 = arith.constant 0 : index
    %396 = vector.load %arg13[%c0_166, %c0_167] : memref<8x1xf32, #tpu.memory_space<vmem>>, vector<8x1xf32>
    tpu.vector_store %arg13[%c0_166, %c0_167], %395 {strides = array<i32>} : memref<8x1xf32, #tpu.memory_space<vmem>>, vector<8x1xf32>,
    return
  }
  func.func @transform_0(%arg0: i32) -> (i32, i32, i32) {
    %c0_i32 = arith.constant 0 : i32
    %c0_i32_0 = arith.constant 0 : i32
    %c0_i32_1 = arith.constant 0 : i32
    return %c0_i32, %arg0, %c0_i32_0 : i32, i32, i32
  }
  func.func @transform_1(%arg0: i32) -> (i32, i32) {
    %c0_i32 = arith.constant 0 : i32
    %c0_i32_0 = arith.constant 0 : i32
    %c0_i32_1 = arith.constant 0 : i32
    return %c0_i32, %c0_i32_0 : i32, i32
  }
  func.func @transform_2(%arg0: i32) -> (i32, i32) {
    %c0_i32 = arith.constant 0 : i32
    %c0_i32_0 = arith.constant 0 : i32
    %c0_i32_1 = arith.constant 0 : i32
    return %c0_i32, %c0_i32_0 : i32, i32
  }
  func.func @transform_3(%arg0: i32) -> (i32, i32) {
    %c0_i32 = arith.constant 0 : i32
    %c0_i32_0 = arith.constant 0 : i32
    %c0_i32_1 = arith.constant 0 : i32
    return %c0_i32, %c0_i32_0 : i32, i32
  }
  func.func @transform_4(%arg0: i32) -> (i32, i32) {
    %c0_i32 = arith.constant 0 : i32
    %c0_i32_0 = arith.constant 0 : i32
    %c0_i32_1 = arith.constant 0 : i32
    return %c0_i32, %c0_i32_0 : i32, i32
  }
  func.func @transform_5(%arg0: i32) -> (i32, i32) {
    %c0_i32 = arith.constant 0 : i32
    %c0_i32_0 = arith.constant 0 : i32
    %c0_i32_1 = arith.constant 0 : i32
    return %c0_i32, %c0_i32_0 : i32, i32
  }
  func.func @transform_6(%arg0: i32) -> (i32, i32) {
    %c0_i32 = arith.constant 0 : i32
    %c0_i32_0 = arith.constant 0 : i32
    %c0_i32_1 = arith.constant 0 : i32
    return %c0_i32, %c0_i32_0 : i32, i32
  }
  func.func @transform_7(%arg0: i32) -> (i32, i32) {
    %c0_i32 = arith.constant 0 : i32
    %c0_i32_0 = arith.constant 0 : i32
    %c0_i32_1 = arith.constant 0 : i32
    return %c0_i32, %c0_i32_0 : i32, i32
  }
  func.func @transform_8(%arg0: i32) -> (i32, i32) {
    %c0_i32 = arith.constant 0 : i32
    %c0_i32_0 = arith.constant 0 : i32
    %c0_i32_1 = arith.constant 0 : i32
    return %c0_i32, %c0_i32_0 : i32, i32
  }
  func.func @transform_9(%arg0: i32) -> (i32, i32) {
    %c0_i32 = arith.constant 0 : i32
    %c0_i32_0 = arith.constant 0 : i32
    %c0_i32_1 = arith.constant 0 : i32
    return %c0_i32, %c0_i32_0 : i32, i32
  }
  func.func @transform_10(%arg0: i32) -> (i32, i32) {
    %c0_i32 = arith.constant 0 : i32
    %c0_i32_0 = arith.constant 0 : i32
    %c0_i32_1 = arith.constant 0 : i32
    return %c0_i32, %c0_i32_0 : i32, i32
  }
  func.func @transform_11(%arg0: i32) -> (i32, i32) {
    %c0_i32 = arith.constant 0 : i32
    %c0_i32_0 = arith.constant 0 : i32
    %c0_i32_1 = arith.constant 0 : i32
    return %c0_i32, %c0_i32_0 : i32, i32
  }
  func.func @transform_12(%arg0: i32) -> (i32, i32) {
    %c0_i32 = arith.constant 0 : i32
    %c0_i32_0 = arith.constant 0 : i32
    return %arg0, %c0_i32 : i32, i32
  }
}

</mosaic_0001>

<llo_original>
// kernel: tpu_custom_call.1
$region0: #{tpu_custom_call.1}
  #allocation0 [shape = 'u32[]', space=smem, size = 0x4, offset = 0x4, fixed_abs, tag = 'smem constant byte address 0x4 - core index']
  #allocation1 [shape = 'u32[144,128]{1,0:T(1,128)}', space=vmem, size = 0x12000, scoped, tag = 'internal scratch']
  #allocation2 [shape = 'f32[8,8,256]{2,1,0:T(8,128)}', space=vmem, size = 0x10000, scoped, tag = 'scratch operand']
  #allocation3 [shape = 'f32[8,8,64]{2,1,0:T(8,128)}', space=vmem, size = 0x8000, scoped, tag = 'scratch operand']
  #allocation4 [shape = 'f32[8,8,64]{2,1,0:T(8,128)}', space=vmem, size = 0x8000, scoped, tag = 'scratch operand']
  #allocation5 [shape = 'f32[1,1]{1,0:T(1,128)S(1)}', space=vmem, size = 0x200, scoped, tag = 'scoped memory for tpu_custom_call.1']
  %s0 = inlined_call_operand.hbm [shape: f32[8,8,16], index: 0, kind: input, shape index: {}]
  %s1 = inlined_call_operand.hbm [shape: f32[16,256], index: 1, kind: input, shape index: {}]
  %s2 = inlined_call_operand.vmem [shape: f32[1,256], index: 2, kind: input, shape index: {}]
  %s3 = inlined_call_operand.hbm [shape: f32[64,256], index: 3, kind: input, shape index: {}]
  %s4 = inlined_call_operand.hbm [shape: f32[64,256], index: 4, kind: input, shape index: {}]
  %s5 = inlined_call_operand.hbm [shape: f32[64,256], index: 5, kind: input, shape index: {}]
  %s6 = inlined_call_operand.vmem [shape: f32[1,256], index: 6, kind: input, shape index: {}]
  %s7 = inlined_call_operand.hbm [shape: f32[64,256], index: 7, kind: input, shape index: {}]
  %s8 = inlined_call_operand.hbm [shape: f32[64,64], index: 8, kind: input, shape index: {}]
  %s9 = inlined_call_operand.vmem [shape: f32[1,64], index: 9, kind: input, shape index: {}]
  %s10 = inlined_call_operand.vmem [shape: f32[1,64], index: 10, kind: input, shape index: {}]
  %s11 = inlined_call_operand.<no memory space> [shape: f32[1,1], index: 11, kind: input, shape index: {}]
  %s12 = inlined_call_operand.vmem [shape: f32[8,1], index: 12, kind: output, shape index: {}]
  %s13 = sld [smem:[#allocation0]]
  $region86: #{tpu_custom_call.1} parent=0
    _
  %s15 = ssub.s32 1, %s13
  %s16 = scalar_select 0, %s15, %s13
  %v17 = vstv %s11
  %18 = vst [vmem:[#allocation5] sm:$0x1] %v17
  $region1: #{tpu_custom_call.1} parent=0
    #allocation6 [shape = 'u8[32768]{0}', space=vmem, size = 0x8000, scoped, tag = 'input window, operand 0, single buffered']
    #allocation7 [shape = 's32[1]{0}', space=sflag, size = 0x4, scoped, tag = 'scoped memory for tpu_custom_call.1']
    #allocation8 [shape = 'u8[16384]{0}', space=vmem, size = 0x4000, scoped, tag = 'input window, operand 1, single buffered']
    #allocation9 [shape = 's32[1]{0}', space=sflag, size = 0x4, scoped, tag = 'scoped memory for tpu_custom_call.1']
    #allocation10 [shape = 'u8[65536]{0}', space=vmem, size = 0x10000, scoped, tag = 'input window, operand 3, single buffered']
    #allocation11 [shape = 'u8[65536]{0}', space=vmem, size = 0x10000, scoped, tag = 'input window, operand 4, single buffered']
    #allocation12 [shape = 's32[1]{0}', space=sflag, size = 0x4, scoped, tag = 'scoped memory for tpu_custom_call.1']
    #allocation13 [shape = 'u8[65536]{0}', space=vmem, size = 0x10000, scoped, tag = 'input window, operand 5, single buffered']
    #allocation14 [shape = 'u8[65536]{0}', space=vmem, size = 0x10000, scoped, tag = 'input window, operand 7, single buffered']
    #allocation15 [shape = 's32[1]{0}', space=sflag, size = 0x4, scoped, tag = 'scoped memory for tpu_custom_call.1']
    #allocation16 [shape = 'u8[32768]{0}', space=vmem, size = 0x8000, scoped, tag = 'input window, operand 8, single buffered']
    %19 = vsyncpa [#allocation7], 0
    %20 = vsyncpa [#allocation9], 0
    %21 = vsyncpa [#allocation12], 0
    %22 = vsyncpa [#allocation15], 0
    // Predicated region
    $region2: #{tpu_custom_call.1} parent=1 // pred_check
      _
    $region3: #{tpu_custom_call.1} parent=1 // pred_check_branch
      %24 = sbr.rel (0) target = $region5
    $region4: #{tpu_custom_call.1} parent=1 // pred_region
      %s26 = ssub.s32 1024, 1024
      %27 = vsyncadd [#allocation7], %s26
      %s28 = sshll.u32 [#allocation6], 4
      %s29 = int_to_ptr.vmem [resolvable:$true] %s28
      %34 = dma.hbm_to_vmem [thread:$0]  %s0, 1024, %s29, [#allocation7], 128, 128, 8
    $region5: #{tpu_custom_call.1} parent=1 // pred_fallthru
      _
    // Predicated region
    $region6: #{tpu_custom_call.1} parent=1 // pred_check
      _
    $region7: #{tpu_custom_call.1} parent=1 // pred_check_branch
      %36 = sbr.rel (0) target = $region9
    $region8: #{tpu_custom_call.1} parent=1 // pred_region
      %s38 = ssub.s32 512, 512
      %39 = vsyncadd [#allocation9], %s38
      %s40 = sshll.u32 [#allocation8], 4
      %s41 = int_to_ptr.vmem [resolvable:$true] %s40
      %46 = dma.hbm_to_vmem [thread:$0]  %s1, 512, %s41, [#allocation9], 256, 256, 16
    $region9: #{tpu_custom_call.1} parent=1 // pred_fallthru
      _
    // Predicated region
    $region10: #{tpu_custom_call.1} parent=1 // pred_check
      _
    $region11: #{tpu_custom_call.1} parent=1 // pred_check_branch
      %48 = sbr.rel (0) target = $region13
    $region12: #{tpu_custom_call.1} parent=1 // pred_region
      _
    $region13: #{tpu_custom_call.1} parent=1 // pred_fallthru
      _
    // Predicated region
    $region14: #{tpu_custom_call.1} parent=1 // pred_check
      _
    $region15: #{tpu_custom_call.1} parent=1 // pred_check_branch
      %50 = sbr.rel (0) target = $region17
    $region16: #{tpu_custom_call.1} parent=1 // pred_region
      %s52 = ssub.s32 2048, 2048
      %53 = vsyncadd [#allocation9], %s52
      %s54 = sshll.u32 [#allocation10], 4
      %s55 = int_to_ptr.vmem [resolvable:$true] %s54
      %60 = dma.hbm_to_vmem [thread:$0]  %s3, 2048, %s55, [#allocation9], 256, 256, 16
    $region17: #{tpu_custom_call.1} parent=1 // pred_fallthru
      _
    // Predicated region
    $region18: #{tpu_custom_call.1} parent=1 // pred_check
      _
    $region19: #{tpu_custom_call.1} parent=1 // pred_check_branch
      %62 = sbr.rel (0) target = $region21
    $region20: #{tpu_custom_call.1} parent=1 // pred_region
      %s64 = ssub.s32 2048, 2048
      %65 = vsyncadd [#allocation12], %s64
      %s66 = sshll.u32 [#allocation11], 4
      %s67 = int_to_ptr.vmem [resolvable:$true] %s66
      %72 = dma.hbm_to_vmem [thread:$0]  %s4, 2048, %s67, [#allocation12], 256, 256, 16
    $region21: #{tpu_custom_call.1} parent=1 // pred_fallthru
      _
    // Predicated region
    $region22: #{tpu_custom_call.1} parent=1 // pred_check
      _
    $region23: #{tpu_custom_call.1} parent=1 // pred_check_branch
      %74 = sbr.rel (0) target = $region25
    $region24: #{tpu_custom_call.1} parent=1 // pred_region
      %s76 = ssub.s32 2048, 2048
      %77 = vsyncadd [#allocation12], %s76
      %s78 = sshll.u32 [#allocation13], 4
      %s79 = int_to_ptr.vmem [resolvable:$true] %s78
      %84 = dma.hbm_to_vmem [thread:$0]  %s5, 2048, %s79, [#allocation12], 256, 256, 16
    $region25: #{tpu_custom_call.1} parent=1 // pred_fallthru
      _
    // Predicated region
    $region26: #{tpu_custom_call.1} parent=1 // pred_check
      _
    $region27: #{tpu_custom_call.1} parent=1 // pred_check_branch
      %86 = sbr.rel (0) target = $region29
    $region28: #{tpu_custom_call.1} parent=1 // pred_region
      _
    $region29: #{tpu_custom_call.1} parent=1 // pred_fallthru
      _
    // Predicated region
    $region30: #{tpu_custom_call.1} parent=1 // pred_check
      _
    $region31: #{tpu_custom_call.1} parent=1 // pred_check_branch
      %88 = sbr.rel (0) target = $region33
    $region32: #{tpu_custom_call.1} parent=1 // pred_region
      %s90 = ssub.s32 2048, 2048
      %91 = vsyncadd [#allocation15], %s90
      %s92 = sshll.u32 [#allocation14], 4
      %s93 = int_to_ptr.vmem [resolvable:$true] %s92
      %98 = dma.hbm_to_vmem [thread:$0]  %s7, 2048, %s93, [#allocation15], 256, 256, 16
    $region33: #{tpu_custom_call.1} parent=1 // pred_fallthru
      _
    // Predicated region
    $region34: #{tpu_custom_call.1} parent=1 // pred_check
      _
    $region35: #{tpu_custom_call.1} parent=1 // pred_check_branch
      %100 = sbr.rel (0) target = $region37
    $region36: #{tpu_custom_call.1} parent=1 // pred_region
      %s102 = ssub.s32 1024, 1024
      %103 = vsyncadd [#allocation15], %s102
      %s104 = sshll.u32 [#allocation16], 4
      %s105 = int_to_ptr.vmem [resolvable:$true] %s104
      %110 = dma.hbm_to_vmem [thread:$0]  %s8, 1024, %s105, [#allocation15], 128, 128, 8
    $region37: #{tpu_custom_call.1} parent=1 // pred_fallthru
      _
    // Predicated region
    $region38: #{tpu_custom_call.1} parent=1 // pred_check
      _
    $region39: #{tpu_custom_call.1} parent=1 // pred_check_branch
      %112 = sbr.rel (0) target = $region41
    $region40: #{tpu_custom_call.1} parent=1 // pred_region
      _
    $region41: #{tpu_custom_call.1} parent=1 // pred_fallthru
      _
    // Predicated region
    $region42: #{tpu_custom_call.1} parent=1 // pred_check
      _
    $region43: #{tpu_custom_call.1} parent=1 // pred_check_branch
      %114 = sbr.rel (0) target = $region45
    $region44: #{tpu_custom_call.1} parent=1 // pred_region
      _
    $region45: #{tpu_custom_call.1} parent=1 // pred_fallthru
      _
    // Predicated region
    $region46: #{tpu_custom_call.1} parent=1 // pred_check
      _
    $region47: #{tpu_custom_call.1} parent=1 // pred_check_branch
      %116 = sbr.rel (0) target = $region49
    $region48: #{tpu_custom_call.1} parent=1 // pred_region
      _
    $region49: #{tpu_custom_call.1} parent=1 // pred_fallthru
      _
    // Predicated region
    $region50: #{tpu_custom_call.1} parent=1 // pred_check
      _
    $region51: #{tpu_custom_call.1} parent=1 // pred_check_branch
      %118 = sbr.rel (0) target = $region53
    $region52: #{tpu_custom_call.1} parent=1 // pred_region
      %119 = dma.done [#allocation7], 1024
    $region53: #{tpu_custom_call.1} parent=1 // pred_fallthru
      _
    // Predicated region
    $region54: #{tpu_custom_call.1} parent=1 // pred_check
      _
    $region55: #{tpu_custom_call.1} parent=1 // pred_check_branch
      %121 = sbr.rel (0) target = $region57
    $region56: #{tpu_custom_call.1} parent=1 // pred_region
      %122 = dma.done [#allocation9], 512
    $region57: #{tpu_custom_call.1} parent=1 // pred_fallthru
      _
    // Predicated region
    $region58: #{tpu_custom_call.1} parent=1 // pred_check
      _
    $region59: #{tpu_custom_call.1} parent=1 // pred_check_branch
      %124 = sbr.rel (0) target = $region61
    $region60: #{tpu_custom_call.1} parent=1 // pred_region
      %125 = dma.done [#allocation9], 2048
    $region61: #{tpu_custom_call.1} parent=1 // pred_fallthru
      _
    // Predicated region
    $region62: #{tpu_custom_call.1} parent=1 // pred_check
      _
    $region63: #{tpu_custom_call.1} parent=1 // pred_check_branch
      %127 = sbr.rel (0) target = $region65
    $region64: #{tpu_custom_call.1} parent=1 // pred_region
      %128 = dma.done [#allocation12], 2048
    $region65: #{tpu_custom_call.1} parent=1 // pred_fallthru
      _
    // Predicated region
    $region66: #{tpu_custom_call.1} parent=1 // pred_check
      _
    $region67: #{tpu_custom_call.1} parent=1 // pred_check_branch
      %130 = sbr.rel (0) target = $region69
    $region68: #{tpu_custom_call.1} parent=1 // pred_region
      %131 = dma.done [#allocation12], 2048
    $region69: #{tpu_custom_call.1} parent=1 // pred_fallthru
      _
    // Predicated region
    $region70: #{tpu_custom_call.1} parent=1 // pred_check
      _
    $region71: #{tpu_custom_call.1} parent=1 // pred_check_branch
      %133 = sbr.rel (0) target = $region73
    $region72: #{tpu_custom_call.1} parent=1 // pred_region
      %134 = dma.done [#allocation15], 2048
    $region73: #{tpu_custom_call.1} parent=1 // pred_fallthru
      _
    // Predicated region
    $region74: #{tpu_custom_call.1} parent=1 // pred_check
      _
    $region75: #{tpu_custom_call.1} parent=1 // pred_check_branch
      %136 = sbr.rel (0) target = $region77
    $region76: #{tpu_custom_call.1} parent=1 // pred_region
      %137 = dma.done [#allocation15], 1024
    $region77: #{tpu_custom_call.1} parent=1 // pred_fallthru
      _
    %v138 = vld [vmem:[#allocation6] sm:$0xff]
    %v139 = vld [vmem:[#allocation6 + $0x8] sm:$0xff]
    %v140 = vld [vmem:[#allocation6 + $0x10] sm:$0xff]
    %v141 = vld [vmem:[#allocation6 + $0x18] sm:$0xff]
    %v142 = vld [vmem:[#allocation6 + $0x20] sm:$0xff]
    %v143 = vld [vmem:[#allocation6 + $0x28] sm:$0xff]
    %v144 = vld [vmem:[#allocation6 + $0x30] sm:$0xff]
    %v145 = vld [vmem:[#allocation6 + $0x38] sm:$0xff]
    %v146 = vld [vmem:[#allocation8] sm:$0xff]
    %v147 = vld [vmem:[#allocation8 + $0x8] sm:$0xff]
    %v148 = vld [vmem:[#allocation8 + $0x10] sm:$0xff]
    %v149 = vld [vmem:[#allocation8 + $0x18] sm:$0xff]
    %v150 = vld [vmem:[%s2] sm:$0x3]
    %v152 = vlaneseq
    %v153 = vshrl.u32 %v152, 7
    %v154 = vsub.s32 0, %v153
    %v155 = vrot.slane %v150, %v154
    %v156 = vlaneseq
    %v157 = vshrl.u32 %v156, 7
    %v158 = vsub.s32 1, %v157
    %v159 = vrot.slane %v150, %v158
    %vm162 = vcmask 130048
    %v164 = vsel %vm162, %v138, 0
    %v167 = vsel %vm162, %v139, 0
    %v170 = vsel %vm162, %v140, 0
    %v173 = vsel %vm162, %v141, 0
    %v176 = vsel %vm162, %v142, 0
    %v179 = vsel %vm162, %v143, 0
    %v182 = vsel %vm162, %v144, 0
    %v185 = vsel %vm162, %v145, 0
    %187 = vmatprep.subr.mxu0 0.0
    %188 = vmatpush1.msra.mxu0 0.0
    %189 = vmatprep.subr.mxu0 0.0
    %190 = vmatpush1.msra.mxu0 0.0
    %191 = vmatprep.subr.mxu0 0.0
    %192 = vmatpush1.msra.mxu0 0.0
    %193 = vmatprep.subr.mxu0 0.0
    %194 = vmatpush1.msra.mxu0 0.0
    %195 = vmatprep.subr.mxu0 0.0
    %196 = vmatpush1.msra.mxu0 0.0
    %197 = vmatprep.subr.mxu0 0.0
    %198 = vmatpush1.msra.mxu0 0.0
    %199 = vmatprep.subr.mxu0 0.0
    %200 = vmatpush1.msra.mxu0 0.0
    %201 = vmatprep.subr.mxu0 0.0
    %202 = vmatpush1.msra.mxu0 0.0
    %203 = vmatprep.subr.mxu0 0.0
    %204 = vmatpush1.msra.mxu0 0.0
    %205 = vmatprep.subr.mxu0 0.0
    %206 = vmatpush1.msra.mxu0 0.0
    %207 = vmatprep.subr.mxu0 0.0
    %208 = vmatpush1.msra.mxu0 0.0
    %209 = vmatprep.subr.mxu0 0.0
    %210 = vmatpush1.msra.mxu0 0.0
    %211 = vmatprep.subr.mxu0 0.0
    %212 = vmatpush1.msra.mxu0 0.0
    %213 = vmatprep.subr.mxu0 0.0
    %214 = vmatpush1.msra.mxu0 0.0
    %215 = vmatprep.subr.mxu0 %v149
    %216 = vmatpush1.msra.mxu0 %v148
    %217 = vmatprep.subr.mxu0 %v147
    %218 = vmatpush1.msra.mxu0 %v146
    %219 = vmatprep.subr.mxu0 0.0
    %220 = vmatpush2.msra.mxu0 0.0
    %221 = vmatprep.subr.mxu0 0.0
    %222 = vmatpush2.msra.mxu0 0.0
    %223 = vmatprep.subr.mxu0 0.0
    %224 = vmatpush2.msra.mxu0 0.0
    %225 = vmatprep.subr.mxu0 0.0
    %226 = vmatpush2.msra.mxu0 0.0
    %227 = vmatprep.subr.mxu0 0.0
    %228 = vmatpush2.msra.mxu0 0.0
    %229 = vmatprep.subr.mxu0 0.0
    %230 = vmatpush2.msra.mxu0 0.0
    %231 = vmatprep.subr.mxu0 0.0
    %232 = vmatpush2.msra.mxu0 0.0
    %233 = vmatprep.subr.mxu0 0.0
    %234 = vmatpush2.msra.mxu0 0.0
    %235 = vmatprep.subr.mxu0 0.0
    %236 = vmatpush2.msra.mxu0 0.0
    %237 = vmatprep.subr.mxu0 0.0
    %238 = vmatpush2.msra.mxu0 0.0
    %239 = vmatprep.subr.mxu0 0.0
    %240 = vmatpush2.msra.mxu0 0.0
    %241 = vmatprep.subr.mxu0 0.0
    %242 = vmatpush2.msra.mxu0 0.0
    %243 = vmatprep.subr.mxu0 0.0
    %244 = vmatpush2.msra.mxu0 0.0
    %245 = vmatprep.subr.mxu0 0.0
    %246 = vmatpush2.msra.mxu0 0.0
    %247 = vmatprep.subr.mxu0 0.0
    %248 = vmatpush2.msra.mxu0 0.0
    %249 = vmatprep.subr.mxu0 0.0
    %250 = vmatpush2.msra.mxu0 0.0
    %251 = vmatprep.mubr.f32.mxu0 0.0
    %252 = vmatmul.mubr.f32.gmra.mxu0 %v164
    %v253 = vpop.f32.mrf.mxu0
    %v254 = vadd.f32 %v155, %v253
    %v255 = vpop.f32.mrf.mxu0
    %v256 = vadd.f32 %v159, %v255
    %257 = vmatprep.mubr.f32.mxu0 0.0
    %258 = vmatmul.mubr.f32.gmra.mxu0 %v167
    %v259 = vpop.f32.mrf.mxu0
    %v260 = vadd.f32 %v155, %v259
    %v261 = vpop.f32.mrf.mxu0
    %v262 = vadd.f32 %v159, %v261
    %263 = vmatprep.mubr.f32.mxu0 0.0
    %264 = vmatmul.mubr.f32.gmra.mxu0 %v170
    %v265 = vpop.f32.mrf.mxu0
    %v266 = vadd.f32 %v155, %v265
    %v267 = vpop.f32.mrf.mxu0
    %v268 = vadd.f32 %v159, %v267
    %269 = vmatprep.mubr.f32.mxu0 0.0
    %270 = vmatmul.mubr.f32.gmra.mxu0 %v173
    %v271 = vpop.f32.mrf.mxu0
    %v272 = vadd.f32 %v155, %v271
    %v273 = vpop.f32.mrf.mxu0
    %v274 = vadd.f32 %v159, %v273
    %275 = vmatprep.mubr.f32.mxu0 0.0
    %276 = vmatmul.mubr.f32.gmra.mxu0 %v176
    %v277 = vpop.f32.mrf.mxu0
    %v278 = vadd.f32 %v155, %v277
    %v279 = vpop.f32.mrf.mxu0
    %v280 = vadd.f32 %v159, %v279
    %281 = vmatprep.mubr.f32.mxu0 0.0
    %282 = vmatmul.mubr.f32.gmra.mxu0 %v179
    %v283 = vpop.f32.mrf.mxu0
    %v284 = vadd.f32 %v155, %v283
    %v285 = vpop.f32.mrf.mxu0
    %v286 = vadd.f32 %v159, %v285
    %287 = vmatprep.mubr.f32.mxu0 0.0
    %288 = vmatmul.mubr.f32.gmra.mxu0 %v182
    %v289 = vpop.f32.mrf.mxu0
    %v290 = vadd.f32 %v155, %v289
    %v291 = vpop.f32.mrf.mxu0
    %v292 = vadd.f32 %v159, %v291
    %293 = vmatprep.mubr.f32.mxu0 0.0
    %294 = vmatmul.mubr.f32.gmra.mxu0 %v185
    %v295 = vpop.f32.mrf.mxu0
    %v296 = vadd.f32 %v155, %v295
    %v297 = vpop.f32.mrf.mxu0
    %v298 = vadd.f32 %v159, %v297
    %299 = vdwg.mxu0
    %300 = vst [vmem:[#allocation2] sm:$0xff] %v254
    %301 = vst [vmem:[#allocation2 + $0x8] sm:$0xff] %v256
    %302 = vst [vmem:[#allocation2 + $0x10] sm:$0xff] %v260
    %303 = vst [vmem:[#allocation2 + $0x18] sm:$0xff] %v262
    %304 = vst [vmem:[#allocation2 + $0x20] sm:$0xff] %v266
    %305 = vst [vmem:[#allocation2 + $0x28] sm:$0xff] %v268
    %306 = vst [vmem:[#allocation2 + $0x30] sm:$0xff] %v272
    %307 = vst [vmem:[#allocation2 + $0x38] sm:$0xff] %v274
    %308 = vst [vmem:[#allocation2 + $0x40] sm:$0xff] %v278
    %309 = vst [vmem:[#allocation2 + $0x48] sm:$0xff] %v280
    %310 = vst [vmem:[#allocation2 + $0x50] sm:$0xff] %v284
    %311 = vst [vmem:[#allocation2 + $0x58] sm:$0xff] %v286
    %312 = vst [vmem:[#allocation2 + $0x60] sm:$0xff] %v290
    %313 = vst [vmem:[#allocation2 + $0x68] sm:$0xff] %v292
    %314 = vst [vmem:[#allocation2 + $0x70] sm:$0xff] %v296
    %315 = vst [vmem:[#allocation2 + $0x78] sm:$0xff] %v298
    %v316 = vld [vmem:[#allocation10] sm:$0xff]
    %v317 = vld [vmem:[#allocation10 + $0x8] sm:$0xff]
    %v318 = vld [vmem:[#allocation10 + $0x10] sm:$0xff]
    %v319 = vld [vmem:[#allocation10 + $0x18] sm:$0xff]
    %v320 = vld [vmem:[#allocation10 + $0x20] sm:$0xff]
    %v321 = vld [vmem:[#allocation10 + $0x28] sm:$0xff]
    %v322 = vld [vmem:[#allocation10 + $0x30] sm:$0xff]
    %v323 = vld [vmem:[#allocation10 + $0x38] sm:$0xff]
    %v324 = vld [vmem:[#allocation10 + $0x40] sm:$0xff]
    %v325 = vld [vmem:[#allocation10 + $0x48] sm:$0xff]
    %v326 = vld [vmem:[#allocation10 + $0x50] sm:$0xff]
    %v327 = vld [vmem:[#allocation10 + $0x58] sm:$0xff]
    %v328 = vld [vmem:[#allocation10 + $0x60] sm:$0xff]
    %v329 = vld [vmem:[#allocation10 + $0x68] sm:$0xff]
    %v330 = vld [vmem:[#allocation10 + $0x70] sm:$0xff]
    %v331 = vld [vmem:[#allocation10 + $0x78] sm:$0xff]
    %v332 = vld [vmem:[#allocation2] sm:$0xff]
    %v333 = vld [vmem:[#allocation2 + $0x8] sm:$0xff]
    %vm334 = vcmask 523264
    %v336 = vsel %vm334, 0.0, 0
    %338 = vmatprep.subr.mxu0 0.0
    %339 = vmatpush1.msra.mxu0 0.0
    %340 = vmatprep.subr.mxu0 0.0
    %341 = vmatpush1.msra.mxu0 0.0
    %342 = vmatprep.subr.mxu0 0.0
    %343 = vmatpush1.msra.mxu0 0.0
    %344 = vmatprep.subr.mxu0 0.0
    %345 = vmatpush1.msra.mxu0 0.0
    %346 = vmatprep.subr.mxu0 0.0
    %347 = vmatpush1.msra.mxu0 0.0
    %348 = vmatprep.subr.mxu0 0.0
    %349 = vmatpush1.msra.mxu0 0.0
    %350 = vmatprep.subr.mxu0 0.0
    %351 = vmatpush1.msra.mxu0 0.0
    %352 = vmatprep.subr.mxu0 0.0
    %353 = vmatpush1.msra.mxu0 0.0
    %354 = vmatprep.subr.mxu0 %v331
    %355 = vmatpush1.msra.mxu0 %v330
    %356 = vmatprep.subr.mxu0 %v329
    %357 = vmatpush1.msra.mxu0 %v328
    %358 = vmatprep.subr.mxu0 %v327
    %359 = vmatpush1.msra.mxu0 %v326
    %360 = vmatprep.subr.mxu0 %v325
    %361 = vmatpush1.msra.mxu0 %v324
    %362 = vmatprep.subr.mxu0 %v323
    %363 = vmatpush1.msra.mxu0 %v322
    %364 = vmatprep.subr.mxu0 %v321
    %365 = vmatpush1.msra.mxu0 %v320
    %366 = vmatprep.subr.mxu0 %v319
    %367 = vmatpush1.msra.mxu0 %v318
    %368 = vmatprep.subr.mxu0 %v317
    %369 = vmatpush1.msra.mxu0 %v316
    %370 = vmatprep.subr.mxu0 0.0
    %371 = vmatpush2.msra.mxu0 0.0
    %372 = vmatprep.subr.mxu0 0.0
    %373 = vmatpush2.msra.mxu0 0.0
    %374 = vmatprep.subr.mxu0 0.0
    %375 = vmatpush2.msra.mxu0 0.0
    %376 = vmatprep.subr.mxu0 0.0
    %377 = vmatpush2.msra.mxu0 0.0
    %378 = vmatprep.subr.mxu0 0.0
    %379 = vmatpush2.msra.mxu0 0.0
    %380 = vmatprep.subr.mxu0 0.0
    %381 = vmatpush2.msra.mxu0 0.0
    %382 = vmatprep.subr.mxu0 0.0
    %383 = vmatpush2.msra.mxu0 0.0
    %384 = vmatprep.subr.mxu0 0.0
    %385 = vmatpush2.msra.mxu0 0.0
    %386 = vmatprep.subr.mxu0 0.0
    %387 = vmatpush2.msra.mxu0 0.0
    %388 = vmatprep.subr.mxu0 0.0
    %389 = vmatpush2.msra.mxu0 0.0
    %390 = vmatprep.subr.mxu0 0.0
    %391 = vmatpush2.msra.mxu0 0.0
    %392 = vmatprep.subr.mxu0 0.0
    %393 = vmatpush2.msra.mxu0 0.0
    %394 = vmatprep.subr.mxu0 0.0
    %395 = vmatpush2.msra.mxu0 0.0
    %396 = vmatprep.subr.mxu0 0.0
    %397 = vmatpush2.msra.mxu0 0.0
    %398 = vmatprep.subr.mxu0 0.0
    %399 = vmatpush2.msra.mxu0 0.0
    %400 = vmatprep.subr.mxu0 0.0
    %401 = vmatpush2.msra.mxu0 0.0
    %402 = vmatprep.mubr.f32.mxu0 0.0
    %403 = vmatmul.mubr.f32.gmra.mxu0 %v336
    %v404 = vpop.f32.mrf.mxu0
    %v405 = vadd.f32 0.0, %v404
    %v406 = vpop.f32.mrf.mxu0
    %v407 = vadd.f32 0.0, %v406
    %408 = vdwg.mxu0
    %v409 = vadd.f32 %v332, %v405
    %v410 = vadd.f32 %v333, %v407
    %v411 = vxor.u32 %v409, 2147483648
    %v412 = vxor.u32 %v410, 2147483648
    %v413 = vmul.f32 %v411, 1.442695
    %v414 = vpow.pop %v413
    %v415 = vmul.f32 %v412, 1.442695
    %v416 = vpow.pop %v415
    %v417 = vadd.f32 %v414, 1.0
    %v418 = vadd.f32 %v416, 1.0
    %v419 = vrcp.pop %v417
    %v420 = vmul.f32 1.0, %v419
    %v421 = vrcp.pop %v418
    %v422 = vmul.f32 1.0, %v421
    %v423 = vtanh.pop %v410
    %v424 = vmul.f32 %v420, 0.0
    %v425 = vmul.f32 %v420, %v423
    %427 = vrot.lane.b32.xlu0 %v425, 64
    %v428 = vpop.permute.xlu0 %427
    %v430 = vadd.f32 %v424, %v428
    %v431 = vtanh.pop %v430
    %v432 = vmul.f32 %v422, %v431
    %434 = vrot.lane.b32.xlu0 %v432, 64
    %v435 = vpop.permute.xlu0 %434
    %437 = vst.msk [vmem:[#allocation3] sm:$0xff] %vm334, %v435
    %s438 = scalar_lea.vmem [#allocation4], 56
    %439 = vst.msk [vmem:[%s438] sm:$0xff] %vm334, %v435
    %s440 = scalar_lea.vmem [#allocation2], 16
    %v441 = vld [vmem:[%s440] sm:$0xff]
    %v442 = vld [vmem:[%s440 + $0x8] sm:$0xff]
    %v443 = vsel %vm334, %v435, 0
    %445 = vmatprep.subr.mxu0 0.0
    %446 = vmatpush1.msra.mxu0 0.0
    %447 = vmatprep.subr.mxu0 0.0
    %448 = vmatpush1.msra.mxu0 0.0
    %449 = vmatprep.subr.mxu0 0.0
    %450 = vmatpush1.msra.mxu0 0.0
    %451 = vmatprep.subr.mxu0 0.0
    %452 = vmatpush1.msra.mxu0 0.0
    %453 = vmatprep.subr.mxu0 0.0
    %454 = vmatpush1.msra.mxu0 0.0
    %455 = vmatprep.subr.mxu0 0.0
    %456 = vmatpush1.msra.mxu0 0.0
    %457 = vmatprep.subr.mxu0 0.0
    %458 = vmatpush1.msra.mxu0 0.0
    %459 = vmatprep.subr.mxu0 0.0
    %460 = vmatpush1.msra.mxu0 0.0
    %461 = vmatprep.subr.mxu0 %v331
    %462 = vmatpush1.msra.mxu0 %v330
    %463 = vmatprep.subr.mxu0 %v329
    %464 = vmatpush1.msra.mxu0 %v328
    %465 = vmatprep.subr.mxu0 %v327
    %466 = vmatpush1.msra.mxu0 %v326
    %467 = vmatprep.subr.mxu0 %v325
    %468 = vmatpush1.msra.mxu0 %v324
    %469 = vmatprep.subr.mxu0 %v323
    %470 = vmatpush1.msra.mxu0 %v322
    %471 = vmatprep.subr.mxu0 %v321
    %472 = vmatpush1.msra.mxu0 %v320
    %473 = vmatprep.subr.mxu0 %v319
    %474 = vmatpush1.msra.mxu0 %v318
    %475 = vmatprep.subr.mxu0 %v317
    %476 = vmatpush1.msra.mxu0 %v316
    %477 = vmatprep.subr.mxu0 0.0
    %478 = vmatpush2.msra.mxu0 0.0
    %479 = vmatprep.subr.mxu0 0.0
    %480 = vmatpush2.msra.mxu0 0.0
    %481 = vmatprep.subr.mxu0 0.0
    %482 = vmatpush2.msra.mxu0 0.0
    %483 = vmatprep.subr.mxu0 0.0
    %484 = vmatpush2.msra.mxu0 0.0
    %485 = vmatprep.subr.mxu0 0.0
    %486 = vmatpush2.msra.mxu0 0.0
    %487 = vmatprep.subr.mxu0 0.0
    %488 = vmatpush2.msra.mxu0 0.0
    %489 = vmatprep.subr.mxu0 0.0
    %490 = vmatpush2.msra.mxu0 0.0
    %491 = vmatprep.subr.mxu0 0.0
    %492 = vmatpush2.msra.mxu0 0.0
    %493 = vmatprep.subr.mxu0 0.0
    %494 = vmatpush2.msra.mxu0 0.0
    %495 = vmatprep.subr.mxu0 0.0
    %496 = vmatpush2.msra.mxu0 0.0
    %497 = vmatprep.subr.mxu0 0.0
    %498 = vmatpush2.msra.mxu0 0.0
    %499 = vmatprep.subr.mxu0 0.0
    %500 = vmatpush2.msra.mxu0 0.0
    %501 = vmatprep.subr.mxu0 0.0
    %502 = vmatpush2.msra.mxu0 0.0
    %503 = vmatprep.subr.mxu0 0.0
    %504 = vmatpush2.msra.mxu0 0.0
    %505 = vmatprep.subr.mxu0 0.0
    %506 = vmatpush2.msra.mxu0 0.0
    %507 = vmatprep.subr.mxu0 0.0
    %508 = vmatpush2.msra.mxu0 0.0
    %509 = vmatprep.mubr.f32.mxu0 0.0
    %510 = vmatmul.mubr.f32.gmra.mxu0 %v443
    %v511 = vpop.f32.mrf.mxu0
    %v512 = vadd.f32 0.0, %v511
    %v513 = vpop.f32.mrf.mxu0
    %v514 = vadd.f32 0.0, %v513
    %515 = vdwg.mxu0
    %v516 = vadd.f32 %v441, %v512
    %v517 = vadd.f32 %v442, %v514
    %v518 = vxor.u32 %v516, 2147483648
    %v519 = vxor.u32 %v517, 2147483648
    %v520 = vmul.f32 %v518, 1.442695
    %v521 = vpow.pop %v520
    %v522 = vmul.f32 %v519, 1.442695
    %v523 = vpow.pop %v522
    %v524 = vadd.f32 %v521, 1.0
    %v525 = vadd.f32 %v523, 1.0
    %v526 = vrcp.pop %v524
    %v527 = vmul.f32 1.0, %v526
    %v528 = vrcp.pop %v525
    %v529 = vmul.f32 1.0, %v528
    %v530 = vtanh.pop %v517
    %v531 = vmul.f32 %v527, %v430
    %v532 = vmul.f32 %v527, %v530
    %534 = vrot.lane.b32.xlu0 %v532, 64
    %v535 = vpop.permute.xlu0 %534
    %v537 = vadd.f32 %v531, %v535
    %v538 = vtanh.pop %v537
    %v539 = vmul.f32 %v529, %v538
    %541 = vrot.lane.b32.xlu0 %v539, 64
    %v542 = vpop.permute.xlu0 %541
    %s544 = scalar_lea.vmem [#allocation3], 8
    %545 = vst.msk [vmem:[%s544] sm:$0xff] %vm334, %v542
    %s546 = scalar_lea.vmem [#allocation4], 48
    %547 = vst.msk [vmem:[%s546] sm:$0xff] %vm334, %v542
    %s548 = scalar_lea.vmem [#allocation2], 32
    %v549 = vld [vmem:[%s548] sm:$0xff]
    %v550 = vld [vmem:[%s548 + $0x8] sm:$0xff]
    %v551 = vsel %vm334, %v542, 0
    %553 = vmatprep.subr.mxu0 0.0
    %554 = vmatpush1.msra.mxu0 0.0
    %555 = vmatprep.subr.mxu0 0.0
    %556 = vmatpush1.msra.mxu0 0.0
    %557 = vmatprep.subr.mxu0 0.0
    %558 = vmatpush1.msra.mxu0 0.0
    %559 = vmatprep.subr.mxu0 0.0
    %560 = vmatpush1.msra.mxu0 0.0
    %561 = vmatprep.subr.mxu0 0.0
    %562 = vmatpush1.msra.mxu0 0.0
    %563 = vmatprep.subr.mxu0 0.0
    %564 = vmatpush1.msra.mxu0 0.0
    %565 = vmatprep.subr.mxu0 0.0
    %566 = vmatpush1.msra.mxu0 0.0
    %567 = vmatprep.subr.mxu0 0.0
    %568 = vmatpush1.msra.mxu0 0.0
    %569 = vmatprep.subr.mxu0 %v331
    %570 = vmatpush1.msra.mxu0 %v330
    %571 = vmatprep.subr.mxu0 %v329
    %572 = vmatpush1.msra.mxu0 %v328
    %573 = vmatprep.subr.mxu0 %v327
    %574 = vmatpush1.msra.mxu0 %v326
    %575 = vmatprep.subr.mxu0 %v325
    %576 = vmatpush1.msra.mxu0 %v324
    %577 = vmatprep.subr.mxu0 %v323
    %578 = vmatpush1.msra.mxu0 %v322
    %579 = vmatprep.subr.mxu0 %v321
    %580 = vmatpush1.msra.mxu0 %v320
    %581 = vmatprep.subr.mxu0 %v319
    %582 = vmatpush1.msra.mxu0 %v318
    %583 = vmatprep.subr.mxu0 %v317
    %584 = vmatpush1.msra.mxu0 %v316
    %585 = vmatprep.subr.mxu0 0.0
    %586 = vmatpush2.msra.mxu0 0.0
    %587 = vmatprep.subr.mxu0 0.0
    %588 = vmatpush2.msra.mxu0 0.0
    %589 = vmatprep.subr.mxu0 0.0
    %590 = vmatpush2.msra.mxu0 0.0
    %591 = vmatprep.subr.mxu0 0.0
    %592 = vmatpush2.msra.mxu0 0.0
    %593 = vmatprep.subr.mxu0 0.0
    %594 = vmatpush2.msra.mxu0 0.0
    %595 = vmatprep.subr.mxu0 0.0
    %596 = vmatpush2.msra.mxu0 0.0
    %597 = vmatprep.subr.mxu0 0.0
    %598 = vmatpush2.msra.mxu0 0.0
    %599 = vmatprep.subr.mxu0 0.0
    %600 = vmatpush2.msra.mxu0 0.0
    %601 = vmatprep.subr.mxu0 0.0
    %602 = vmatpush2.msra.mxu0 0.0
    %603 = vmatprep.subr.mxu0 0.0
    %604 = vmatpush2.msra.mxu0 0.0
    %605 = vmatprep.subr.mxu0 0.0
    %606 = vmatpush2.msra.mxu0 0.0
    %607 = vmatprep.subr.mxu0 0.0
    %608 = vmatpush2.msra.mxu0 0.0
    %609 = vmatprep.subr.mxu0 0.0
    %610 = vmatpush2.msra.mxu0 0.0
    %611 = vmatprep.subr.mxu0 0.0
    %612 = vmatpush2.msra.mxu0 0.0
    %613 = vmatprep.subr.mxu0 0.0
    %614 = vmatpush2.msra.mxu0 0.0
    %615 = vmatprep.subr.mxu0 0.0
    %616 = vmatpush2.msra.mxu0 0.0
    %617 = vmatprep.mubr.f32.mxu0 0.0
    %618 = vmatmul.mubr.f32.gmra.mxu0 %v551
    %v619 = vpop.f32.mrf.mxu0
    %v620 = vadd.f32 0.0, %v619
    %v621 = vpop.f32.mrf.mxu0
    %v622 = vadd.f32 0.0, %v621
    %623 = vdwg.mxu0
    %v624 = vadd.f32 %v549, %v620
    %v625 = vadd.f32 %v550, %v622
    %v626 = vxor.u32 %v624, 2147483648
    %v627 = vxor.u32 %v625, 2147483648
    %v628 = vmul.f32 %v626, 1.442695
    %v629 = vpow.pop %v628
    %v630 = vmul.f32 %v627, 1.442695
    %v631 = vpow.pop %v630
    %v632 = vadd.f32 %v629, 1.0
    %v633 = vadd.f32 %v631, 1.0
    %v634 = vrcp.pop %v632
    %v635 = vmul.f32 1.0, %v634
    %v636 = vrcp.pop %v633
    %v637 = vmul.f32 1.0, %v636
    %v638 = vtanh.pop %v625
    %v639 = vmul.f32 %v635, %v537
    %v640 = vmul.f32 %v635, %v638
    %642 = vrot.lane.b32.xlu0 %v640, 64
    %v643 = vpop.permute.xlu0 %642
    %v645 = vadd.f32 %v639, %v643
    %v646 = vtanh.pop %v645
    %v647 = vmul.f32 %v637, %v646
    %649 = vrot.lane.b32.xlu0 %v647, 64
    %v650 = vpop.permute.xlu0 %649
    %s652 = scalar_lea.vmem [#allocation3], 16
    %653 = vst.msk [vmem:[%s652] sm:$0xff] %vm334, %v650
    %s654 = scalar_lea.vmem [#allocation4], 40
    %655 = vst.msk [vmem:[%s654] sm:$0xff] %vm334, %v650
    %s656 = scalar_lea.vmem [#allocation2], 48
    %v657 = vld [vmem:[%s656] sm:$0xff]
    %v658 = vld [vmem:[%s656 + $0x8] sm:$0xff]
    %v659 = vsel %vm334, %v650, 0
    %661 = vmatprep.subr.mxu0 0.0
    %662 = vmatpush1.msra.mxu0 0.0
    %663 = vmatprep.subr.mxu0 0.0
    %664 = vmatpush1.msra.mxu0 0.0
    %665 = vmatprep.subr.mxu0 0.0
    %666 = vmatpush1.msra.mxu0 0.0
    %667 = vmatprep.subr.mxu0 0.0
    %668 = vmatpush1.msra.mxu0 0.0
    %669 = vmatprep.subr.mxu0 0.0
    %670 = vmatpush1.msra.mxu0 0.0
    %671 = vmatprep.subr.mxu0 0.0
    %672 = vmatpush1.msra.mxu0 0.0
    %673 = vmatprep.subr.mxu0 0.0
    %674 = vmatpush1.msra.mxu0 0.0
    %675 = vmatprep.subr.mxu0 0.0
    %676 = vmatpush1.msra.mxu0 0.0
    %677 = vmatprep.subr.mxu0 %v331
    %678 = vmatpush1.msra.mxu0 %v330
    %679 = vmatprep.subr.mxu0 %v329
    %680 = vmatpush1.msra.mxu0 %v328
    %681 = vmatprep.subr.mxu0 %v327
    %682 = vmatpush1.msra.mxu0 %v326
    %683 = vmatprep.subr.mxu0 %v325
    %684 = vmatpush1.msra.mxu0 %v324
    %685 = vmatprep.subr.mxu0 %v323
    %686 = vmatpush1.msra.mxu0 %v322
    %687 = vmatprep.subr.mxu0 %v321
    %688 = vmatpush1.msra.mxu0 %v320
    %689 = vmatprep.subr.mxu0 %v319
    %690 = vmatpush1.msra.mxu0 %v318
    %691 = vmatprep.subr.mxu0 %v317
    %692 = vmatpush1.msra.mxu0 %v316
    %693 = vmatprep.subr.mxu0 0.0
    %694 = vmatpush2.msra.mxu0 0.0
    %695 = vmatprep.subr.mxu0 0.0
    %696 = vmatpush2.msra.mxu0 0.0
    %697 = vmatprep.subr.mxu0 0.0
    %698 = vmatpush2.msra.mxu0 0.0
    %699 = vmatprep.subr.mxu0 0.0
    %700 = vmatpush2.msra.mxu0 0.0
    %701 = vmatprep.subr.mxu0 0.0
    %702 = vmatpush2.msra.mxu0 0.0
    %703 = vmatprep.subr.mxu0 0.0
    %704 = vmatpush2.msra.mxu0 0.0
    %705 = vmatprep.subr.mxu0 0.0
    %706 = vmatpush2.msra.mxu0 0.0
    %707 = vmatprep.subr.mxu0 0.0
    %708 = vmatpush2.msra.mxu0 0.0
    %709 = vmatprep.subr.mxu0 0.0
    %710 = vmatpush2.msra.mxu0 0.0
    %711 = vmatprep.subr.mxu0 0.0
    %712 = vmatpush2.msra.mxu0 0.0
    %713 = vmatprep.subr.mxu0 0.0
    %714 = vmatpush2.msra.mxu0 0.0
    %715 = vmatprep.subr.mxu0 0.0
    %716 = vmatpush2.msra.mxu0 0.0
    %717 = vmatprep.subr.mxu0 0.0
    %718 = vmatpush2.msra.mxu0 0.0
    %719 = vmatprep.subr.mxu0 0.0
    %720 = vmatpush2.msra.mxu0 0.0
    %721 = vmatprep.subr.mxu0 0.0
    %722 = vmatpush2.msra.mxu0 0.0
    %723 = vmatprep.subr.mxu0 0.0
    %724 = vmatpush2.msra.mxu0 0.0
    %725 = vmatprep.mubr.f32.mxu0 0.0
    %726 = vmatmul.mubr.f32.gmra.mxu0 %v659
    %v727 = vpop.f32.mrf.mxu0
    %v728 = vadd.f32 0.0, %v727
    %v729 = vpop.f32.mrf.mxu0
    %v730 = vadd.f32 0.0, %v729
    %731 = vdwg.mxu0
    %v732 = vadd.f32 %v657, %v728
    %v733 = vadd.f32 %v658, %v730
    %v734 = vxor.u32 %v732, 2147483648
    %v735 = vxor.u32 %v733, 2147483648
    %v736 = vmul.f32 %v734, 1.442695
    %v737 = vpow.pop %v736
    %v738 = vmul.f32 %v735, 1.442695
    %v739 = vpow.pop %v738
    %v740 = vadd.f32 %v737, 1.0
    %v741 = vadd.f32 %v739, 1.0
    %v742 = vrcp.pop %v740
    %v743 = vmul.f32 1.0, %v742
    %v744 = vrcp.pop %v741
    %v745 = vmul.f32 1.0, %v744
    %v746 = vtanh.pop %v733
    %v747 = vmul.f32 %v743, %v645
    %v748 = vmul.f32 %v743, %v746
    %750 = vrot.lane.b32.xlu0 %v748, 64
    %v751 = vpop.permute.xlu0 %750
    %v753 = vadd.f32 %v747, %v751
    %v754 = vtanh.pop %v753
    %v755 = vmul.f32 %v745, %v754
    %757 = vrot.lane.b32.xlu0 %v755, 64
    %v758 = vpop.permute.xlu0 %757
    %s760 = scalar_lea.vmem [#allocation3], 24
    %761 = vst.msk [vmem:[%s760] sm:$0xff] %vm334, %v758
    %s762 = scalar_lea.vmem [#allocation4], 32
    %763 = vst.msk [vmem:[%s762] sm:$0xff] %vm334, %v758
    %s764 = scalar_lea.vmem [#allocation2], 64
    %v765 = vld [vmem:[%s764] sm:$0xff]
    %v766 = vld [vmem:[%s764 + $0x8] sm:$0xff]
    %v767 = vsel %vm334, %v758, 0
    %769 = vmatprep.subr.mxu0 0.0
    %770 = vmatpush1.msra.mxu0 0.0
    %771 = vmatprep.subr.mxu0 0.0
    %772 = vmatpush1.msra.mxu0 0.0
    %773 = vmatprep.subr.mxu0 0.0
    %774 = vmatpush1.msra.mxu0 0.0
    %775 = vmatprep.subr.mxu0 0.0
    %776 = vmatpush1.msra.mxu0 0.0
    %777 = vmatprep.subr.mxu0 0.0
    %778 = vmatpush1.msra.mxu0 0.0
    %779 = vmatprep.subr.mxu0 0.0
    %780 = vmatpush1.msra.mxu0 0.0
    %781 = vmatprep.subr.mxu0 0.0
    %782 = vmatpush1.msra.mxu0 0.0
    %783 = vmatprep.subr.mxu0 0.0
    %784 = vmatpush1.msra.mxu0 0.0
    %785 = vmatprep.subr.mxu0 %v331
    %786 = vmatpush1.msra.mxu0 %v330
    %787 = vmatprep.subr.mxu0 %v329
    %788 = vmatpush1.msra.mxu0 %v328
    %789 = vmatprep.subr.mxu0 %v327
    %790 = vmatpush1.msra.mxu0 %v326
    %791 = vmatprep.subr.mxu0 %v325
    %792 = vmatpush1.msra.mxu0 %v324
    %793 = vmatprep.subr.mxu0 %v323
    %794 = vmatpush1.msra.mxu0 %v322
    %795 = vmatprep.subr.mxu0 %v321
    %796 = vmatpush1.msra.mxu0 %v320
    %797 = vmatprep.subr.mxu0 %v319
    %798 = vmatpush1.msra.mxu0 %v318
    %799 = vmatprep.subr.mxu0 %v317
    %800 = vmatpush1.msra.mxu0 %v316
    %801 = vmatprep.subr.mxu0 0.0
    %802 = vmatpush2.msra.mxu0 0.0
    %803 = vmatprep.subr.mxu0 0.0
    %804 = vmatpush2.msra.mxu0 0.0
    %805 = vmatprep.subr.mxu0 0.0
    %806 = vmatpush2.msra.mxu0 0.0
    %807 = vmatprep.subr.mxu0 0.0
    %808 = vmatpush2.msra.mxu0 0.0
    %809 = vmatprep.subr.mxu0 0.0
    %810 = vmatpush2.msra.mxu0 0.0
    %811 = vmatprep.subr.mxu0 0.0
    %812 = vmatpush2.msra.mxu0 0.0
    %813 = vmatprep.subr.mxu0 0.0
    %814 = vmatpush2.msra.mxu0 0.0
    %815 = vmatprep.subr.mxu0 0.0
    %816 = vmatpush2.msra.mxu0 0.0
    %817 = vmatprep.subr.mxu0 0.0
    %818 = vmatpush2.msra.mxu0 0.0
    %819 = vmatprep.subr.mxu0 0.0
    %820 = vmatpush2.msra.mxu0 0.0
    %821 = vmatprep.subr.mxu0 0.0
    %822 = vmatpush2.msra.mxu0 0.0
    %823 = vmatprep.subr.mxu0 0.0
    %824 = vmatpush2.msra.mxu0 0.0
    %825 = vmatprep.subr.mxu0 0.0
    %826 = vmatpush2.msra.mxu0 0.0
    %827 = vmatprep.subr.mxu0 0.0
    %828 = vmatpush2.msra.mxu0 0.0
    %829 = vmatprep.subr.mxu0 0.0
    %830 = vmatpush2.msra.mxu0 0.0
    %831 = vmatprep.subr.mxu0 0.0
    %832 = vmatpush2.msra.mxu0 0.0
    %833 = vmatprep.mubr.f32.mxu0 0.0
    %834 = vmatmul.mubr.f32.gmra.mxu0 %v767
    %v835 = vpop.f32.mrf.mxu0
    %v836 = vadd.f32 0.0, %v835
    %v837 = vpop.f32.mrf.mxu0
    %v838 = vadd.f32 0.0, %v837
    %839 = vdwg.mxu0
    %v840 = vadd.f32 %v765, %v836
    %v841 = vadd.f32 %v766, %v838
    %v842 = vxor.u32 %v840, 2147483648
    %v843 = vxor.u32 %v841, 2147483648
    %v844 = vmul.f32 %v842, 1.442695
    %v845 = vpow.pop %v844
    %v846 = vmul.f32 %v843, 1.442695
    %v847 = vpow.pop %v846
    %v848 = vadd.f32 %v845, 1.0
    %v849 = vadd.f32 %v847, 1.0
    %v850 = vrcp.pop %v848
    %v851 = vmul.f32 1.0, %v850
    %v852 = vrcp.pop %v849
    %v853 = vmul.f32 1.0, %v852
    %v854 = vtanh.pop %v841
    %v855 = vmul.f32 %v851, %v753
    %v856 = vmul.f32 %v851, %v854
    %858 = vrot.lane.b32.xlu0 %v856, 64
    %v859 = vpop.permute.xlu0 %858
    %v861 = vadd.f32 %v855, %v859
    %v862 = vtanh.pop %v861
    %v863 = vmul.f32 %v853, %v862
    %865 = vrot.lane.b32.xlu0 %v863, 64
    %v866 = vpop.permute.xlu0 %865
    %s868 = scalar_lea.vmem [#allocation3], 32
    %869 = vst.msk [vmem:[%s868] sm:$0xff] %vm334, %v866
    %s870 = scalar_lea.vmem [#allocation4], 24
    %871 = vst.msk [vmem:[%s870] sm:$0xff] %vm334, %v866
    %s872 = scalar_lea.vmem [#allocation2], 80
    %v873 = vld [vmem:[%s872] sm:$0xff]
    %v874 = vld [vmem:[%s872 + $0x8] sm:$0xff]
    %v875 = vsel %vm334, %v866, 0
    %877 = vmatprep.subr.mxu0 0.0
    %878 = vmatpush1.msra.mxu0 0.0
    %879 = vmatprep.subr.mxu0 0.0
    %880 = vmatpush1.msra.mxu0 0.0
    %881 = vmatprep.subr.mxu0 0.0
    %882 = vmatpush1.msra.mxu0 0.0
    %883 = vmatprep.subr.mxu0 0.0
    %884 = vmatpush1.msra.mxu0 0.0
    %885 = vmatprep.subr.mxu0 0.0
    %886 = vmatpush1.msra.mxu0 0.0
    %887 = vmatprep.subr.mxu0 0.0
    %888 = vmatpush1.msra.mxu0 0.0
    %889 = vmatprep.subr.mxu0 0.0
    %890 = vmatpush1.msra.mxu0 0.0
    %891 = vmatprep.subr.mxu0 0.0
    %892 = vmatpush1.msra.mxu0 0.0
    %893 = vmatprep.subr.mxu0 %v331
    %894 = vmatpush1.msra.mxu0 %v330
    %895 = vmatprep.subr.mxu0 %v329
    %896 = vmatpush1.msra.mxu0 %v328
    %897 = vmatprep.subr.mxu0 %v327
    %898 = vmatpush1.msra.mxu0 %v326
    %899 = vmatprep.subr.mxu0 %v325
    %900 = vmatpush1.msra.mxu0 %v324
    %901 = vmatprep.subr.mxu0 %v323
    %902 = vmatpush1.msra.mxu0 %v322
    %903 = vmatprep.subr.mxu0 %v321
    %904 = vmatpush1.msra.mxu0 %v320
    %905 = vmatprep.subr.mxu0 %v319
    %906 = vmatpush1.msra.mxu0 %v318
    %907 = vmatprep.subr.mxu0 %v317
    %908 = vmatpush1.msra.mxu0 %v316
    %909 = vmatprep.subr.mxu0 0.0
    %910 = vmatpush2.msra.mxu0 0.0
    %911 = vmatprep.subr.mxu0 0.0
    %912 = vmatpush2.msra.mxu0 0.0
    %913 = vmatprep.subr.mxu0 0.0
    %914 = vmatpush2.msra.mxu0 0.0
    %915 = vmatprep.subr.mxu0 0.0
    %916 = vmatpush2.msra.mxu0 0.0
    %917 = vmatprep.subr.mxu0 0.0
    %918 = vmatpush2.msra.mxu0 0.0
    %919 = vmatprep.subr.mxu0 0.0
    %920 = vmatpush2.msra.mxu0 0.0
    %921 = vmatprep.subr.mxu0 0.0
    %922 = vmatpush2.msra.mxu0 0.0
    %923 = vmatprep.subr.mxu0 0.0
    %924 = vmatpush2.msra.mxu0 0.0
    %925 = vmatprep.subr.mxu0 0.0
    %926 = vmatpush2.msra.mxu0 0.0
    %927 = vmatprep.subr.mxu0 0.0
    %928 = vmatpush2.msra.mxu0 0.0
    %929 = vmatprep.subr.mxu0 0.0
    %930 = vmatpush2.msra.mxu0 0.0
    %931 = vmatprep.subr.mxu0 0.0
    %932 = vmatpush2.msra.mxu0 0.0
    %933 = vmatprep.subr.mxu0 0.0
    %934 = vmatpush2.msra.mxu0 0.0
    %935 = vmatprep.subr.mxu0 0.0
    %936 = vmatpush2.msra.mxu0 0.0
    %937 = vmatprep.subr.mxu0 0.0
    %938 = vmatpush2.msra.mxu0 0.0
    %939 = vmatprep.subr.mxu0 0.0
    %940 = vmatpush2.msra.mxu0 0.0
    %941 = vmatprep.mubr.f32.mxu0 0.0
    %942 = vmatmul.mubr.f32.gmra.mxu0 %v875
    %v943 = vpop.f32.mrf.mxu0
    %v944 = vadd.f32 0.0, %v943
    %v945 = vpop.f32.mrf.mxu0
    %v946 = vadd.f32 0.0, %v945
    %947 = vdwg.mxu0
    %v948 = vadd.f32 %v873, %v944
    %v949 = vadd.f32 %v874, %v946
    %v950 = vxor.u32 %v948, 2147483648
    %v951 = vxor.u32 %v949, 2147483648
    %v952 = vmul.f32 %v950, 1.442695
    %v953 = vpow.pop %v952
    %v954 = vmul.f32 %v951, 1.442695
    %v955 = vpow.pop %v954
    %v956 = vadd.f32 %v953, 1.0
    %v957 = vadd.f32 %v955, 1.0
    %v958 = vrcp.pop %v956
    %v959 = vmul.f32 1.0, %v958
    %v960 = vrcp.pop %v957
    %v961 = vmul.f32 1.0, %v960
    %v962 = vtanh.pop %v949
    %v963 = vmul.f32 %v959, %v861
    %v964 = vmul.f32 %v959, %v962
    %966 = vrot.lane.b32.xlu0 %v964, 64
    %v967 = vpop.permute.xlu0 %966
    %v969 = vadd.f32 %v963, %v967
    %v970 = vtanh.pop %v969
    %v971 = vmul.f32 %v961, %v970
    %973 = vrot.lane.b32.xlu0 %v971, 64
    %v974 = vpop.permute.xlu0 %973
    %s976 = scalar_lea.vmem [#allocation3], 40
    %977 = vst.msk [vmem:[%s976] sm:$0xff] %vm334, %v974
    %s978 = scalar_lea.vmem [#allocation4], 16
    %979 = vst.msk [vmem:[%s978] sm:$0xff] %vm334, %v974
    %s980 = scalar_lea.vmem [#allocation2], 96
    %v981 = vld [vmem:[%s980] sm:$0xff]
    %v982 = vld [vmem:[%s980 + $0x8] sm:$0xff]
    %v983 = vsel %vm334, %v974, 0
    %985 = vmatprep.subr.mxu0 0.0
    %986 = vmatpush1.msra.mxu0 0.0
    %987 = vmatprep.subr.mxu0 0.0
    %988 = vmatpush1.msra.mxu0 0.0
    %989 = vmatprep.subr.mxu0 0.0
    %990 = vmatpush1.msra.mxu0 0.0
    %991 = vmatprep.subr.mxu0 0.0
    %992 = vmatpush1.msra.mxu0 0.0
    %993 = vmatprep.subr.mxu0 0.0
    %994 = vmatpush1.msra.mxu0 0.0
    %995 = vmatprep.subr.mxu0 0.0
    %996 = vmatpush1.msra.mxu0 0.0
    %997 = vmatprep.subr.mxu0 0.0
    %998 = vmatpush1.msra.mxu0 0.0
    %999 = vmatprep.subr.mxu0 0.0
    %1000 = vmatpush1.msra.mxu0 0.0
    %1001 = vmatprep.subr.mxu0 %v331
    %1002 = vmatpush1.msra.mxu0 %v330
    %1003 = vmatprep.subr.mxu0 %v329
    %1004 = vmatpush1.msra.mxu0 %v328
    %1005 = vmatprep.subr.mxu0 %v327
    %1006 = vmatpush1.msra.mxu0 %v326
    %1007 = vmatprep.subr.mxu0 %v325
    %1008 = vmatpush1.msra.mxu0 %v324
    %1009 = vmatprep.subr.mxu0 %v323
    %1010 = vmatpush1.msra.mxu0 %v322
    %1011 = vmatprep.subr.mxu0 %v321
    %1012 = vmatpush1.msra.mxu0 %v320
    %1013 = vmatprep.subr.mxu0 %v319
    %1014 = vmatpush1.msra.mxu0 %v318
    %1015 = vmatprep.subr.mxu0 %v317
    %1016 = vmatpush1.msra.mxu0 %v316
    %1017 = vmatprep.subr.mxu0 0.0
    %1018 = vmatpush2.msra.mxu0 0.0
    %1019 = vmatprep.subr.mxu0 0.0
    %1020 = vmatpush2.msra.mxu0 0.0
    %1021 = vmatprep.subr.mxu0 0.0
    %1022 = vmatpush2.msra.mxu0 0.0
    %1023 = vmatprep.subr.mxu0 0.0
    %1024 = vmatpush2.msra.mxu0 0.0
    %1025 = vmatprep.subr.mxu0 0.0
    %1026 = vmatpush2.msra.mxu0 0.0
    %1027 = vmatprep.subr.mxu0 0.0
    %1028 = vmatpush2.msra.mxu0 0.0
    %1029 = vmatprep.subr.mxu0 0.0
    %1030 = vmatpush2.msra.mxu0 0.0
    %1031 = vmatprep.subr.mxu0 0.0
    %1032 = vmatpush2.msra.mxu0 0.0
    %1033 = vmatprep.subr.mxu0 0.0
    %1034 = vmatpush2.msra.mxu0 0.0
    %1035 = vmatprep.subr.mxu0 0.0
    %1036 = vmatpush2.msra.mxu0 0.0
    %1037 = vmatprep.subr.mxu0 0.0
    %1038 = vmatpush2.msra.mxu0 0.0
    %1039 = vmatprep.subr.mxu0 0.0
    %1040 = vmatpush2.msra.mxu0 0.0
    %1041 = vmatprep.subr.mxu0 0.0
    %1042 = vmatpush2.msra.mxu0 0.0
    %1043 = vmatprep.subr.mxu0 0.0
    %1044 = vmatpush2.msra.mxu0 0.0
    %1045 = vmatprep.subr.mxu0 0.0
    %1046 = vmatpush2.msra.mxu0 0.0
    %1047 = vmatprep.subr.mxu0 0.0
    %1048 = vmatpush2.msra.mxu0 0.0
    %1049 = vmatprep.mubr.f32.mxu0 0.0
    %1050 = vmatmul.mubr.f32.gmra.mxu0 %v983
    %v1051 = vpop.f32.mrf.mxu0
    %v1052 = vadd.f32 0.0, %v1051
    %v1053 = vpop.f32.mrf.mxu0
    %v1054 = vadd.f32 0.0, %v1053
    %1055 = vdwg.mxu0
    %v1056 = vadd.f32 %v981, %v1052
    %v1057 = vadd.f32 %v982, %v1054
    %v1058 = vxor.u32 %v1056, 2147483648
    %v1059 = vxor.u32 %v1057, 2147483648
    %v1060 = vmul.f32 %v1058, 1.442695
    %v1061 = vpow.pop %v1060
    %v1062 = vmul.f32 %v1059, 1.442695
    %v1063 = vpow.pop %v1062
    %v1064 = vadd.f32 %v1061, 1.0
    %v1065 = vadd.f32 %v1063, 1.0
    %v1066 = vrcp.pop %v1064
    %v1067 = vmul.f32 1.0, %v1066
    %v1068 = vrcp.pop %v1065
    %v1069 = vmul.f32 1.0, %v1068
    %v1070 = vtanh.pop %v1057
    %v1071 = vmul.f32 %v1067, %v969
    %v1072 = vmul.f32 %v1067, %v1070
    %1074 = vrot.lane.b32.xlu0 %v1072, 64
    %v1075 = vpop.permute.xlu0 %1074
    %v1077 = vadd.f32 %v1071, %v1075
    %v1078 = vtanh.pop %v1077
    %v1079 = vmul.f32 %v1069, %v1078
    %1081 = vrot.lane.b32.xlu0 %v1079, 64
    %v1082 = vpop.permute.xlu0 %1081
    %s1084 = scalar_lea.vmem [#allocation3], 48
    %1085 = vst.msk [vmem:[%s1084] sm:$0xff] %vm334, %v1082
    %s1086 = scalar_lea.vmem [#allocation4], 8
    %1087 = vst.msk [vmem:[%s1086] sm:$0xff] %vm334, %v1082
    %s1088 = scalar_lea.vmem [#allocation2], 112
    %v1089 = vld [vmem:[%s1088] sm:$0xff]
    %v1090 = vld [vmem:[%s1088 + $0x8] sm:$0xff]
    %v1091 = vsel %vm334, %v1082, 0
    %1093 = vmatprep.subr.mxu0 0.0
    %1094 = vmatpush1.msra.mxu0 0.0
    %1095 = vmatprep.subr.mxu0 0.0
    %1096 = vmatpush1.msra.mxu0 0.0
    %1097 = vmatprep.subr.mxu0 0.0
    %1098 = vmatpush1.msra.mxu0 0.0
    %1099 = vmatprep.subr.mxu0 0.0
    %1100 = vmatpush1.msra.mxu0 0.0
    %1101 = vmatprep.subr.mxu0 0.0
    %1102 = vmatpush1.msra.mxu0 0.0
    %1103 = vmatprep.subr.mxu0 0.0
    %1104 = vmatpush1.msra.mxu0 0.0
    %1105 = vmatprep.subr.mxu0 0.0
    %1106 = vmatpush1.msra.mxu0 0.0
    %1107 = vmatprep.subr.mxu0 0.0
    %1108 = vmatpush1.msra.mxu0 0.0
    %1109 = vmatprep.subr.mxu0 %v331
    %1110 = vmatpush1.msra.mxu0 %v330
    %1111 = vmatprep.subr.mxu0 %v329
    %1112 = vmatpush1.msra.mxu0 %v328
    %1113 = vmatprep.subr.mxu0 %v327
    %1114 = vmatpush1.msra.mxu0 %v326
    %1115 = vmatprep.subr.mxu0 %v325
    %1116 = vmatpush1.msra.mxu0 %v324
    %1117 = vmatprep.subr.mxu0 %v323
    %1118 = vmatpush1.msra.mxu0 %v322
    %1119 = vmatprep.subr.mxu0 %v321
    %1120 = vmatpush1.msra.mxu0 %v320
    %1121 = vmatprep.subr.mxu0 %v319
    %1122 = vmatpush1.msra.mxu0 %v318
    %1123 = vmatprep.subr.mxu0 %v317
    %1124 = vmatpush1.msra.mxu0 %v316
    %1125 = vmatprep.subr.mxu0 0.0
    %1126 = vmatpush2.msra.mxu0 0.0
    %1127 = vmatprep.subr.mxu0 0.0
    %1128 = vmatpush2.msra.mxu0 0.0
    %1129 = vmatprep.subr.mxu0 0.0
    %1130 = vmatpush2.msra.mxu0 0.0
    %1131 = vmatprep.subr.mxu0 0.0
    %1132 = vmatpush2.msra.mxu0 0.0
    %1133 = vmatprep.subr.mxu0 0.0
    %1134 = vmatpush2.msra.mxu0 0.0
    %1135 = vmatprep.subr.mxu0 0.0
    %1136 = vmatpush2.msra.mxu0 0.0
    %1137 = vmatprep.subr.mxu0 0.0
    %1138 = vmatpush2.msra.mxu0 0.0
    %1139 = vmatprep.subr.mxu0 0.0
    %1140 = vmatpush2.msra.mxu0 0.0
    %1141 = vmatprep.subr.mxu0 0.0
    %1142 = vmatpush2.msra.mxu0 0.0
    %1143 = vmatprep.subr.mxu0 0.0
    %1144 = vmatpush2.msra.mxu0 0.0
    %1145 = vmatprep.subr.mxu0 0.0
    %1146 = vmatpush2.msra.mxu0 0.0
    %1147 = vmatprep.subr.mxu0 0.0
    %1148 = vmatpush2.msra.mxu0 0.0
    %1149 = vmatprep.subr.mxu0 0.0
    %1150 = vmatpush2.msra.mxu0 0.0
    %1151 = vmatprep.subr.mxu0 0.0
    %1152 = vmatpush2.msra.mxu0 0.0
    %1153 = vmatprep.subr.mxu0 0.0
    %1154 = vmatpush2.msra.mxu0 0.0
    %1155 = vmatprep.subr.mxu0 0.0
    %1156 = vmatpush2.msra.mxu0 0.0
    %1157 = vmatprep.mubr.f32.mxu0 0.0
    %1158 = vmatmul.mubr.f32.gmra.mxu0 %v1091
    %v1159 = vpop.f32.mrf.mxu0
    %v1160 = vadd.f32 0.0, %v1159
    %v1161 = vpop.f32.mrf.mxu0
    %v1162 = vadd.f32 0.0, %v1161
    %1163 = vdwg.mxu0
    %v1164 = vadd.f32 %v1089, %v1160
    %v1165 = vadd.f32 %v1090, %v1162
    %v1166 = vxor.u32 %v1164, 2147483648
    %v1167 = vxor.u32 %v1165, 2147483648
    %v1168 = vmul.f32 %v1166, 1.442695
    %v1169 = vpow.pop %v1168
    %v1170 = vmul.f32 %v1167, 1.442695
    %v1171 = vpow.pop %v1170
    %v1172 = vadd.f32 %v1169, 1.0
    %v1173 = vadd.f32 %v1171, 1.0
    %v1174 = vrcp.pop %v1172
    %v1175 = vmul.f32 1.0, %v1174
    %v1176 = vrcp.pop %v1173
    %v1177 = vmul.f32 1.0, %v1176
    %v1178 = vtanh.pop %v1165
    %v1179 = vmul.f32 %v1175, %v1077
    %v1180 = vmul.f32 %v1175, %v1178
    %1182 = vrot.lane.b32.xlu0 %v1180, 64
    %v1183 = vpop.permute.xlu0 %1182
    %v1185 = vadd.f32 %v1179, %v1183
    %v1186 = vtanh.pop %v1185
    %v1187 = vmul.f32 %v1177, %v1186
    %1189 = vrot.lane.b32.xlu0 %v1187, 64
    %v1190 = vpop.permute.xlu0 %1189
    %s1192 = scalar_lea.vmem [#allocation3], 56
    %1193 = vst.msk [vmem:[%s1192] sm:$0xff] %vm334, %v1190
    %1194 = vst.msk [vmem:[#allocation4] sm:$0xff] %vm334, %v1190
    %v1195 = vld [vmem:[#allocation3] sm:$0xff]
    %v1196 = vld [vmem:[#allocation3 + $0x8] sm:$0xff]
    %v1197 = vld [vmem:[#allocation3 + $0x10] sm:$0xff]
    %v1198 = vld [vmem:[#allocation3 + $0x18] sm:$0xff]
    %v1199 = vld [vmem:[#allocation3 + $0x20] sm:$0xff]
    %v1200 = vld [vmem:[#allocation3 + $0x28] sm:$0xff]
    %v1201 = vld [vmem:[#allocation3 + $0x30] sm:$0xff]
    %v1202 = vld [vmem:[#allocation3 + $0x38] sm:$0xff]
    %v1203 = vld [vmem:[#allocation11] sm:$0xff]
    %v1204 = vld [vmem:[#allocation11 + $0x8] sm:$0xff]
    %v1205 = vld [vmem:[#allocation11 + $0x10] sm:$0xff]
    %v1206 = vld [vmem:[#allocation11 + $0x18] sm:$0xff]
    %v1207 = vld [vmem:[#allocation11 + $0x20] sm:$0xff]
    %v1208 = vld [vmem:[#allocation11 + $0x28] sm:$0xff]
    %v1209 = vld [vmem:[#allocation11 + $0x30] sm:$0xff]
    %v1210 = vld [vmem:[#allocation11 + $0x38] sm:$0xff]
    %v1211 = vld [vmem:[#allocation11 + $0x40] sm:$0xff]
    %v1212 = vld [vmem:[#allocation11 + $0x48] sm:$0xff]
    %v1213 = vld [vmem:[#allocation11 + $0x50] sm:$0xff]
    %v1214 = vld [vmem:[#allocation11 + $0x58] sm:$0xff]
    %v1215 = vld [vmem:[#allocation11 + $0x60] sm:$0xff]
    %v1216 = vld [vmem:[#allocation11 + $0x68] sm:$0xff]
    %v1217 = vld [vmem:[#allocation11 + $0x70] sm:$0xff]
    %v1218 = vld [vmem:[#allocation11 + $0x78] sm:$0xff]
    %v1219 = vld [vmem:[#allocation4] sm:$0xff]
    %v1220 = vld [vmem:[#allocation4 + $0x8] sm:$0xff]
    %v1221 = vld [vmem:[#allocation4 + $0x10] sm:$0xff]
    %v1222 = vld [vmem:[#allocation4 + $0x18] sm:$0xff]
    %v1223 = vld [vmem:[#allocation4 + $0x20] sm:$0xff]
    %v1224 = vld [vmem:[#allocation4 + $0x28] sm:$0xff]
    %v1225 = vld [vmem:[#allocation4 + $0x30] sm:$0xff]
    %v1226 = vld [vmem:[#allocation4 + $0x38] sm:$0xff]
    %v1227 = vld [vmem:[#allocation13] sm:$0xff]
    %v1228 = vld [vmem:[#allocation13 + $0x8] sm:$0xff]
    %v1229 = vld [vmem:[#allocation13 + $0x10] sm:$0xff]
    %v1230 = vld [vmem:[#allocation13 + $0x18] sm:$0xff]
    %v1231 = vld [vmem:[#allocation13 + $0x20] sm:$0xff]
    %v1232 = vld [vmem:[#allocation13 + $0x28] sm:$0xff]
    %v1233 = vld [vmem:[#allocation13 + $0x30] sm:$0xff]
    %v1234 = vld [vmem:[#allocation13 + $0x38] sm:$0xff]
    %v1235 = vld [vmem:[#allocation13 + $0x40] sm:$0xff]
    %v1236 = vld [vmem:[#allocation13 + $0x48] sm:$0xff]
    %v1237 = vld [vmem:[#allocation13 + $0x50] sm:$0xff]
    %v1238 = vld [vmem:[#allocation13 + $0x58] sm:$0xff]
    %v1239 = vld [vmem:[#allocation13 + $0x60] sm:$0xff]
    %v1240 = vld [vmem:[#allocation13 + $0x68] sm:$0xff]
    %v1241 = vld [vmem:[#allocation13 + $0x70] sm:$0xff]
    %v1242 = vld [vmem:[#allocation13 + $0x78] sm:$0xff]
    %v1244 = vsel %vm334, %v1219, 0
    %v1247 = vsel %vm334, %v1220, 0
    %v1250 = vsel %vm334, %v1221, 0
    %v1253 = vsel %vm334, %v1222, 0
    %v1256 = vsel %vm334, %v1223, 0
    %v1259 = vsel %vm334, %v1224, 0
    %v1262 = vsel %vm334, %v1225, 0
    %v1265 = vsel %vm334, %v1226, 0
    %1267 = vmatprep.subr.mxu0 0.0
    %1268 = vmatpush1.msra.mxu0 0.0
    %1269 = vmatprep.subr.mxu0 0.0
    %1270 = vmatpush1.msra.mxu0 0.0
    %1271 = vmatprep.subr.mxu0 0.0
    %1272 = vmatpush1.msra.mxu0 0.0
    %1273 = vmatprep.subr.mxu0 0.0
    %1274 = vmatpush1.msra.mxu0 0.0
    %1275 = vmatprep.subr.mxu0 0.0
    %1276 = vmatpush1.msra.mxu0 0.0
    %1277 = vmatprep.subr.mxu0 0.0
    %1278 = vmatpush1.msra.mxu0 0.0
    %1279 = vmatprep.subr.mxu0 0.0
    %1280 = vmatpush1.msra.mxu0 0.0
    %1281 = vmatprep.subr.mxu0 0.0
    %1282 = vmatpush1.msra.mxu0 0.0
    %1283 = vmatprep.subr.mxu0 %v1242
    %1284 = vmatpush1.msra.mxu0 %v1241
    %1285 = vmatprep.subr.mxu0 %v1240
    %1286 = vmatpush1.msra.mxu0 %v1239
    %1287 = vmatprep.subr.mxu0 %v1238
    %1288 = vmatpush1.msra.mxu0 %v1237
    %1289 = vmatprep.subr.mxu0 %v1236
    %1290 = vmatpush1.msra.mxu0 %v1235
    %1291 = vmatprep.subr.mxu0 %v1234
    %1292 = vmatpush1.msra.mxu0 %v1233
    %1293 = vmatprep.subr.mxu0 %v1232
    %1294 = vmatpush1.msra.mxu0 %v1231
    %1295 = vmatprep.subr.mxu0 %v1230
    %1296 = vmatpush1.msra.mxu0 %v1229
    %1297 = vmatprep.subr.mxu0 %v1228
    %1298 = vmatpush1.msra.mxu0 %v1227
    %1299 = vmatprep.subr.mxu0 0.0
    %1300 = vmatpush2.msra.mxu0 0.0
    %1301 = vmatprep.subr.mxu0 0.0
    %1302 = vmatpush2.msra.mxu0 0.0
    %1303 = vmatprep.subr.mxu0 0.0
    %1304 = vmatpush2.msra.mxu0 0.0
    %1305 = vmatprep.subr.mxu0 0.0
    %1306 = vmatpush2.msra.mxu0 0.0
    %1307 = vmatprep.subr.mxu0 0.0
    %1308 = vmatpush2.msra.mxu0 0.0
    %1309 = vmatprep.subr.mxu0 0.0
    %1310 = vmatpush2.msra.mxu0 0.0
    %1311 = vmatprep.subr.mxu0 0.0
    %1312 = vmatpush2.msra.mxu0 0.0
    %1313 = vmatprep.subr.mxu0 0.0
    %1314 = vmatpush2.msra.mxu0 0.0
    %1315 = vmatprep.subr.mxu0 0.0
    %1316 = vmatpush2.msra.mxu0 0.0
    %1317 = vmatprep.subr.mxu0 0.0
    %1318 = vmatpush2.msra.mxu0 0.0
    %1319 = vmatprep.subr.mxu0 0.0
    %1320 = vmatpush2.msra.mxu0 0.0
    %1321 = vmatprep.subr.mxu0 0.0
    %1322 = vmatpush2.msra.mxu0 0.0
    %1323 = vmatprep.subr.mxu0 0.0
    %1324 = vmatpush2.msra.mxu0 0.0
    %1325 = vmatprep.subr.mxu0 0.0
    %1326 = vmatpush2.msra.mxu0 0.0
    %1327 = vmatprep.subr.mxu0 0.0
    %1328 = vmatpush2.msra.mxu0 0.0
    %1329 = vmatprep.subr.mxu0 0.0
    %1330 = vmatpush2.msra.mxu0 0.0
    %1331 = vmatprep.mubr.f32.mxu0 0.0
    %1332 = vmatmul.mubr.f32.gmra.mxu0 %v1244
    %v1333 = vpop.f32.mrf.mxu0
    %v1334 = vadd.f32 0.0, %v1333
    %v1335 = vpop.f32.mrf.mxu0
    %v1336 = vadd.f32 0.0, %v1335
    %1337 = vmatprep.mubr.f32.mxu0 0.0
    %1338 = vmatmul.mubr.f32.gmra.mxu0 %v1247
    %v1339 = vpop.f32.mrf.mxu0
    %v1340 = vadd.f32 0.0, %v1339
    %v1341 = vpop.f32.mrf.mxu0
    %v1342 = vadd.f32 0.0, %v1341
    %1343 = vmatprep.mubr.f32.mxu0 0.0
    %1344 = vmatmul.mubr.f32.gmra.mxu0 %v1250
    %v1345 = vpop.f32.mrf.mxu0
    %v1346 = vadd.f32 0.0, %v1345
    %v1347 = vpop.f32.mrf.mxu0
    %v1348 = vadd.f32 0.0, %v1347
    %1349 = vmatprep.mubr.f32.mxu0 0.0
    %1350 = vmatmul.mubr.f32.gmra.mxu0 %v1253
    %v1351 = vpop.f32.mrf.mxu0
    %v1352 = vadd.f32 0.0, %v1351
    %v1353 = vpop.f32.mrf.mxu0
    %v1354 = vadd.f32 0.0, %v1353
    %1355 = vmatprep.mubr.f32.mxu0 0.0
    %1356 = vmatmul.mubr.f32.gmra.mxu0 %v1256
    %v1357 = vpop.f32.mrf.mxu0
    %v1358 = vadd.f32 0.0, %v1357
    %v1359 = vpop.f32.mrf.mxu0
    %v1360 = vadd.f32 0.0, %v1359
    %1361 = vmatprep.mubr.f32.mxu0 0.0
    %1362 = vmatmul.mubr.f32.gmra.mxu0 %v1259
    %v1363 = vpop.f32.mrf.mxu0
    %v1364 = vadd.f32 0.0, %v1363
    %v1365 = vpop.f32.mrf.mxu0
    %v1366 = vadd.f32 0.0, %v1365
    %1367 = vmatprep.mubr.f32.mxu0 0.0
    %1368 = vmatmul.mubr.f32.gmra.mxu0 %v1262
    %v1369 = vpop.f32.mrf.mxu0
    %v1370 = vadd.f32 0.0, %v1369
    %v1371 = vpop.f32.mrf.mxu0
    %v1372 = vadd.f32 0.0, %v1371
    %1373 = vmatprep.mubr.f32.mxu0 0.0
    %1374 = vmatmul.mubr.f32.gmra.mxu0 %v1265
    %v1375 = vpop.f32.mrf.mxu0
    %v1376 = vadd.f32 0.0, %v1375
    %v1377 = vpop.f32.mrf.mxu0
    %v1378 = vadd.f32 0.0, %v1377
    %1379 = vdwg.mxu0
    %v1381 = vsel %vm334, %v1195, 0
    %v1384 = vsel %vm334, %v1196, 0
    %v1387 = vsel %vm334, %v1197, 0
    %v1390 = vsel %vm334, %v1198, 0
    %v1393 = vsel %vm334, %v1199, 0
    %v1396 = vsel %vm334, %v1200, 0
    %v1399 = vsel %vm334, %v1201, 0
    %v1402 = vsel %vm334, %v1202, 0
    %1404 = vmatprep.subr.mxu0 0.0
    %1405 = vmatpush1.msra.mxu0 0.0
    %1406 = vmatprep.subr.mxu0 0.0
    %1407 = vmatpush1.msra.mxu0 0.0
    %1408 = vmatprep.subr.mxu0 0.0
    %1409 = vmatpush1.msra.mxu0 0.0
    %1410 = vmatprep.subr.mxu0 0.0
    %1411 = vmatpush1.msra.mxu0 0.0
    %1412 = vmatprep.subr.mxu0 0.0
    %1413 = vmatpush1.msra.mxu0 0.0
    %1414 = vmatprep.subr.mxu0 0.0
    %1415 = vmatpush1.msra.mxu0 0.0
    %1416 = vmatprep.subr.mxu0 0.0
    %1417 = vmatpush1.msra.mxu0 0.0
    %1418 = vmatprep.subr.mxu0 0.0
    %1419 = vmatpush1.msra.mxu0 0.0
    %1420 = vmatprep.subr.mxu0 %v1218
    %1421 = vmatpush1.msra.mxu0 %v1217
    %1422 = vmatprep.subr.mxu0 %v1216
    %1423 = vmatpush1.msra.mxu0 %v1215
    %1424 = vmatprep.subr.mxu0 %v1214
    %1425 = vmatpush1.msra.mxu0 %v1213
    %1426 = vmatprep.subr.mxu0 %v1212
    %1427 = vmatpush1.msra.mxu0 %v1211
    %1428 = vmatprep.subr.mxu0 %v1210
    %1429 = vmatpush1.msra.mxu0 %v1209
    %1430 = vmatprep.subr.mxu0 %v1208
    %1431 = vmatpush1.msra.mxu0 %v1207
    %1432 = vmatprep.subr.mxu0 %v1206
    %1433 = vmatpush1.msra.mxu0 %v1205
    %1434 = vmatprep.subr.mxu0 %v1204
    %1435 = vmatpush1.msra.mxu0 %v1203
    %1436 = vmatprep.subr.mxu0 0.0
    %1437 = vmatpush2.msra.mxu0 0.0
    %1438 = vmatprep.subr.mxu0 0.0
    %1439 = vmatpush2.msra.mxu0 0.0
    %1440 = vmatprep.subr.mxu0 0.0
    %1441 = vmatpush2.msra.mxu0 0.0
    %1442 = vmatprep.subr.mxu0 0.0
    %1443 = vmatpush2.msra.mxu0 0.0
    %1444 = vmatprep.subr.mxu0 0.0
    %1445 = vmatpush2.msra.mxu0 0.0
    %1446 = vmatprep.subr.mxu0 0.0
    %1447 = vmatpush2.msra.mxu0 0.0
    %1448 = vmatprep.subr.mxu0 0.0
    %1449 = vmatpush2.msra.mxu0 0.0
    %1450 = vmatprep.subr.mxu0 0.0
    %1451 = vmatpush2.msra.mxu0 0.0
    %1452 = vmatprep.subr.mxu0 0.0
    %1453 = vmatpush2.msra.mxu0 0.0
    %1454 = vmatprep.subr.mxu0 0.0
    %1455 = vmatpush2.msra.mxu0 0.0
    %1456 = vmatprep.subr.mxu0 0.0
    %1457 = vmatpush2.msra.mxu0 0.0
    %1458 = vmatprep.subr.mxu0 0.0
    %1459 = vmatpush2.msra.mxu0 0.0
    %1460 = vmatprep.subr.mxu0 0.0
    %1461 = vmatpush2.msra.mxu0 0.0
    %1462 = vmatprep.subr.mxu0 0.0
    %1463 = vmatpush2.msra.mxu0 0.0
    %1464 = vmatprep.subr.mxu0 0.0
    %1465 = vmatpush2.msra.mxu0 0.0
    %1466 = vmatprep.subr.mxu0 0.0
    %1467 = vmatpush2.msra.mxu0 0.0
    %1468 = vmatprep.mubr.f32.mxu0 0.0
    %1469 = vmatmul.mubr.f32.gmra.mxu0 %v1381
    %v1470 = vpop.f32.mrf.mxu0
    %v1471 = vadd.f32 %v1334, %v1470
    %v1472 = vpop.f32.mrf.mxu0
    %v1473 = vadd.f32 %v1336, %v1472
    %1474 = vmatprep.mubr.f32.mxu0 0.0
    %1475 = vmatmul.mubr.f32.gmra.mxu0 %v1384
    %v1476 = vpop.f32.mrf.mxu0
    %v1477 = vadd.f32 %v1340, %v1476
    %v1478 = vpop.f32.mrf.mxu0
    %v1479 = vadd.f32 %v1342, %v1478
    %1480 = vmatprep.mubr.f32.mxu0 0.0
    %1481 = vmatmul.mubr.f32.gmra.mxu0 %v1387
    %v1482 = vpop.f32.mrf.mxu0
    %v1483 = vadd.f32 %v1346, %v1482
    %v1484 = vpop.f32.mrf.mxu0
    %v1485 = vadd.f32 %v1348, %v1484
    %1486 = vmatprep.mubr.f32.mxu0 0.0
    %1487 = vmatmul.mubr.f32.gmra.mxu0 %v1390
    %v1488 = vpop.f32.mrf.mxu0
    %v1489 = vadd.f32 %v1352, %v1488
    %v1490 = vpop.f32.mrf.mxu0
    %v1491 = vadd.f32 %v1354, %v1490
    %1492 = vmatprep.mubr.f32.mxu0 0.0
    %1493 = vmatmul.mubr.f32.gmra.mxu0 %v1393
    %v1494 = vpop.f32.mrf.mxu0
    %v1495 = vadd.f32 %v1358, %v1494
    %v1496 = vpop.f32.mrf.mxu0
    %v1497 = vadd.f32 %v1360, %v1496
    %1498 = vmatprep.mubr.f32.mxu0 0.0
    %1499 = vmatmul.mubr.f32.gmra.mxu0 %v1396
    %v1500 = vpop.f32.mrf.mxu0
    %v1501 = vadd.f32 %v1364, %v1500
    %v1502 = vpop.f32.mrf.mxu0
    %v1503 = vadd.f32 %v1366, %v1502
    %1504 = vmatprep.mubr.f32.mxu0 0.0
    %1505 = vmatmul.mubr.f32.gmra.mxu0 %v1399
    %v1506 = vpop.f32.mrf.mxu0
    %v1507 = vadd.f32 %v1370, %v1506
    %v1508 = vpop.f32.mrf.mxu0
    %v1509 = vadd.f32 %v1372, %v1508
    %1510 = vmatprep.mubr.f32.mxu0 0.0
    %1511 = vmatmul.mubr.f32.gmra.mxu0 %v1402
    %v1512 = vpop.f32.mrf.mxu0
    %v1513 = vadd.f32 %v1376, %v1512
    %v1514 = vpop.f32.mrf.mxu0
    %v1515 = vadd.f32 %v1378, %v1514
    %1516 = vdwg.mxu0
    %v1517 = vld [vmem:[%s6] sm:$0x3]
    %v1519 = vlaneseq
    %v1520 = vshrl.u32 %v1519, 7
    %v1521 = vsub.s32 0, %v1520
    %v1522 = vrot.slane %v1517, %v1521
    %v1523 = vlaneseq
    %v1524 = vshrl.u32 %v1523, 7
    %v1525 = vsub.s32 1, %v1524
    %v1526 = vrot.slane %v1517, %v1525
    %v1529 = vadd.f32 %v1471, %v1522
    %v1530 = vadd.f32 %v1473, %v1526
    %v1531 = vadd.f32 %v1477, %v1522
    %v1532 = vadd.f32 %v1479, %v1526
    %v1533 = vadd.f32 %v1483, %v1522
    %v1534 = vadd.f32 %v1485, %v1526
    %v1535 = vadd.f32 %v1489, %v1522
    %v1536 = vadd.f32 %v1491, %v1526
    %v1537 = vadd.f32 %v1495, %v1522
    %v1538 = vadd.f32 %v1497, %v1526
    %v1539 = vadd.f32 %v1501, %v1522
    %v1540 = vadd.f32 %v1503, %v1526
    %v1541 = vadd.f32 %v1507, %v1522
    %v1542 = vadd.f32 %v1509, %v1526
    %v1543 = vadd.f32 %v1513, %v1522
    %v1544 = vadd.f32 %v1515, %v1526
    %1545 = vst [vmem:[#allocation2] sm:$0xff] %v1529
    %1546 = vst [vmem:[#allocation2 + $0x8] sm:$0xff] %v1530
    %1547 = vst [vmem:[#allocation2 + $0x10] sm:$0xff] %v1531
    %1548 = vst [vmem:[#allocation2 + $0x18] sm:$0xff] %v1532
    %1549 = vst [vmem:[#allocation2 + $0x20] sm:$0xff] %v1533
    %1550 = vst [vmem:[#allocation2 + $0x28] sm:$0xff] %v1534
    %1551 = vst [vmem:[#allocation2 + $0x30] sm:$0xff] %v1535
    %1552 = vst [vmem:[#allocation2 + $0x38] sm:$0xff] %v1536
    %1553 = vst [vmem:[#allocation2 + $0x40] sm:$0xff] %v1537
    %1554 = vst [vmem:[#allocation2 + $0x48] sm:$0xff] %v1538
    %1555 = vst [vmem:[#allocation2 + $0x50] sm:$0xff] %v1539
    %1556 = vst [vmem:[#allocation2 + $0x58] sm:$0xff] %v1540
    %1557 = vst [vmem:[#allocation2 + $0x60] sm:$0xff] %v1541
    %1558 = vst [vmem:[#allocation2 + $0x68] sm:$0xff] %v1542
    %1559 = vst [vmem:[#allocation2 + $0x70] sm:$0xff] %v1543
    %1560 = vst [vmem:[#allocation2 + $0x78] sm:$0xff] %v1544
    %v1561 = vld [vmem:[#allocation14] sm:$0xff]
    %v1562 = vld [vmem:[#allocation14 + $0x8] sm:$0xff]
    %v1563 = vld [vmem:[#allocation14 + $0x10] sm:$0xff]
    %v1564 = vld [vmem:[#allocation14 + $0x18] sm:$0xff]
    %v1565 = vld [vmem:[#allocation14 + $0x20] sm:$0xff]
    %v1566 = vld [vmem:[#allocation14 + $0x28] sm:$0xff]
    %v1567 = vld [vmem:[#allocation14 + $0x30] sm:$0xff]
    %v1568 = vld [vmem:[#allocation14 + $0x38] sm:$0xff]
    %v1569 = vld [vmem:[#allocation14 + $0x40] sm:$0xff]
    %v1570 = vld [vmem:[#allocation14 + $0x48] sm:$0xff]
    %v1571 = vld [vmem:[#allocation14 + $0x50] sm:$0xff]
    %v1572 = vld [vmem:[#allocation14 + $0x58] sm:$0xff]
    %v1573 = vld [vmem:[#allocation14 + $0x60] sm:$0xff]
    %v1574 = vld [vmem:[#allocation14 + $0x68] sm:$0xff]
    %v1575 = vld [vmem:[#allocation14 + $0x70] sm:$0xff]
    %v1576 = vld [vmem:[#allocation14 + $0x78] sm:$0xff]
    %v1577 = vld [vmem:[#allocation2] sm:$0xff]
    %v1578 = vld [vmem:[#allocation2 + $0x8] sm:$0xff]
    %1579 = vmatprep.subr.mxu0 0.0
    %1580 = vmatpush1.msra.mxu0 0.0
    %1581 = vmatprep.subr.mxu0 0.0
    %1582 = vmatpush1.msra.mxu0 0.0
    %1583 = vmatprep.subr.mxu0 0.0
    %1584 = vmatpush1.msra.mxu0 0.0
    %1585 = vmatprep.subr.mxu0 0.0
    %1586 = vmatpush1.msra.mxu0 0.0
    %1587 = vmatprep.subr.mxu0 0.0
    %1588 = vmatpush1.msra.mxu0 0.0
    %1589 = vmatprep.subr.mxu0 0.0
    %1590 = vmatpush1.msra.mxu0 0.0
    %1591 = vmatprep.subr.mxu0 0.0
    %1592 = vmatpush1.msra.mxu0 0.0
    %1593 = vmatprep.subr.mxu0 0.0
    %1594 = vmatpush1.msra.mxu0 0.0
    %1595 = vmatprep.subr.mxu0 %v1576
    %1596 = vmatpush1.msra.mxu0 %v1575
    %1597 = vmatprep.subr.mxu0 %v1574
    %1598 = vmatpush1.msra.mxu0 %v1573
    %1599 = vmatprep.subr.mxu0 %v1572
    %1600 = vmatpush1.msra.mxu0 %v1571
    %1601 = vmatprep.subr.mxu0 %v1570
    %1602 = vmatpush1.msra.mxu0 %v1569
    %1603 = vmatprep.subr.mxu0 %v1568
    %1604 = vmatpush1.msra.mxu0 %v1567
    %1605 = vmatprep.subr.mxu0 %v1566
    %1606 = vmatpush1.msra.mxu0 %v1565
    %1607 = vmatprep.subr.mxu0 %v1564
    %1608 = vmatpush1.msra.mxu0 %v1563
    %1609 = vmatprep.subr.mxu0 %v1562
    %1610 = vmatpush1.msra.mxu0 %v1561
    %1611 = vmatprep.subr.mxu0 0.0
    %1612 = vmatpush2.msra.mxu0 0.0
    %1613 = vmatprep.subr.mxu0 0.0
    %1614 = vmatpush2.msra.mxu0 0.0
    %1615 = vmatprep.subr.mxu0 0.0
    %1616 = vmatpush2.msra.mxu0 0.0
    %1617 = vmatprep.subr.mxu0 0.0
    %1618 = vmatpush2.msra.mxu0 0.0
    %1619 = vmatprep.subr.mxu0 0.0
    %1620 = vmatpush2.msra.mxu0 0.0
    %1621 = vmatprep.subr.mxu0 0.0
    %1622 = vmatpush2.msra.mxu0 0.0
    %1623 = vmatprep.subr.mxu0 0.0
    %1624 = vmatpush2.msra.mxu0 0.0
    %1625 = vmatprep.subr.mxu0 0.0
    %1626 = vmatpush2.msra.mxu0 0.0
    %1627 = vmatprep.subr.mxu0 0.0
    %1628 = vmatpush2.msra.mxu0 0.0
    %1629 = vmatprep.subr.mxu0 0.0
    %1630 = vmatpush2.msra.mxu0 0.0
    %1631 = vmatprep.subr.mxu0 0.0
    %1632 = vmatpush2.msra.mxu0 0.0
    %1633 = vmatprep.subr.mxu0 0.0
    %1634 = vmatpush2.msra.mxu0 0.0
    %1635 = vmatprep.subr.mxu0 0.0
    %1636 = vmatpush2.msra.mxu0 0.0
    %1637 = vmatprep.subr.mxu0 0.0
    %1638 = vmatpush2.msra.mxu0 0.0
    %1639 = vmatprep.subr.mxu0 0.0
    %1640 = vmatpush2.msra.mxu0 0.0
    %1641 = vmatprep.subr.mxu0 0.0
    %1642 = vmatpush2.msra.mxu0 0.0
    %1643 = vmatprep.mubr.f32.mxu0 0.0
    %1644 = vmatmul.mubr.f32.gmra.mxu0 %v336
    %v1645 = vpop.f32.mrf.mxu0
    %v1646 = vadd.f32 0.0, %v1645
    %v1647 = vpop.f32.mrf.mxu0
    %v1648 = vadd.f32 0.0, %v1647
    %1649 = vdwg.mxu0
    %v1650 = vadd.f32 %v1577, %v1646
    %v1651 = vadd.f32 %v1578, %v1648
    %v1652 = vxor.u32 %v1650, 2147483648
    %v1653 = vxor.u32 %v1651, 2147483648
    %v1654 = vmul.f32 %v1652, 1.442695
    %v1655 = vpow.pop %v1654
    %v1656 = vmul.f32 %v1653, 1.442695
    %v1657 = vpow.pop %v1656
    %v1658 = vadd.f32 %v1655, 1.0
    %v1659 = vadd.f32 %v1657, 1.0
    %v1660 = vrcp.pop %v1658
    %v1661 = vmul.f32 1.0, %v1660
    %v1662 = vrcp.pop %v1659
    %v1663 = vmul.f32 1.0, %v1662
    %v1664 = vtanh.pop %v1651
    %v1665 = vmul.f32 %v1661, 0.0
    %v1666 = vmul.f32 %v1661, %v1664
    %1668 = vrot.lane.b32.xlu0 %v1666, 64
    %v1669 = vpop.permute.xlu0 %1668
    %v1671 = vadd.f32 %v1665, %v1669
    %v1672 = vtanh.pop %v1671
    %v1673 = vmul.f32 %v1663, %v1672
    %v1674 = vld [vmem:[%s440] sm:$0xff]
    %v1675 = vld [vmem:[%s440 + $0x8] sm:$0xff]
    %1677 = vrot.lane.b32.xlu0 %v1673, 64
    %v1678 = vpop.permute.xlu0 %1677
    %v1679 = vsel %vm334, %v1678, 0
    %1681 = vmatprep.subr.mxu0 0.0
    %1682 = vmatpush1.msra.mxu0 0.0
    %1683 = vmatprep.subr.mxu0 0.0
    %1684 = vmatpush1.msra.mxu0 0.0
    %1685 = vmatprep.subr.mxu0 0.0
    %1686 = vmatpush1.msra.mxu0 0.0
    %1687 = vmatprep.subr.mxu0 0.0
    %1688 = vmatpush1.msra.mxu0 0.0
    %1689 = vmatprep.subr.mxu0 0.0
    %1690 = vmatpush1.msra.mxu0 0.0
    %1691 = vmatprep.subr.mxu0 0.0
    %1692 = vmatpush1.msra.mxu0 0.0
    %1693 = vmatprep.subr.mxu0 0.0
    %1694 = vmatpush1.msra.mxu0 0.0
    %1695 = vmatprep.subr.mxu0 0.0
    %1696 = vmatpush1.msra.mxu0 0.0
    %1697 = vmatprep.subr.mxu0 %v1576
    %1698 = vmatpush1.msra.mxu0 %v1575
    %1699 = vmatprep.subr.mxu0 %v1574
    %1700 = vmatpush1.msra.mxu0 %v1573
    %1701 = vmatprep.subr.mxu0 %v1572
    %1702 = vmatpush1.msra.mxu0 %v1571
    %1703 = vmatprep.subr.mxu0 %v1570
    %1704 = vmatpush1.msra.mxu0 %v1569
    %1705 = vmatprep.subr.mxu0 %v1568
    %1706 = vmatpush1.msra.mxu0 %v1567
    %1707 = vmatprep.subr.mxu0 %v1566
    %1708 = vmatpush1.msra.mxu0 %v1565
    %1709 = vmatprep.subr.mxu0 %v1564
    %1710 = vmatpush1.msra.mxu0 %v1563
    %1711 = vmatprep.subr.mxu0 %v1562
    %1712 = vmatpush1.msra.mxu0 %v1561
    %1713 = vmatprep.subr.mxu0 0.0
    %1714 = vmatpush2.msra.mxu0 0.0
    %1715 = vmatprep.subr.mxu0 0.0
    %1716 = vmatpush2.msra.mxu0 0.0
    %1717 = vmatprep.subr.mxu0 0.0
    %1718 = vmatpush2.msra.mxu0 0.0
    %1719 = vmatprep.subr.mxu0 0.0
    %1720 = vmatpush2.msra.mxu0 0.0
    %1721 = vmatprep.subr.mxu0 0.0
    %1722 = vmatpush2.msra.mxu0 0.0
    %1723 = vmatprep.subr.mxu0 0.0
    %1724 = vmatpush2.msra.mxu0 0.0
    %1725 = vmatprep.subr.mxu0 0.0
    %1726 = vmatpush2.msra.mxu0 0.0
    %1727 = vmatprep.subr.mxu0 0.0
    %1728 = vmatpush2.msra.mxu0 0.0
    %1729 = vmatprep.subr.mxu0 0.0
    %1730 = vmatpush2.msra.mxu0 0.0
    %1731 = vmatprep.subr.mxu0 0.0
    %1732 = vmatpush2.msra.mxu0 0.0
    %1733 = vmatprep.subr.mxu0 0.0
    %1734 = vmatpush2.msra.mxu0 0.0
    %1735 = vmatprep.subr.mxu0 0.0
    %1736 = vmatpush2.msra.mxu0 0.0
    %1737 = vmatprep.subr.mxu0 0.0
    %1738 = vmatpush2.msra.mxu0 0.0
    %1739 = vmatprep.subr.mxu0 0.0
    %1740 = vmatpush2.msra.mxu0 0.0
    %1741 = vmatprep.subr.mxu0 0.0
    %1742 = vmatpush2.msra.mxu0 0.0
    %1743 = vmatprep.subr.mxu0 0.0
    %1744 = vmatpush2.msra.mxu0 0.0
    %1745 = vmatprep.mubr.f32.mxu0 0.0
    %1746 = vmatmul.mubr.f32.gmra.mxu0 %v1679
    %v1747 = vpop.f32.mrf.mxu0
    %v1748 = vadd.f32 0.0, %v1747
    %v1749 = vpop.f32.mrf.mxu0
    %v1750 = vadd.f32 0.0, %v1749
    %1751 = vdwg.mxu0
    %v1752 = vadd.f32 %v1674, %v1748
    %v1753 = vadd.f32 %v1675, %v1750
    %v1754 = vxor.u32 %v1752, 2147483648
    %v1755 = vxor.u32 %v1753, 2147483648
    %v1756 = vmul.f32 %v1754, 1.442695
    %v1757 = vpow.pop %v1756
    %v1758 = vmul.f32 %v1755, 1.442695
    %v1759 = vpow.pop %v1758
    %v1760 = vadd.f32 %v1757, 1.0
    %v1761 = vadd.f32 %v1759, 1.0
    %v1762 = vrcp.pop %v1760
    %v1763 = vmul.f32 1.0, %v1762
    %v1764 = vrcp.pop %v1761
    %v1765 = vmul.f32 1.0, %v1764
    %v1766 = vtanh.pop %v1753
    %v1767 = vmul.f32 %v1763, %v1671
    %v1768 = vmul.f32 %v1763, %v1766
    %1770 = vrot.lane.b32.xlu0 %v1768, 64
    %v1771 = vpop.permute.xlu0 %1770
    %v1773 = vadd.f32 %v1767, %v1771
    %v1774 = vtanh.pop %v1773
    %v1775 = vmul.f32 %v1765, %v1774
    %v1776 = vld [vmem:[%s548] sm:$0xff]
    %v1777 = vld [vmem:[%s548 + $0x8] sm:$0xff]
    %1779 = vrot.lane.b32.xlu0 %v1775, 64
    %v1780 = vpop.permute.xlu0 %1779
    %v1781 = vsel %vm334, %v1780, 0
    %1783 = vmatprep.subr.mxu0 0.0
    %1784 = vmatpush1.msra.mxu0 0.0
    %1785 = vmatprep.subr.mxu0 0.0
    %1786 = vmatpush1.msra.mxu0 0.0
    %1787 = vmatprep.subr.mxu0 0.0
    %1788 = vmatpush1.msra.mxu0 0.0
    %1789 = vmatprep.subr.mxu0 0.0
    %1790 = vmatpush1.msra.mxu0 0.0
    %1791 = vmatprep.subr.mxu0 0.0
    %1792 = vmatpush1.msra.mxu0 0.0
    %1793 = vmatprep.subr.mxu0 0.0
    %1794 = vmatpush1.msra.mxu0 0.0
    %1795 = vmatprep.subr.mxu0 0.0
    %1796 = vmatpush1.msra.mxu0 0.0
    %1797 = vmatprep.subr.mxu0 0.0
    %1798 = vmatpush1.msra.mxu0 0.0
    %1799 = vmatprep.subr.mxu0 %v1576
    %1800 = vmatpush1.msra.mxu0 %v1575
    %1801 = vmatprep.subr.mxu0 %v1574
    %1802 = vmatpush1.msra.mxu0 %v1573
    %1803 = vmatprep.subr.mxu0 %v1572
    %1804 = vmatpush1.msra.mxu0 %v1571
    %1805 = vmatprep.subr.mxu0 %v1570
    %1806 = vmatpush1.msra.mxu0 %v1569
    %1807 = vmatprep.subr.mxu0 %v1568
    %1808 = vmatpush1.msra.mxu0 %v1567
    %1809 = vmatprep.subr.mxu0 %v1566
    %1810 = vmatpush1.msra.mxu0 %v1565
    %1811 = vmatprep.subr.mxu0 %v1564
    %1812 = vmatpush1.msra.mxu0 %v1563
    %1813 = vmatprep.subr.mxu0 %v1562
    %1814 = vmatpush1.msra.mxu0 %v1561
    %1815 = vmatprep.subr.mxu0 0.0
    %1816 = vmatpush2.msra.mxu0 0.0
    %1817 = vmatprep.subr.mxu0 0.0
    %1818 = vmatpush2.msra.mxu0 0.0
    %1819 = vmatprep.subr.mxu0 0.0
    %1820 = vmatpush2.msra.mxu0 0.0
    %1821 = vmatprep.subr.mxu0 0.0
    %1822 = vmatpush2.msra.mxu0 0.0
    %1823 = vmatprep.subr.mxu0 0.0
    %1824 = vmatpush2.msra.mxu0 0.0
    %1825 = vmatprep.subr.mxu0 0.0
    %1826 = vmatpush2.msra.mxu0 0.0
    %1827 = vmatprep.subr.mxu0 0.0
    %1828 = vmatpush2.msra.mxu0 0.0
    %1829 = vmatprep.subr.mxu0 0.0
    %1830 = vmatpush2.msra.mxu0 0.0
    %1831 = vmatprep.subr.mxu0 0.0
    %1832 = vmatpush2.msra.mxu0 0.0
    %1833 = vmatprep.subr.mxu0 0.0
    %1834 = vmatpush2.msra.mxu0 0.0
    %1835 = vmatprep.subr.mxu0 0.0
    %1836 = vmatpush2.msra.mxu0 0.0
    %1837 = vmatprep.subr.mxu0 0.0
    %1838 = vmatpush2.msra.mxu0 0.0
    %1839 = vmatprep.subr.mxu0 0.0
    %1840 = vmatpush2.msra.mxu0 0.0
    %1841 = vmatprep.subr.mxu0 0.0
    %1842 = vmatpush2.msra.mxu0 0.0
    %1843 = vmatprep.subr.mxu0 0.0
    %1844 = vmatpush2.msra.mxu0 0.0
    %1845 = vmatprep.subr.mxu0 0.0
    %1846 = vmatpush2.msra.mxu0 0.0
    %1847 = vmatprep.mubr.f32.mxu0 0.0
    %1848 = vmatmul.mubr.f32.gmra.mxu0 %v1781
    %v1849 = vpop.f32.mrf.mxu0
    %v1850 = vadd.f32 0.0, %v1849
    %v1851 = vpop.f32.mrf.mxu0
    %v1852 = vadd.f32 0.0, %v1851
    %1853 = vdwg.mxu0
    %v1854 = vadd.f32 %v1776, %v1850
    %v1855 = vadd.f32 %v1777, %v1852
    %v1856 = vxor.u32 %v1854, 2147483648
    %v1857 = vxor.u32 %v1855, 2147483648
    %v1858 = vmul.f32 %v1856, 1.442695
    %v1859 = vpow.pop %v1858
    %v1860 = vmul.f32 %v1857, 1.442695
    %v1861 = vpow.pop %v1860
    %v1862 = vadd.f32 %v1859, 1.0
    %v1863 = vadd.f32 %v1861, 1.0
    %v1864 = vrcp.pop %v1862
    %v1865 = vmul.f32 1.0, %v1864
    %v1866 = vrcp.pop %v1863
    %v1867 = vmul.f32 1.0, %v1866
    %v1868 = vtanh.pop %v1855
    %v1869 = vmul.f32 %v1865, %v1773
    %v1870 = vmul.f32 %v1865, %v1868
    %1872 = vrot.lane.b32.xlu0 %v1870, 64
    %v1873 = vpop.permute.xlu0 %1872
    %v1875 = vadd.f32 %v1869, %v1873
    %v1876 = vtanh.pop %v1875
    %v1877 = vmul.f32 %v1867, %v1876
    %v1878 = vld [vmem:[%s656] sm:$0xff]
    %v1879 = vld [vmem:[%s656 + $0x8] sm:$0xff]
    %1881 = vrot.lane.b32.xlu0 %v1877, 64
    %v1882 = vpop.permute.xlu0 %1881
    %v1883 = vsel %vm334, %v1882, 0
    %1885 = vmatprep.subr.mxu0 0.0
    %1886 = vmatpush1.msra.mxu0 0.0
    %1887 = vmatprep.subr.mxu0 0.0
    %1888 = vmatpush1.msra.mxu0 0.0
    %1889 = vmatprep.subr.mxu0 0.0
    %1890 = vmatpush1.msra.mxu0 0.0
    %1891 = vmatprep.subr.mxu0 0.0
    %1892 = vmatpush1.msra.mxu0 0.0
    %1893 = vmatprep.subr.mxu0 0.0
    %1894 = vmatpush1.msra.mxu0 0.0
    %1895 = vmatprep.subr.mxu0 0.0
    %1896 = vmatpush1.msra.mxu0 0.0
    %1897 = vmatprep.subr.mxu0 0.0
    %1898 = vmatpush1.msra.mxu0 0.0
    %1899 = vmatprep.subr.mxu0 0.0
    %1900 = vmatpush1.msra.mxu0 0.0
    %1901 = vmatprep.subr.mxu0 %v1576
    %1902 = vmatpush1.msra.mxu0 %v1575
    %1903 = vmatprep.subr.mxu0 %v1574
    %1904 = vmatpush1.msra.mxu0 %v1573
    %1905 = vmatprep.subr.mxu0 %v1572
    %1906 = vmatpush1.msra.mxu0 %v1571
    %1907 = vmatprep.subr.mxu0 %v1570
    %1908 = vmatpush1.msra.mxu0 %v1569
    %1909 = vmatprep.subr.mxu0 %v1568
    %1910 = vmatpush1.msra.mxu0 %v1567
    %1911 = vmatprep.subr.mxu0 %v1566
    %1912 = vmatpush1.msra.mxu0 %v1565
    %1913 = vmatprep.subr.mxu0 %v1564
    %1914 = vmatpush1.msra.mxu0 %v1563
    %1915 = vmatprep.subr.mxu0 %v1562
    %1916 = vmatpush1.msra.mxu0 %v1561
    %1917 = vmatprep.subr.mxu0 0.0
    %1918 = vmatpush2.msra.mxu0 0.0
    %1919 = vmatprep.subr.mxu0 0.0
    %1920 = vmatpush2.msra.mxu0 0.0
    %1921 = vmatprep.subr.mxu0 0.0
    %1922 = vmatpush2.msra.mxu0 0.0
    %1923 = vmatprep.subr.mxu0 0.0
    %1924 = vmatpush2.msra.mxu0 0.0
    %1925 = vmatprep.subr.mxu0 0.0
    %1926 = vmatpush2.msra.mxu0 0.0
    %1927 = vmatprep.subr.mxu0 0.0
    %1928 = vmatpush2.msra.mxu0 0.0
    %1929 = vmatprep.subr.mxu0 0.0
    %1930 = vmatpush2.msra.mxu0 0.0
    %1931 = vmatprep.subr.mxu0 0.0
    %1932 = vmatpush2.msra.mxu0 0.0
    %1933 = vmatprep.subr.mxu0 0.0
    %1934 = vmatpush2.msra.mxu0 0.0
    %1935 = vmatprep.subr.mxu0 0.0
    %1936 = vmatpush2.msra.mxu0 0.0
    %1937 = vmatprep.subr.mxu0 0.0
    %1938 = vmatpush2.msra.mxu0 0.0
    %1939 = vmatprep.subr.mxu0 0.0
    %1940 = vmatpush2.msra.mxu0 0.0
    %1941 = vmatprep.subr.mxu0 0.0
    %1942 = vmatpush2.msra.mxu0 0.0
    %1943 = vmatprep.subr.mxu0 0.0
    %1944 = vmatpush2.msra.mxu0 0.0
    %1945 = vmatprep.subr.mxu0 0.0
    %1946 = vmatpush2.msra.mxu0 0.0
    %1947 = vmatprep.subr.mxu0 0.0
    %1948 = vmatpush2.msra.mxu0 0.0
    %1949 = vmatprep.mubr.f32.mxu0 0.0
    %1950 = vmatmul.mubr.f32.gmra.mxu0 %v1883
    %v1951 = vpop.f32.mrf.mxu0
    %v1952 = vadd.f32 0.0, %v1951
    %v1953 = vpop.f32.mrf.mxu0
    %v1954 = vadd.f32 0.0, %v1953
    %1955 = vdwg.mxu0
    %v1956 = vadd.f32 %v1878, %v1952
    %v1957 = vadd.f32 %v1879, %v1954
    %v1958 = vxor.u32 %v1956, 2147483648
    %v1959 = vxor.u32 %v1957, 2147483648
    %v1960 = vmul.f32 %v1958, 1.442695
    %v1961 = vpow.pop %v1960
    %v1962 = vmul.f32 %v1959, 1.442695
    %v1963 = vpow.pop %v1962
    %v1964 = vadd.f32 %v1961, 1.0
    %v1965 = vadd.f32 %v1963, 1.0
    %v1966 = vrcp.pop %v1964
    %v1967 = vmul.f32 1.0, %v1966
    %v1968 = vrcp.pop %v1965
    %v1969 = vmul.f32 1.0, %v1968
    %v1970 = vtanh.pop %v1957
    %v1971 = vmul.f32 %v1967, %v1875
    %v1972 = vmul.f32 %v1967, %v1970
    %1974 = vrot.lane.b32.xlu0 %v1972, 64
    %v1975 = vpop.permute.xlu0 %1974
    %v1977 = vadd.f32 %v1971, %v1975
    %v1978 = vtanh.pop %v1977
    %v1979 = vmul.f32 %v1969, %v1978
    %v1980 = vld [vmem:[%s764] sm:$0xff]
    %v1981 = vld [vmem:[%s764 + $0x8] sm:$0xff]
    %1983 = vrot.lane.b32.xlu0 %v1979, 64
    %v1984 = vpop.permute.xlu0 %1983
    %v1985 = vsel %vm334, %v1984, 0
    %1987 = vmatprep.subr.mxu0 0.0
    %1988 = vmatpush1.msra.mxu0 0.0
    %1989 = vmatprep.subr.mxu0 0.0
    %1990 = vmatpush1.msra.mxu0 0.0
    %1991 = vmatprep.subr.mxu0 0.0
    %1992 = vmatpush1.msra.mxu0 0.0
    %1993 = vmatprep.subr.mxu0 0.0
    %1994 = vmatpush1.msra.mxu0 0.0
    %1995 = vmatprep.subr.mxu0 0.0
    %1996 = vmatpush1.msra.mxu0 0.0
    %1997 = vmatprep.subr.mxu0 0.0
    %1998 = vmatpush1.msra.mxu0 0.0
    %1999 = vmatprep.subr.mxu0 0.0
    %2000 = vmatpush1.msra.mxu0 0.0
    %2001 = vmatprep.subr.mxu0 0.0
    %2002 = vmatpush1.msra.mxu0 0.0
    %2003 = vmatprep.subr.mxu0 %v1576
    %2004 = vmatpush1.msra.mxu0 %v1575
    %2005 = vmatprep.subr.mxu0 %v1574
    %2006 = vmatpush1.msra.mxu0 %v1573
    %2007 = vmatprep.subr.mxu0 %v1572
    %2008 = vmatpush1.msra.mxu0 %v1571
    %2009 = vmatprep.subr.mxu0 %v1570
    %2010 = vmatpush1.msra.mxu0 %v1569
    %2011 = vmatprep.subr.mxu0 %v1568
    %2012 = vmatpush1.msra.mxu0 %v1567
    %2013 = vmatprep.subr.mxu0 %v1566
    %2014 = vmatpush1.msra.mxu0 %v1565
    %2015 = vmatprep.subr.mxu0 %v1564
    %2016 = vmatpush1.msra.mxu0 %v1563
    %2017 = vmatprep.subr.mxu0 %v1562
    %2018 = vmatpush1.msra.mxu0 %v1561
    %2019 = vmatprep.subr.mxu0 0.0
    %2020 = vmatpush2.msra.mxu0 0.0
    %2021 = vmatprep.subr.mxu0 0.0
    %2022 = vmatpush2.msra.mxu0 0.0
    %2023 = vmatprep.subr.mxu0 0.0
    %2024 = vmatpush2.msra.mxu0 0.0
    %2025 = vmatprep.subr.mxu0 0.0
    %2026 = vmatpush2.msra.mxu0 0.0
    %2027 = vmatprep.subr.mxu0 0.0
    %2028 = vmatpush2.msra.mxu0 0.0
    %2029 = vmatprep.subr.mxu0 0.0
    %2030 = vmatpush2.msra.mxu0 0.0
    %2031 = vmatprep.subr.mxu0 0.0
    %2032 = vmatpush2.msra.mxu0 0.0
    %2033 = vmatprep.subr.mxu0 0.0
    %2034 = vmatpush2.msra.mxu0 0.0
    %2035 = vmatprep.subr.mxu0 0.0
    %2036 = vmatpush2.msra.mxu0 0.0
    %2037 = vmatprep.subr.mxu0 0.0
    %2038 = vmatpush2.msra.mxu0 0.0
    %2039 = vmatprep.subr.mxu0 0.0
    %2040 = vmatpush2.msra.mxu0 0.0
    %2041 = vmatprep.subr.mxu0 0.0
    %2042 = vmatpush2.msra.mxu0 0.0
    %2043 = vmatprep.subr.mxu0 0.0
    %2044 = vmatpush2.msra.mxu0 0.0
    %2045 = vmatprep.subr.mxu0 0.0
    %2046 = vmatpush2.msra.mxu0 0.0
    %2047 = vmatprep.subr.mxu0 0.0
    %2048 = vmatpush2.msra.mxu0 0.0
    %2049 = vmatprep.subr.mxu0 0.0
    %2050 = vmatpush2.msra.mxu0 0.0
    %2051 = vmatprep.mubr.f32.mxu0 0.0
    %2052 = vmatmul.mubr.f32.gmra.mxu0 %v1985
    %v2053 = vpop.f32.mrf.mxu0
    %v2054 = vadd.f32 0.0, %v2053
    %v2055 = vpop.f32.mrf.mxu0
    %v2056 = vadd.f32 0.0, %v2055
    %2057 = vdwg.mxu0
    %v2058 = vadd.f32 %v1980, %v2054
    %v2059 = vadd.f32 %v1981, %v2056
    %v2060 = vxor.u32 %v2058, 2147483648
    %v2061 = vxor.u32 %v2059, 2147483648
    %v2062 = vmul.f32 %v2060, 1.442695
    %v2063 = vpow.pop %v2062
    %v2064 = vmul.f32 %v2061, 1.442695
    %v2065 = vpow.pop %v2064
    %v2066 = vadd.f32 %v2063, 1.0
    %v2067 = vadd.f32 %v2065, 1.0
    %v2068 = vrcp.pop %v2066
    %v2069 = vmul.f32 1.0, %v2068
    %v2070 = vrcp.pop %v2067
    %v2071 = vmul.f32 1.0, %v2070
    %v2072 = vtanh.pop %v2059
    %v2073 = vmul.f32 %v2069, %v1977
    %v2074 = vmul.f32 %v2069, %v2072
    %2076 = vrot.lane.b32.xlu0 %v2074, 64
    %v2077 = vpop.permute.xlu0 %2076
    %v2079 = vadd.f32 %v2073, %v2077
    %v2080 = vtanh.pop %v2079
    %v2081 = vmul.f32 %v2071, %v2080
    %v2082 = vld [vmem:[%s872] sm:$0xff]
    %v2083 = vld [vmem:[%s872 + $0x8] sm:$0xff]
    %2085 = vrot.lane.b32.xlu0 %v2081, 64
    %v2086 = vpop.permute.xlu0 %2085
    %v2087 = vsel %vm334, %v2086, 0
    %2089 = vmatprep.subr.mxu0 0.0
    %2090 = vmatpush1.msra.mxu0 0.0
    %2091 = vmatprep.subr.mxu0 0.0
    %2092 = vmatpush1.msra.mxu0 0.0
    %2093 = vmatprep.subr.mxu0 0.0
    %2094 = vmatpush1.msra.mxu0 0.0
    %2095 = vmatprep.subr.mxu0 0.0
    %2096 = vmatpush1.msra.mxu0 0.0
    %2097 = vmatprep.subr.mxu0 0.0
    %2098 = vmatpush1.msra.mxu0 0.0
    %2099 = vmatprep.subr.mxu0 0.0
    %2100 = vmatpush1.msra.mxu0 0.0
    %2101 = vmatprep.subr.mxu0 0.0
    %2102 = vmatpush1.msra.mxu0 0.0
    %2103 = vmatprep.subr.mxu0 0.0
    %2104 = vmatpush1.msra.mxu0 0.0
    %2105 = vmatprep.subr.mxu0 %v1576
    %2106 = vmatpush1.msra.mxu0 %v1575
    %2107 = vmatprep.subr.mxu0 %v1574
    %2108 = vmatpush1.msra.mxu0 %v1573
    %2109 = vmatprep.subr.mxu0 %v1572
    %2110 = vmatpush1.msra.mxu0 %v1571
    %2111 = vmatprep.subr.mxu0 %v1570
    %2112 = vmatpush1.msra.mxu0 %v1569
    %2113 = vmatprep.subr.mxu0 %v1568
    %2114 = vmatpush1.msra.mxu0 %v1567
    %2115 = vmatprep.subr.mxu0 %v1566
    %2116 = vmatpush1.msra.mxu0 %v1565
    %2117 = vmatprep.subr.mxu0 %v1564
    %2118 = vmatpush1.msra.mxu0 %v1563
    %2119 = vmatprep.subr.mxu0 %v1562
    %2120 = vmatpush1.msra.mxu0 %v1561
    %2121 = vmatprep.subr.mxu0 0.0
    %2122 = vmatpush2.msra.mxu0 0.0
    %2123 = vmatprep.subr.mxu0 0.0
    %2124 = vmatpush2.msra.mxu0 0.0
    %2125 = vmatprep.subr.mxu0 0.0
    %2126 = vmatpush2.msra.mxu0 0.0
    %2127 = vmatprep.subr.mxu0 0.0
    %2128 = vmatpush2.msra.mxu0 0.0
    %2129 = vmatprep.subr.mxu0 0.0
    %2130 = vmatpush2.msra.mxu0 0.0
    %2131 = vmatprep.subr.mxu0 0.0
    %2132 = vmatpush2.msra.mxu0 0.0
    %2133 = vmatprep.subr.mxu0 0.0
    %2134 = vmatpush2.msra.mxu0 0.0
    %2135 = vmatprep.subr.mxu0 0.0
    %2136 = vmatpush2.msra.mxu0 0.0
    %2137 = vmatprep.subr.mxu0 0.0
    %2138 = vmatpush2.msra.mxu0 0.0
    %2139 = vmatprep.subr.mxu0 0.0
    %2140 = vmatpush2.msra.mxu0 0.0
    %2141 = vmatprep.subr.mxu0 0.0
    %2142 = vmatpush2.msra.mxu0 0.0
    %2143 = vmatprep.subr.mxu0 0.0
    %2144 = vmatpush2.msra.mxu0 0.0
    %2145 = vmatprep.subr.mxu0 0.0
    %2146 = vmatpush2.msra.mxu0 0.0
    %2147 = vmatprep.subr.mxu0 0.0
    %2148 = vmatpush2.msra.mxu0 0.0
    %2149 = vmatprep.subr.mxu0 0.0
    %2150 = vmatpush2.msra.mxu0 0.0
    %2151 = vmatprep.subr.mxu0 0.0
    %2152 = vmatpush2.msra.mxu0 0.0
    %2153 = vmatprep.mubr.f32.mxu0 0.0
    %2154 = vmatmul.mubr.f32.gmra.mxu0 %v2087
    %v2155 = vpop.f32.mrf.mxu0
    %v2156 = vadd.f32 0.0, %v2155
    %v2157 = vpop.f32.mrf.mxu0
    %v2158 = vadd.f32 0.0, %v2157
    %2159 = vdwg.mxu0
    %v2160 = vadd.f32 %v2082, %v2156
    %v2161 = vadd.f32 %v2083, %v2158
    %v2162 = vxor.u32 %v2160, 2147483648
    %v2163 = vxor.u32 %v2161, 2147483648
    %v2164 = vmul.f32 %v2162, 1.442695
    %v2165 = vpow.pop %v2164
    %v2166 = vmul.f32 %v2163, 1.442695
    %v2167 = vpow.pop %v2166
    %v2168 = vadd.f32 %v2165, 1.0
    %v2169 = vadd.f32 %v2167, 1.0
    %v2170 = vrcp.pop %v2168
    %v2171 = vmul.f32 1.0, %v2170
    %v2172 = vrcp.pop %v2169
    %v2173 = vmul.f32 1.0, %v2172
    %v2174 = vtanh.pop %v2161
    %v2175 = vmul.f32 %v2171, %v2079
    %v2176 = vmul.f32 %v2171, %v2174
    %2178 = vrot.lane.b32.xlu0 %v2176, 64
    %v2179 = vpop.permute.xlu0 %2178
    %v2181 = vadd.f32 %v2175, %v2179
    %v2182 = vtanh.pop %v2181
    %v2183 = vmul.f32 %v2173, %v2182
    %v2184 = vld [vmem:[%s980] sm:$0xff]
    %v2185 = vld [vmem:[%s980 + $0x8] sm:$0xff]
    %2187 = vrot.lane.b32.xlu0 %v2183, 64
    %v2188 = vpop.permute.xlu0 %2187
    %v2189 = vsel %vm334, %v2188, 0
    %2191 = vmatprep.subr.mxu0 0.0
    %2192 = vmatpush1.msra.mxu0 0.0
    %2193 = vmatprep.subr.mxu0 0.0
    %2194 = vmatpush1.msra.mxu0 0.0
    %2195 = vmatprep.subr.mxu0 0.0
    %2196 = vmatpush1.msra.mxu0 0.0
    %2197 = vmatprep.subr.mxu0 0.0
    %2198 = vmatpush1.msra.mxu0 0.0
    %2199 = vmatprep.subr.mxu0 0.0
    %2200 = vmatpush1.msra.mxu0 0.0
    %2201 = vmatprep.subr.mxu0 0.0
    %2202 = vmatpush1.msra.mxu0 0.0
    %2203 = vmatprep.subr.mxu0 0.0
    %2204 = vmatpush1.msra.mxu0 0.0
    %2205 = vmatprep.subr.mxu0 0.0
    %2206 = vmatpush1.msra.mxu0 0.0
    %2207 = vmatprep.subr.mxu0 %v1576
    %2208 = vmatpush1.msra.mxu0 %v1575
    %2209 = vmatprep.subr.mxu0 %v1574
    %2210 = vmatpush1.msra.mxu0 %v1573
    %2211 = vmatprep.subr.mxu0 %v1572
    %2212 = vmatpush1.msra.mxu0 %v1571
    %2213 = vmatprep.subr.mxu0 %v1570
    %2214 = vmatpush1.msra.mxu0 %v1569
    %2215 = vmatprep.subr.mxu0 %v1568
    %2216 = vmatpush1.msra.mxu0 %v1567
    %2217 = vmatprep.subr.mxu0 %v1566
    %2218 = vmatpush1.msra.mxu0 %v1565
    %2219 = vmatprep.subr.mxu0 %v1564
    %2220 = vmatpush1.msra.mxu0 %v1563
    %2221 = vmatprep.subr.mxu0 %v1562
    %2222 = vmatpush1.msra.mxu0 %v1561
    %2223 = vmatprep.subr.mxu0 0.0
    %2224 = vmatpush2.msra.mxu0 0.0
    %2225 = vmatprep.subr.mxu0 0.0
    %2226 = vmatpush2.msra.mxu0 0.0
    %2227 = vmatprep.subr.mxu0 0.0
    %2228 = vmatpush2.msra.mxu0 0.0
    %2229 = vmatprep.subr.mxu0 0.0
    %2230 = vmatpush2.msra.mxu0 0.0
    %2231 = vmatprep.subr.mxu0 0.0
    %2232 = vmatpush2.msra.mxu0 0.0
    %2233 = vmatprep.subr.mxu0 0.0
    %2234 = vmatpush2.msra.mxu0 0.0
    %2235 = vmatprep.subr.mxu0 0.0
    %2236 = vmatpush2.msra.mxu0 0.0
    %2237 = vmatprep.subr.mxu0 0.0
    %2238 = vmatpush2.msra.mxu0 0.0
    %2239 = vmatprep.subr.mxu0 0.0
    %2240 = vmatpush2.msra.mxu0 0.0
    %2241 = vmatprep.subr.mxu0 0.0
    %2242 = vmatpush2.msra.mxu0 0.0
    %2243 = vmatprep.subr.mxu0 0.0
    %2244 = vmatpush2.msra.mxu0 0.0
    %2245 = vmatprep.subr.mxu0 0.0
    %2246 = vmatpush2.msra.mxu0 0.0
    %2247 = vmatprep.subr.mxu0 0.0
    %2248 = vmatpush2.msra.mxu0 0.0
    %2249 = vmatprep.subr.mxu0 0.0
    %2250 = vmatpush2.msra.mxu0 0.0
    %2251 = vmatprep.subr.mxu0 0.0
    %2252 = vmatpush2.msra.mxu0 0.0
    %2253 = vmatprep.subr.mxu0 0.0
    %2254 = vmatpush2.msra.mxu0 0.0
    %2255 = vmatprep.mubr.f32.mxu0 0.0
    %2256 = vmatmul.mubr.f32.gmra.mxu0 %v2189
    %v2257 = vpop.f32.mrf.mxu0
    %v2258 = vadd.f32 0.0, %v2257
    %v2259 = vpop.f32.mrf.mxu0
    %v2260 = vadd.f32 0.0, %v2259
    %2261 = vdwg.mxu0
    %v2262 = vadd.f32 %v2184, %v2258
    %v2263 = vadd.f32 %v2185, %v2260
    %v2264 = vxor.u32 %v2262, 2147483648
    %v2265 = vxor.u32 %v2263, 2147483648
    %v2266 = vmul.f32 %v2264, 1.442695
    %v2267 = vpow.pop %v2266
    %v2268 = vmul.f32 %v2265, 1.442695
    %v2269 = vpow.pop %v2268
    %v2270 = vadd.f32 %v2267, 1.0
    %v2271 = vadd.f32 %v2269, 1.0
    %v2272 = vrcp.pop %v2270
    %v2273 = vmul.f32 1.0, %v2272
    %v2274 = vrcp.pop %v2271
    %v2275 = vmul.f32 1.0, %v2274
    %v2276 = vtanh.pop %v2263
    %v2277 = vmul.f32 %v2273, %v2181
    %v2278 = vmul.f32 %v2273, %v2276
    %2280 = vrot.lane.b32.xlu0 %v2278, 64
    %v2281 = vpop.permute.xlu0 %2280
    %v2283 = vadd.f32 %v2277, %v2281
    %v2284 = vtanh.pop %v2283
    %v2285 = vmul.f32 %v2275, %v2284
    %v2286 = vld [vmem:[%s1088] sm:$0xff]
    %v2287 = vld [vmem:[%s1088 + $0x8] sm:$0xff]
    %2289 = vrot.lane.b32.xlu0 %v2285, 64
    %v2290 = vpop.permute.xlu0 %2289
    %v2291 = vsel %vm334, %v2290, 0
    %2293 = vmatprep.subr.mxu0 0.0
    %2294 = vmatpush1.msra.mxu0 0.0
    %2295 = vmatprep.subr.mxu0 0.0
    %2296 = vmatpush1.msra.mxu0 0.0
    %2297 = vmatprep.subr.mxu0 0.0
    %2298 = vmatpush1.msra.mxu0 0.0
    %2299 = vmatprep.subr.mxu0 0.0
    %2300 = vmatpush1.msra.mxu0 0.0
    %2301 = vmatprep.subr.mxu0 0.0
    %2302 = vmatpush1.msra.mxu0 0.0
    %2303 = vmatprep.subr.mxu0 0.0
    %2304 = vmatpush1.msra.mxu0 0.0
    %2305 = vmatprep.subr.mxu0 0.0
    %2306 = vmatpush1.msra.mxu0 0.0
    %2307 = vmatprep.subr.mxu0 0.0
    %2308 = vmatpush1.msra.mxu0 0.0
    %2309 = vmatprep.subr.mxu0 %v1576
    %2310 = vmatpush1.msra.mxu0 %v1575
    %2311 = vmatprep.subr.mxu0 %v1574
    %2312 = vmatpush1.msra.mxu0 %v1573
    %2313 = vmatprep.subr.mxu0 %v1572
    %2314 = vmatpush1.msra.mxu0 %v1571
    %2315 = vmatprep.subr.mxu0 %v1570
    %2316 = vmatpush1.msra.mxu0 %v1569
    %2317 = vmatprep.subr.mxu0 %v1568
    %2318 = vmatpush1.msra.mxu0 %v1567
    %2319 = vmatprep.subr.mxu0 %v1566
    %2320 = vmatpush1.msra.mxu0 %v1565
    %2321 = vmatprep.subr.mxu0 %v1564
    %2322 = vmatpush1.msra.mxu0 %v1563
    %2323 = vmatprep.subr.mxu0 %v1562
    %2324 = vmatpush1.msra.mxu0 %v1561
    %2325 = vmatprep.subr.mxu0 0.0
    %2326 = vmatpush2.msra.mxu0 0.0
    %2327 = vmatprep.subr.mxu0 0.0
    %2328 = vmatpush2.msra.mxu0 0.0
    %2329 = vmatprep.subr.mxu0 0.0
    %2330 = vmatpush2.msra.mxu0 0.0
    %2331 = vmatprep.subr.mxu0 0.0
    %2332 = vmatpush2.msra.mxu0 0.0
    %2333 = vmatprep.subr.mxu0 0.0
    %2334 = vmatpush2.msra.mxu0 0.0
    %2335 = vmatprep.subr.mxu0 0.0
    %2336 = vmatpush2.msra.mxu0 0.0
    %2337 = vmatprep.subr.mxu0 0.0
    %2338 = vmatpush2.msra.mxu0 0.0
    %2339 = vmatprep.subr.mxu0 0.0
    %2340 = vmatpush2.msra.mxu0 0.0
    %2341 = vmatprep.subr.mxu0 0.0
    %2342 = vmatpush2.msra.mxu0 0.0
    %2343 = vmatprep.subr.mxu0 0.0
    %2344 = vmatpush2.msra.mxu0 0.0
    %2345 = vmatprep.subr.mxu0 0.0
    %2346 = vmatpush2.msra.mxu0 0.0
    %2347 = vmatprep.subr.mxu0 0.0
    %2348 = vmatpush2.msra.mxu0 0.0
    %2349 = vmatprep.subr.mxu0 0.0
    %2350 = vmatpush2.msra.mxu0 0.0
    %2351 = vmatprep.subr.mxu0 0.0
    %2352 = vmatpush2.msra.mxu0 0.0
    %2353 = vmatprep.subr.mxu0 0.0
    %2354 = vmatpush2.msra.mxu0 0.0
    %2355 = vmatprep.subr.mxu0 0.0
    %2356 = vmatpush2.msra.mxu0 0.0
    %2357 = vmatprep.mubr.f32.mxu0 0.0
    %2358 = vmatmul.mubr.f32.gmra.mxu0 %v2291
    %v2359 = vpop.f32.mrf.mxu0
    %v2360 = vadd.f32 0.0, %v2359
    %v2361 = vpop.f32.mrf.mxu0
    %v2362 = vadd.f32 0.0, %v2361
    %2363 = vdwg.mxu0
    %v2364 = vadd.f32 %v2286, %v2360
    %v2365 = vadd.f32 %v2287, %v2362
    %v2366 = vxor.u32 %v2364, 2147483648
    %v2367 = vxor.u32 %v2365, 2147483648
    %v2368 = vmul.f32 %v2366, 1.442695
    %v2369 = vpow.pop %v2368
    %v2370 = vmul.f32 %v2367, 1.442695
    %v2371 = vpow.pop %v2370
    %v2372 = vadd.f32 %v2369, 1.0
    %v2373 = vadd.f32 %v2371, 1.0
    %v2374 = vrcp.pop %v2372
    %v2375 = vmul.f32 1.0, %v2374
    %v2376 = vrcp.pop %v2373
    %v2377 = vmul.f32 1.0, %v2376
    %v2378 = vtanh.pop %v2365
    %v2379 = vmul.f32 %v2375, %v2283
    %v2380 = vmul.f32 %v2375, %v2378
    %2382 = vrot.lane.b32.xlu0 %v2380, 64
    %v2383 = vpop.permute.xlu0 %2382
    %v2385 = vadd.f32 %v2379, %v2383
    %v2386 = vtanh.pop %v2385
    %v2387 = vmul.f32 %v2377, %v2386
    %v2388 = vld [vmem:[#allocation16] sm:$0xff]
    %v2389 = vld [vmem:[#allocation16 + $0x8] sm:$0xff]
    %v2390 = vld [vmem:[#allocation16 + $0x10] sm:$0xff]
    %v2391 = vld [vmem:[#allocation16 + $0x18] sm:$0xff]
    %v2392 = vld [vmem:[#allocation16 + $0x20] sm:$0xff]
    %v2393 = vld [vmem:[#allocation16 + $0x28] sm:$0xff]
    %v2394 = vld [vmem:[#allocation16 + $0x30] sm:$0xff]
    %v2395 = vld [vmem:[#allocation16 + $0x38] sm:$0xff]
    %v2396 = vld [vmem:[%s9] sm:$0x1]
    %v2398 = vlaneseq
    %v2399 = vshrl.u32 %v2398, 7
    %v2400 = vsub.s32 0, %v2399
    %v2401 = vrot.slane %v2396, %v2400
    %2404 = vrot.lane.b32.xlu0 %v2387, 64
    %v2405 = vpop.permute.xlu0 %2404
    %v2406 = vsel %vm334, %v2405, 0
    %2408 = vmatprep.subr.mxu0 0.0
    %2409 = vmatpush1.msra.mxu0 0.0
    %2410 = vmatprep.subr.mxu0 0.0
    %2411 = vmatpush1.msra.mxu0 0.0
    %2412 = vmatprep.subr.mxu0 0.0
    %2413 = vmatpush1.msra.mxu0 0.0
    %2414 = vmatprep.subr.mxu0 0.0
    %2415 = vmatpush1.msra.mxu0 0.0
    %2416 = vmatprep.subr.mxu0 0.0
    %2417 = vmatpush1.msra.mxu0 0.0
    %2418 = vmatprep.subr.mxu0 0.0
    %2419 = vmatpush1.msra.mxu0 0.0
    %2420 = vmatprep.subr.mxu0 0.0
    %2421 = vmatpush1.msra.mxu0 0.0
    %2422 = vmatprep.subr.mxu0 0.0
    %2423 = vmatpush1.msra.mxu0 0.0
    %2424 = vmatprep.subr.mxu0 0.0
    %2425 = vmatpush1.msra.mxu0 %v2395
    %2426 = vmatprep.subr.mxu0 0.0
    %2427 = vmatpush1.msra.mxu0 %v2394
    %2428 = vmatprep.subr.mxu0 0.0
    %2429 = vmatpush1.msra.mxu0 %v2393
    %2430 = vmatprep.subr.mxu0 0.0
    %2431 = vmatpush1.msra.mxu0 %v2392
    %2432 = vmatprep.subr.mxu0 0.0
    %2433 = vmatpush1.msra.mxu0 %v2391
    %2434 = vmatprep.subr.mxu0 0.0
    %2435 = vmatpush1.msra.mxu0 %v2390
    %2436 = vmatprep.subr.mxu0 0.0
    %2437 = vmatpush1.msra.mxu0 %v2389
    %2438 = vmatprep.subr.mxu0 0.0
    %2439 = vmatpush1.msra.mxu0 %v2388
    %2440 = vmatprep.subr.mxu0 0.0
    %2441 = vmatpush2.msra.mxu0 0.0
    %2442 = vmatprep.subr.mxu0 0.0
    %2443 = vmatpush2.msra.mxu0 0.0
    %2444 = vmatprep.subr.mxu0 0.0
    %2445 = vmatpush2.msra.mxu0 0.0
    %2446 = vmatprep.subr.mxu0 0.0
    %2447 = vmatpush2.msra.mxu0 0.0
    %2448 = vmatprep.subr.mxu0 0.0
    %2449 = vmatpush2.msra.mxu0 0.0
    %2450 = vmatprep.subr.mxu0 0.0
    %2451 = vmatpush2.msra.mxu0 0.0
    %2452 = vmatprep.subr.mxu0 0.0
    %2453 = vmatpush2.msra.mxu0 0.0
    %2454 = vmatprep.subr.mxu0 0.0
    %2455 = vmatpush2.msra.mxu0 0.0
    %2456 = vmatprep.subr.mxu0 0.0
    %2457 = vmatpush2.msra.mxu0 0.0
    %2458 = vmatprep.subr.mxu0 0.0
    %2459 = vmatpush2.msra.mxu0 0.0
    %2460 = vmatprep.subr.mxu0 0.0
    %2461 = vmatpush2.msra.mxu0 0.0
    %2462 = vmatprep.subr.mxu0 0.0
    %2463 = vmatpush2.msra.mxu0 0.0
    %2464 = vmatprep.subr.mxu0 0.0
    %2465 = vmatpush2.msra.mxu0 0.0
    %2466 = vmatprep.subr.mxu0 0.0
    %2467 = vmatpush2.msra.mxu0 0.0
    %2468 = vmatprep.subr.mxu0 0.0
    %2469 = vmatpush2.msra.mxu0 0.0
    %2470 = vmatprep.subr.mxu0 0.0
    %2471 = vmatpush2.msra.mxu0 0.0
    %2472 = vmatprep.mubr.f32.mxu0 0.0
    %2473 = vmatmul.mubr.f32.gmra.mxu0 %v2406
    %v2474 = vpop.f32.mrf.mxu0
    %v2475 = vadd.f32 %v2401, %v2474
    %v2476 = vpop.f32.mrf.mxu0
    %2477 = vdwg.mxu0
    %v2478 = vmax.f32 %v2475, 0.0
    %v2479 = vld [vmem:[%s10] sm:$0x1]
    %v2481 = vlaneseq
    %v2482 = vshrl.u32 %v2481, 7
    %v2483 = vsub.s32 0, %v2482
    %v2484 = vrot.slane %v2479, %v2483
    %v2486 = vmul.f32 %v2478, %v2484
    %v2487 = vsel %vm334, %v2486, 0.0
    %2488 = vadd.xlane.f32.xlu0 %v2487
    %v2489 = vpop.xlane.xlu0 %2488
    %v2490 = vld [vmem:[#allocation5] sm:$0x1]
    %v2492 = vlaneseq
    %v2493 = vshrl.u32 %v2492, 7
    %v2494 = vsub.s32 0, %v2493
    %v2495 = vrot.slane %v2490, %v2494
    %v2497 = vadd.f32 %v2489, %v2495
    %vm2498 = vcmask 7168
    %2499 = vst.msk [vmem:[%s12] sm:$0xff] %vm2498, %v2497
    // Predicated region
    $region78: #{tpu_custom_call.1} parent=1 // pred_check
      _
    $region79: #{tpu_custom_call.1} parent=1 // pred_check_branch
      %2501 = sbr.rel (0) target = $region81
    $region80: #{tpu_custom_call.1} parent=1 // pred_region
      _
    $region81: #{tpu_custom_call.1} parent=1 // pred_fallthru
      _
    // Predicated region
    $region82: #{tpu_custom_call.1} parent=1 // pred_check
      _
    $region83: #{tpu_custom_call.1} parent=1 // pred_check_branch
      %2503 = sbr.rel (0) target = $region85
    $region84: #{tpu_custom_call.1} parent=1 // pred_region
      _
    $region85: #{tpu_custom_call.1} parent=1 // pred_fallthru
      _
    %2504 = vsyncpa [#allocation7], 1
    %2505 = vsyncpa [#allocation9], 1
    %2506 = vsyncpa [#allocation12], 1
    %2507 = vsyncpa [#allocation15], 1

</llo_original>
